<compile_context>
chip_gen: v6e
topology: v6e:2x2x1
jax: 0.10.0
libtpu: 0.0.40
codegen_flags: <defaults>
</compile_context>

<pallas_src>
import math
import functools

import jax
import jax.numpy as jnp
from jax import lax
from jax.experimental import pallas as pl
from jax.experimental.pallas import tpu as pltpu  # noqa: F401  (TPU backend assumed)


def _dot(a, b):
    return lax.dot_general(a, b, (((1,), (0,)), ((), ())),
                           preferred_element_type=jnp.float32)


def _dot_nt(a, b):  # a @ b.T without an explicit transpose relayout
    return lax.dot_general(a, b, (((1,), (1,)), ((), ())),
                           preferred_element_type=jnp.float32)


# ----------------------------------------------------------------------------
# Fused HTMTransformerBlock kernel (single invocation, everything in VMEM)
# ----------------------------------------------------------------------------
def _htm_block_kernel(acts_ref, masks_ref, gind_ref, w32_ref, w128_ref, sp_ref,
                      out_ref, *, B, L, D, H, Nc, K, dh):
    f32 = jnp.float32
    BL = B * L
    NcT = B * Nc

    # weight-pack row offsets (static)
    OQ, OK_, OV = 0, H * D, 2 * H * D              # per-head block-diag q/k/v
    OWO = 3 * H * D                                 # MHA fc_out
    OSQ = OWO + D                                   # HTM to_summary_queries
    OSK = OSQ + D                                   # HTM to_summary_keys
    OFC = OSK + D                                   # feed-forward
    OHO = OFC + D                                   # HTM to_out (H*dh rows)

    # small-params slab: rows 0-3 LN gammas, 4-7 LN betas,
    # 8 mha_bo, 9 bsq, 10 bsk, 11 htm_bo, 12 fc_b
    def ln(x, i):
        mu = jnp.mean(x, axis=-1, keepdims=True)
        xc = x - mu
        var = jnp.mean(xc * xc, axis=-1, keepdims=True)
        return xc * lax.rsqrt(var + 1e-5) * sp_ref[i:i + 1, :] + sp_ref[4 + i:5 + i, :]

    q2 = acts_ref[0:BL, :]                 # raw query          (B*L, D)
    v2 = acts_ref[BL:2 * BL, :]            # raw value          (B*L, D)
    pos = acts_ref[2 * BL:3 * BL, :]       # chunk pos-enc      (B*L, D)
    key_bias = masks_ref[:, 0:BL]          # additive: 0 ok / -1e30 masked|x-batch
    chunk_bias = masks_ref[:, BL:BL + NcT]  # additive chunk-logit mask (B*L, B*Nc)
    gind = gind_ref[0:NcT, :]              # chunk indicator    (B*Nc, B*L)
    poolw = gind_ref[NcT:2 * NcT, :]       # masked mean-pool weights

    qn1 = ln(q2, 0)                        # query_   = norm1(query)
    vn = ln(v2, 1)                         # memories = norm_kv(value)

    # ---- MultiHeadAttention(query_, query_, query_, mask) + residual --------
    inv_sqrt_d = D ** -0.5
    ctx = jnp.zeros((BL, D), f32)
    for hh in range(H):
        qh = _dot(qn1, w32_ref[OQ + hh * D:OQ + (hh + 1) * D, :])     # head lanes live
        kh = _dot(qn1, w32_ref[OK_ + hh * D:OK_ + (hh + 1) * D, :])
        vh = _dot(qn1, w32_ref[OV + hh * D:OV + (hh + 1) * D, :])
        e = (_dot_nt(qh, kh) + key_bias) * inv_sqrt_d                 # (B*L, B*L)
        e = e - jnp.max(e, axis=-1, keepdims=True)
        p = jnp.exp(e)
        att = p * pl.reciprocal(jnp.sum(p, axis=-1, keepdims=True), approx=True)
        out_ref[:, D + hh * BL:D + (hh + 1) * BL] = att               # per-head weights
        ctx = ctx + _dot(att, vh)
    h = _dot(ctx, w32_ref[OWO:OWO + D, :]) + sp_ref[8:9, :] + q2      # + raw-q residual

    # ---- HTMBlock(h, memories=vn, mask) --------------------------------------
    qn = ln(h, 2)                          # HTMBlock internal norm
    mem_pe = vn + pos                      # chunk pos-enc on memories

    sq = _dot(qn, w32_ref[OSQ:OSQ + D, :]) + sp_ref[9:10, :]          # (B*L, D)
    summ = _dot(poolw, vn)                                            # (B*Nc, D)
    sk = _dot(summ, w32_ref[OSK:OSK + D, :]) + sp_ref[10:11, :]
    logits = _dot_nt(sq, sk) * (D ** -0.5) + chunk_bias               # (B*L, B*Nc)

    # in-kernel top-K chunk selection + softmax over the selected logits
    neg_knock = -jnp.finfo(f32).max
    nidx = lax.broadcasted_iota(jnp.int32, (BL, NcT), 1)
    remaining = logits
    sels, vals = [], []
    for _ in range(K):
        mk = jnp.max(remaining, axis=-1, keepdims=True)
        ik = jnp.min(jnp.where(remaining == mk, nidx, NcT), axis=-1, keepdims=True)
        selb = nidx == ik
        sels.append(selb.astype(f32))
        vals.append(mk)
        remaining = jnp.where(selb, neg_knock, remaining)
    m0 = vals[0]
    exps = [jnp.exp(v - m0) for v in vals]
    z = exps[0]
    for ez in exps[1:]:
        z = z + ez
    rz = pl.reciprocal(z, approx=True)
    cw = jnp.zeros((BL, NcT), f32)
    for selk, ez in zip(sels, exps):
        cw = cw + selk * (ez * rz)                  # top-k softmax weight, 0 if unselected

    # within-chunk multi-head attention (64-lane-aligned head slices)
    hq = _dot(qn, w128_ref[0:D, :]) * (dh ** -0.5)                    # (B*L, H*dh)
    hk = _dot(mem_pe, w128_ref[D:2 * D, :])
    hv = _dot(mem_pe, w128_ref[2 * D:3 * D, :])

    acc = jnp.zeros((BL, D), f32)
    for hh in range(H):
        c0, c1 = hh * dh, (hh + 1) * dh
        s = _dot_nt(hq[:, c0:c1], hk[:, c0:c1]) + key_bias            # (B*L, B*L)
        s = s - jnp.max(s, axis=-1, keepdims=True)
        p = jnp.exp(s)
        csum = _dot_nt(p, gind)                                       # per-chunk denominators
        fac = cw * pl.reciprocal(jnp.maximum(csum, 1e-30), approx=True)
        a = p * _dot(fac, gind)                                       # top-k * in-chunk softmax
        acc = acc + _dot(_dot(a, hv[:, c0:c1]),
                         w32_ref[OHO + hh * dh:OHO + (hh + 1) * dh, :])
    h2 = acc + sp_ref[11:12, :] + qn                                  # HTMBlock residual (+ normed q)

    # ---- post feed-forward (pre-norm): out = ReLU(Linear(norm2(h2))) + h2 ----
    hn2 = ln(h2, 3)
    y = jnp.maximum(_dot(hn2, w32_ref[OFC:OFC + D, :]) + sp_ref[12:13, :], 0.0)
    out_ref[:, 0:D] = y + h2


# ----------------------------------------------------------------------------
# jit-compiled wrapper: layout/packing prep + single fused pallas_call
# ----------------------------------------------------------------------------
@functools.partial(jax.jit, static_argnames=("num_heads", "topk_mems",
                                             "mem_chunk_size", "dim_head"))
def htm_transformer_block(value, key, query, mask, params, *,
                          num_heads=2, topk_mems=2, mem_chunk_size=4, dim_head=64):
    del key  # unused on this config path (self-attention on query_)
    B, L, D = query.shape
    H = num_heads
    hs = D // H
    C = mem_chunk_size
    K = topk_mems
    # TODO(synk): front-padding path for L % mem_chunk_size != 0 is not
    # implemented in the fused kernel (configured shapes satisfy L % C == 0).
    assert L % C == 0, "fused kernel requires seq_len % mem_chunk_size == 0"
    Nc = L // C
    NcT = B * Nc
    BL = B * L
    assert K <= Nc

    f32 = jnp.float32
    q2 = query.reshape(BL, D).astype(f32)
    v2 = value.reshape(BL, D).astype(f32)
    mflat = mask.reshape(BL).astype(f32)

    # sinusoidal chunk positional encoding (descending), tiled over chunks/batch
    freqs = jnp.arange(0, D, 2.0, dtype=f32)
    inv_freqs = (1e4) ** (-freqs / D)
    seq = jnp.arange(C - 1, -1, -1.0, dtype=f32)
    sinu = seq[:, None] * inv_freqs[None, :]
    pos = jnp.concatenate([jnp.sin(sinu), jnp.cos(sinu)], axis=-1)    # (C, D)
    pos_bl = jnp.tile(pos, (B * Nc, 1))                               # (B*L, D)
    acts = jnp.concatenate([q2, v2, pos_bl], axis=0)                  # (3*B*L, D)

    # additive masks: block-diagonal batch mask folded with the key mask
    bid = jnp.arange(BL, dtype=jnp.int32) // L
    same_batch = (bid[:, None] == bid[None, :]).astype(f32)           # (B*L, B*L)
    key_ok = same_batch * mflat[None, :]
    key_bias = (key_ok - 1.0) * 1e30                                  # 0 valid, -1e30 masked

    # chunk indicator, masked mean-pool weights and chunk-validity logit bias
    gind = (jnp.arange(BL)[None, :] // C == jnp.arange(NcT)[:, None]).astype(f32)
    cnt = gind @ mflat                                                # valid keys per chunk
    poolw = gind * mflat[None, :] / (cnt[:, None] + 1e-5)
    chunk_valid = (cnt > 0).astype(f32)
    cbid = jnp.arange(NcT, dtype=jnp.int32) // Nc
    chunk_same = (bid[:, None] == cbid[None, :]).astype(f32)          # (B*L, B*Nc)
    chunk_bias = jnp.where(chunk_same > 0,
                           (chunk_valid[None, :] - 1.0) * 1e38,       # invalid chunk
                           -3e38)                                     # cross-batch chunk
    masks = jnp.concatenate([key_bias, chunk_bias], axis=1)           # (B*L, B*L + B*Nc)
    gind_pack = jnp.concatenate([gind, poolw], axis=0)                # (2*B*Nc, B*L)

    # per-head "placed" block-diagonal MHA projections (no 16-lane kernel slices)
    def bd(h, w):
        sel = jnp.zeros((H, H), f32).at[h, h].set(1.0)
        return jnp.kron(sel, w)

    w32 = jnp.concatenate(
        [bd(h, params['mha_wq_t']) for h in range(H)]
        + [bd(h, params['mha_wk_t']) for h in range(H)]
        + [bd(h, params['mha_wv_t']) for h in range(H)]
        + [params['mha_wo_t'], params['htm_wsq_t'], params['htm_wsk_t'],
           params['fc_w_t'], params['htm_wo_t']], axis=0)             # (3HD+4D+H*dh, D)
    w128 = jnp.concatenate([params['htm_wq_t'], params['htm_wk_t'],
                            params['htm_wv_t']], axis=0)              # (3D, H*dh)
    sp = jnp.concatenate([
        params['norm1_g'], params['normkv_g'], params['htm_norm_g'], params['norm2_g'],
        params['norm1_b'], params['normkv_b'], params['htm_norm_b'], params['norm2_b'],
        params['mha_bo'], params['htm_bsq'], params['htm_bsk'], params['htm_bo'],
        params['fc_b'], jnp.zeros((3, D), f32)], axis=0)              # (16, D)

    kernel = functools.partial(_htm_block_kernel, B=B, L=L, D=D, H=H,
                               Nc=Nc, K=K, dh=dim_head)
    slab = pl.pallas_call(
        kernel,
        out_shape=jax.ShapeDtypeStruct((BL, D + H * BL), f32),
    )(acts, masks, gind_pack, w32, w128, sp)

    out = slab[:, :D].reshape(B, L, D)
    attn5 = slab[:, D:].reshape(B, L, H, B, L)
    attn_w = jnp.stack([attn5[b, :, :, b, :] for b in range(B)], axis=0)  # (B, L, H, L)
    attn_w = attn_w.transpose(0, 2, 1, 3)                                 # (B, H, L, L)
    return out, attn_w


# ----------------------------------------------------------------------------
# Deterministic parameter init (torch-like uniform ranges); weights stored
# pre-transposed as (fan_in, fan_out).
# ----------------------------------------------------------------------------
def init_params(key, D, num_heads, dim_head):
    hs = D // num_heads
    inner = dim_head * num_heads
    ks = jax.random.split(key, 16)

    def unif(k, shape, fan_in):
        b = 1.0 / math.sqrt(fan_in)
        return jax.random.uniform(k, shape, jnp.float32, -b, b)

    p = {}
    for name in ('norm1', 'normkv', 'norm2', 'htm_norm'):
        p[name + '_g'] = jnp.ones((1, D), jnp.float32)
        p[name + '_b'] = jnp.zeros((1, D), jnp.float32)
    # MultiHeadAttention (per-head shared projections, bias only on fc_out)
    p['mha_wv_t'] = unif(ks[0], (hs, hs), hs)
    p['mha_wk_t'] = unif(ks[1], (hs, hs), hs)
    p['mha_wq_t'] = unif(ks[2], (hs, hs), hs)
    p['mha_wo_t'] = unif(ks[3], (D, D), D)
    p['mha_bo'] = unif(ks[4], (1, D), D)
    # HTM summary projections (with bias)
    p['htm_wsq_t'] = unif(ks[5], (D, D), D)
    p['htm_bsq'] = unif(ks[6], (1, D), D)
    p['htm_wsk_t'] = unif(ks[7], (D, D), D)
    p['htm_bsk'] = unif(ks[8], (1, D), D)
    # HTM within-memory attention (dim_head=64, bias only on to_out)
    p['htm_wq_t'] = unif(ks[9], (D, inner), D)
    p['htm_wk_t'] = unif(ks[10], (D, inner), D)
    p['htm_wv_t'] = unif(ks[11], (D, inner), D)
    p['htm_wo_t'] = unif(ks[12], (inner, D), inner)
    p['htm_bo'] = unif(ks[13], (1, D), inner)
    # fc = Linear + ReLU
    p['fc_w_t'] = unif(ks[14], (D, D), D)
    p['fc_b'] = unif(ks[15], (1, D), D)
    return p


if __name__ == "__main__":
    B, L, D = 2, 16, 32
    num_heads = 2
    topk_mems = 2
    mem_chunk_size = 4
    dim_head = 64

    rng = jax.random.PRNGKey(0)
    kv, kk, kq, kp = jax.random.split(rng, 4)
    value = jax.random.normal(kv, (B, L, D), jnp.float32)
    key_t = jax.random.normal(kk, (B, L, D), jnp.float32)
    query = jax.random.normal(kq, (B, L, D), jnp.float32)
    mask = jnp.ones((B, L), jnp.float32).at[1, -2:].set(0.0)

    params = init_params(kp, D, num_heads, dim_head=dim_head)

    out, attn_w = htm_transformer_block(
        value, key_t, query, mask, params,
        num_heads=num_heads, topk_mems=topk_mems,
        mem_chunk_size=mem_chunk_size, dim_head=dim_head)
    jax.block_until_ready((out, attn_w))

    assert out.shape == (B, L, D)
    assert attn_w.shape == (B, num_heads, L, L)
    assert bool(jnp.all(jnp.isfinite(out)))
    assert bool(jnp.all(jnp.isfinite(attn_w)))
    print("KERNEL_OK")
</pallas_src>

<mosaic_0001>
module attributes {stable_mosaic.version = 11 : i64} {
  func.func @_htm_block_kernel(%arg0: memref<96x32xf32, #tpu.memory_space<vmem>>, %arg1: memref<32x40xf32, #tpu.memory_space<vmem>>, %arg2: memref<16x32xf32, #tpu.memory_space<vmem>>, %arg3: memref<448x32xf32, #tpu.memory_space<vmem>>, %arg4: memref<96x128xf32, #tpu.memory_space<vmem>>, %arg5: memref<16x32xf32, #tpu.memory_space<vmem>>, %arg6: memref<32x96xf32, #tpu.memory_space<vmem>>) attributes {dimension_semantics = [], scalar_prefetch = 0 : i64, scratch_operands = 0 : i64, tpu.core_type = #tpu.core_type<tc>} {
    %c0 = arith.constant 0 : index
    %c0_0 = arith.constant 0 : index
    %0 = vector.load %arg0[%c0, %c0_0] : memref<96x32xf32, #tpu.memory_space<vmem>>, vector<32x32xf32>
    %c32 = arith.constant 32 : index
    %c0_1 = arith.constant 0 : index
    %1 = vector.load %arg0[%c32, %c0_1] : memref<96x32xf32, #tpu.memory_space<vmem>>, vector<32x32xf32>
    %c64 = arith.constant 64 : index
    %c0_2 = arith.constant 0 : index
    %2 = vector.load %arg0[%c64, %c0_2] : memref<96x32xf32, #tpu.memory_space<vmem>>, vector<32x32xf32>
    %c0_3 = arith.constant 0 : index
    %c0_4 = arith.constant 0 : index
    %3 = vector.load %arg1[%c0_3, %c0_4] : memref<32x40xf32, #tpu.memory_space<vmem>>, vector<32x32xf32>
    %c0_5 = arith.constant 0 : index
    %c32_6 = arith.constant 32 : index
    %4 = vector.load %arg1[%c0_5, %c32_6] : memref<32x40xf32, #tpu.memory_space<vmem>>, vector<32x8xf32>
    %c0_7 = arith.constant 0 : index
    %c0_8 = arith.constant 0 : index
    %5 = vector.load %arg2[%c0_7, %c0_8] : memref<16x32xf32, #tpu.memory_space<vmem>>, vector<8x32xf32>
    %c8 = arith.constant 8 : index
    %c0_9 = arith.constant 0 : index
    %6 = vector.load %arg2[%c8, %c0_9] : memref<16x32xf32, #tpu.memory_space<vmem>>, vector<8x32xf32>
    %cst = arith.constant dense<0.000000e+00> : vector<32xf32>
    %7 = vector.multi_reduction <add>, %0, %cst [1] : vector<32x32xf32> to vector<32xf32>
    %8 = vector.shape_cast %7 : vector<32xf32> to vector<32x1xf32>
    %cst_10 = arith.constant 3.200000e+01 : f32
    %9 = vector.broadcast %cst_10 : f32 to vector<32x1xf32>
    %10 = arith.divf %8, %9 : vector<32x1xf32>
    %11 = vector.broadcast %10 : vector<32x1xf32> to vector<32x32xf32>
    %12 = arith.subf %0, %11 : vector<32x32xf32>
    %13 = arith.mulf %12, %12 : vector<32x32xf32>
    %cst_11 = arith.constant dense<0.000000e+00> : vector<32xf32>
    %14 = vector.multi_reduction <add>, %13, %cst_11 [1] : vector<32x32xf32> to vector<32xf32>
    %15 = vector.shape_cast %14 : vector<32xf32> to vector<32x1xf32>
    %cst_12 = arith.constant 3.200000e+01 : f32
    %16 = vector.broadcast %cst_12 : f32 to vector<32x1xf32>
    %17 = arith.divf %15, %16 : vector<32x1xf32>
    %cst_13 = arith.constant 9.99999974E-6 : f32
    %18 = vector.broadcast %cst_13 : f32 to vector<32x1xf32>
    %19 = arith.addf %17, %18 : vector<32x1xf32>
    %20 = math.rsqrt %19 : vector<32x1xf32>
    %21 = vector.broadcast %20 : vector<32x1xf32> to vector<32x32xf32>
    %22 = arith.mulf %12, %21 : vector<32x32xf32>
    %c0_14 = arith.constant 0 : index
    %c0_15 = arith.constant 0 : index
    %23 = vector.load %arg5[%c0_14, %c0_15] : memref<16x32xf32, #tpu.memory_space<vmem>>, vector<1x32xf32>
    %24 = vector.broadcast %23 : vector<1x32xf32> to vector<32x32xf32>
    %25 = arith.mulf %22, %24 : vector<32x32xf32>
    %c4 = arith.constant 4 : index
    %c0_16 = arith.constant 0 : index
    %26 = vector.load %arg5[%c4, %c0_16] : memref<16x32xf32, #tpu.memory_space<vmem>>, vector<1x32xf32>
    %27 = vector.broadcast %26 : vector<1x32xf32> to vector<32x32xf32>
    %28 = arith.addf %25, %27 : vector<32x32xf32>
    %cst_17 = arith.constant dense<0.000000e+00> : vector<32xf32>
    %29 = vector.multi_reduction <add>, %1, %cst_17 [1] : vector<32x32xf32> to vector<32xf32>
    %30 = vector.shape_cast %29 : vector<32xf32> to vector<32x1xf32>
    %cst_18 = arith.constant 3.200000e+01 : f32
    %31 = vector.broadcast %cst_18 : f32 to vector<32x1xf32>
    %32 = arith.divf %30, %31 : vector<32x1xf32>
    %33 = vector.broadcast %32 : vector<32x1xf32> to vector<32x32xf32>
    %34 = arith.subf %1, %33 : vector<32x32xf32>
    %35 = arith.mulf %34, %34 : vector<32x32xf32>
    %cst_19 = arith.constant dense<0.000000e+00> : vector<32xf32>
    %36 = vector.multi_reduction <add>, %35, %cst_19 [1] : vector<32x32xf32> to vector<32xf32>
    %37 = vector.shape_cast %36 : vector<32xf32> to vector<32x1xf32>
    %cst_20 = arith.constant 3.200000e+01 : f32
    %38 = vector.broadcast %cst_20 : f32 to vector<32x1xf32>
    %39 = arith.divf %37, %38 : vector<32x1xf32>
    %cst_21 = arith.constant 9.99999974E-6 : f32
    %40 = vector.broadcast %cst_21 : f32 to vector<32x1xf32>
    %41 = arith.addf %39, %40 : vector<32x1xf32>
    %42 = math.rsqrt %41 : vector<32x1xf32>
    %43 = vector.broadcast %42 : vector<32x1xf32> to vector<32x32xf32>
    %44 = arith.mulf %34, %43 : vector<32x32xf32>
    %c1 = arith.constant 1 : index
    %c0_22 = arith.constant 0 : index
    %45 = vector.load %arg5[%c1, %c0_22] : memref<16x32xf32, #tpu.memory_space<vmem>>, vector<1x32xf32>
    %46 = vector.broadcast %45 : vector<1x32xf32> to vector<32x32xf32>
    %47 = arith.mulf %44, %46 : vector<32x32xf32>
    %c5 = arith.constant 5 : index
    %c0_23 = arith.constant 0 : index
    %48 = vector.load %arg5[%c5, %c0_23] : memref<16x32xf32, #tpu.memory_space<vmem>>, vector<1x32xf32>
    %49 = vector.broadcast %48 : vector<1x32xf32> to vector<32x32xf32>
    %50 = arith.addf %47, %49 : vector<32x32xf32>
    %cst_24 = arith.constant 0.000000e+00 : f32
    %51 = vector.broadcast %cst_24 : f32 to vector<32x32xf32>
    %c0_25 = arith.constant 0 : index
    %c0_26 = arith.constant 0 : index
    %52 = vector.load %arg3[%c0_25, %c0_26] : memref<448x32xf32, #tpu.memory_space<vmem>>, vector<32x32xf32>
    %cst_27 = arith.constant dense<0.000000e+00> : vector<32x32xf32>
    %53 = tpu.matmul %28, %52, %cst_27 {dimension_numbers = #tpu.dot_dimension_numbers<[1], [0], [0], [1], [0, 0, 1, 1], [], []>} : vector<32x32xf32>, vector<32x32xf32>, vector<32x32xf32> -> vector<32x32xf32>
    %c64_28 = arith.constant 64 : index
    %c0_29 = arith.constant 0 : index
    %54 = vector.load %arg3[%c64_28, %c0_29] : memref<448x32xf32, #tpu.memory_space<vmem>>, vector<32x32xf32>
    %cst_30 = arith.constant dense<0.000000e+00> : vector<32x32xf32>
    %55 = tpu.matmul %28, %54, %cst_30 {dimension_numbers = #tpu.dot_dimension_numbers<[1], [0], [0], [1], [0, 0, 1, 1], [], []>} : vector<32x32xf32>, vector<32x32xf32>, vector<32x32xf32> -> vector<32x32xf32>
    %c128 = arith.constant 128 : index
    %c0_31 = arith.constant 0 : index
    %56 = vector.load %arg3[%c128, %c0_31] : memref<448x32xf32, #tpu.memory_space<vmem>>, vector<32x32xf32>
    %cst_32 = arith.constant dense<0.000000e+00> : vector<32x32xf32>
    %57 = tpu.matmul %28, %56, %cst_32 {dimension_numbers = #tpu.dot_dimension_numbers<[1], [0], [0], [1], [0, 0, 1, 1], [], []>} : vector<32x32xf32>, vector<32x32xf32>, vector<32x32xf32> -> vector<32x32xf32>
    %cst_33 = arith.constant dense<0.000000e+00> : vector<32x32xf32>
    %58 = tpu.matmul %53, %55, %cst_33 {dimension_numbers = #tpu.dot_dimension_numbers<[1], [1], [0], [0], [0, 0, 1, 0], [], []>} : vector<32x32xf32>, vector<32x32xf32>, vector<32x32xf32> -> vector<32x32xf32>
    %59 = arith.addf %58, %3 : vector<32x32xf32>
    %cst_34 = arith.constant 0.176776692 : f32
    %60 = vector.broadcast %cst_34 : f32 to vector<32x32xf32>
    %61 = arith.mulf %59, %60 : vector<32x32xf32>
    %cst_35 = arith.constant dense<0xFF800000> : vector<32xf32>
    %62 = vector.multi_reduction <maximumf>, %61, %cst_35 [1] : vector<32x32xf32> to vector<32xf32>
    %63 = vector.shape_cast %62 : vector<32xf32> to vector<32x1xf32>
    %64 = vector.broadcast %63 : vector<32x1xf32> to vector<32x32xf32>
    %65 = arith.subf %61, %64 : vector<32x32xf32>
    %66 = math.exp %65 : vector<32x32xf32>
    %cst_36 = arith.constant dense<0.000000e+00> : vector<32xf32>
    %67 = vector.multi_reduction <add>, %66, %cst_36 [1] : vector<32x32xf32> to vector<32xf32>
    %68 = vector.shape_cast %67 : vector<32xf32> to vector<32x1xf32>
    %69 = tpu.reciprocal %68 {approx = true} : vector<32x1xf32> -> vector<32x1xf32>
    %70 = vector.broadcast %69 : vector<32x1xf32> to vector<32x32xf32>
    %71 = arith.mulf %66, %70 : vector<32x32xf32>
    %c0_37 = arith.constant 0 : index
    %c32_38 = arith.constant 32 : index
    %72 = vector.load %arg6[%c0_37, %c32_38] : memref<32x96xf32, #tpu.memory_space<vmem>>, vector<32x32xf32>
    tpu.vector_store %arg6[%c0_37, %c32_38], %71 {strides = array<i32>} : memref<32x96xf32, #tpu.memory_space<vmem>>, vector<32x32xf32>,
    %cst_39 = arith.constant dense<0.000000e+00> : vector<32x32xf32>
    %73 = tpu.matmul %71, %57, %cst_39 {dimension_numbers = #tpu.dot_dimension_numbers<[1], [0], [0], [1], [0, 0, 1, 1], [], []>} : vector<32x32xf32>, vector<32x32xf32>, vector<32x32xf32> -> vector<32x32xf32>
    %74 = arith.addf %51, %73 : vector<32x32xf32>
    %c32_40 = arith.constant 32 : index
    %c0_41 = arith.constant 0 : index
    %75 = vector.load %arg3[%c32_40, %c0_41] : memref<448x32xf32, #tpu.memory_space<vmem>>, vector<32x32xf32>
    %cst_42 = arith.constant dense<0.000000e+00> : vector<32x32xf32>
    %76 = tpu.matmul %28, %75, %cst_42 {dimension_numbers = #tpu.dot_dimension_numbers<[1], [0], [0], [1], [0, 0, 1, 1], [], []>} : vector<32x32xf32>, vector<32x32xf32>, vector<32x32xf32> -> vector<32x32xf32>
    %c96 = arith.constant 96 : index
    %c0_43 = arith.constant 0 : index
    %77 = vector.load %arg3[%c96, %c0_43] : memref<448x32xf32, #tpu.memory_space<vmem>>, vector<32x32xf32>
    %cst_44 = arith.constant dense<0.000000e+00> : vector<32x32xf32>
    %78 = tpu.matmul %28, %77, %cst_44 {dimension_numbers = #tpu.dot_dimension_numbers<[1], [0], [0], [1], [0, 0, 1, 1], [], []>} : vector<32x32xf32>, vector<32x32xf32>, vector<32x32xf32> -> vector<32x32xf32>
    %c160 = arith.constant 160 : index
    %c0_45 = arith.constant 0 : index
    %79 = vector.load %arg3[%c160, %c0_45] : memref<448x32xf32, #tpu.memory_space<vmem>>, vector<32x32xf32>
    %cst_46 = arith.constant dense<0.000000e+00> : vector<32x32xf32>
    %80 = tpu.matmul %28, %79, %cst_46 {dimension_numbers = #tpu.dot_dimension_numbers<[1], [0], [0], [1], [0, 0, 1, 1], [], []>} : vector<32x32xf32>, vector<32x32xf32>, vector<32x32xf32> -> vector<32x32xf32>
    %cst_47 = arith.constant dense<0.000000e+00> : vector<32x32xf32>
    %81 = tpu.matmul %76, %78, %cst_47 {dimension_numbers = #tpu.dot_dimension_numbers<[1], [1], [0], [0], [0, 0, 1, 0], [], []>} : vector<32x32xf32>, vector<32x32xf32>, vector<32x32xf32> -> vector<32x32xf32>
    %82 = arith.addf %81, %3 : vector<32x32xf32>
    %cst_48 = arith.constant 0.176776692 : f32
    %83 = vector.broadcast %cst_48 : f32 to vector<32x32xf32>
    %84 = arith.mulf %82, %83 : vector<32x32xf32>
    %cst_49 = arith.constant dense<0xFF800000> : vector<32xf32>
    %85 = vector.multi_reduction <maximumf>, %84, %cst_49 [1] : vector<32x32xf32> to vector<32xf32>
    %86 = vector.shape_cast %85 : vector<32xf32> to vector<32x1xf32>
    %87 = vector.broadcast %86 : vector<32x1xf32> to vector<32x32xf32>
    %88 = arith.subf %84, %87 : vector<32x32xf32>
    %89 = math.exp %88 : vector<32x32xf32>
    %cst_50 = arith.constant dense<0.000000e+00> : vector<32xf32>
    %90 = vector.multi_reduction <add>, %89, %cst_50 [1] : vector<32x32xf32> to vector<32xf32>
    %91 = vector.shape_cast %90 : vector<32xf32> to vector<32x1xf32>
    %92 = tpu.reciprocal %91 {approx = true} : vector<32x1xf32> -> vector<32x1xf32>
    %93 = vector.broadcast %92 : vector<32x1xf32> to vector<32x32xf32>
    %94 = arith.mulf %89, %93 : vector<32x32xf32>
    %c0_51 = arith.constant 0 : index
    %c64_52 = arith.constant 64 : index
    %95 = vector.load %arg6[%c0_51, %c64_52] : memref<32x96xf32, #tpu.memory_space<vmem>>, vector<32x32xf32>
    tpu.vector_store %arg6[%c0_51, %c64_52], %94 {strides = array<i32>} : memref<32x96xf32, #tpu.memory_space<vmem>>, vector<32x32xf32>,
    %cst_53 = arith.constant dense<0.000000e+00> : vector<32x32xf32>
    %96 = tpu.matmul %94, %80, %cst_53 {dimension_numbers = #tpu.dot_dimension_numbers<[1], [0], [0], [1], [0, 0, 1, 1], [], []>} : vector<32x32xf32>, vector<32x32xf32>, vector<32x32xf32> -> vector<32x32xf32>
    %97 = arith.addf %74, %96 : vector<32x32xf32>
    %c192 = arith.constant 192 : index
    %c0_54 = arith.constant 0 : index
    %98 = vector.load %arg3[%c192, %c0_54] : memref<448x32xf32, #tpu.memory_space<vmem>>, vector<32x32xf32>
    %cst_55 = arith.constant dense<0.000000e+00> : vector<32x32xf32>
    %99 = tpu.matmul %97, %98, %cst_55 {dimension_numbers = #tpu.dot_dimension_numbers<[1], [0], [0], [1], [0, 0, 1, 1], [], []>} : vector<32x32xf32>, vector<32x32xf32>, vector<32x32xf32> -> vector<32x32xf32>
    %c8_56 = arith.constant 8 : index
    %c0_57 = arith.constant 0 : index
    %100 = vector.load %arg5[%c8_56, %c0_57] : memref<16x32xf32, #tpu.memory_space<vmem>>, vector<1x32xf32>
    %101 = vector.broadcast %100 : vector<1x32xf32> to vector<32x32xf32>
    %102 = arith.addf %99, %101 : vector<32x32xf32>
    %103 = arith.addf %102, %0 : vector<32x32xf32>
    %cst_58 = arith.constant dense<0.000000e+00> : vector<32xf32>
    %104 = vector.multi_reduction <add>, %103, %cst_58 [1] : vector<32x32xf32> to vector<32xf32>
    %105 = vector.shape_cast %104 : vector<32xf32> to vector<32x1xf32>
    %cst_59 = arith.constant 3.200000e+01 : f32
    %106 = vector.broadcast %cst_59 : f32 to vector<32x1xf32>
    %107 = arith.divf %105, %106 : vector<32x1xf32>
    %108 = vector.broadcast %107 : vector<32x1xf32> to vector<32x32xf32>
    %109 = arith.subf %103, %108 : vector<32x32xf32>
    %110 = arith.mulf %109, %109 : vector<32x32xf32>
    %cst_60 = arith.constant dense<0.000000e+00> : vector<32xf32>
    %111 = vector.multi_reduction <add>, %110, %cst_60 [1] : vector<32x32xf32> to vector<32xf32>
    %112 = vector.shape_cast %111 : vector<32xf32> to vector<32x1xf32>
    %cst_61 = arith.constant 3.200000e+01 : f32
    %113 = vector.broadcast %cst_61 : f32 to vector<32x1xf32>
    %114 = arith.divf %112, %113 : vector<32x1xf32>
    %cst_62 = arith.constant 9.99999974E-6 : f32
    %115 = vector.broadcast %cst_62 : f32 to vector<32x1xf32>
    %116 = arith.addf %114, %115 : vector<32x1xf32>
    %117 = math.rsqrt %116 : vector<32x1xf32>
    %118 = vector.broadcast %117 : vector<32x1xf32> to vector<32x32xf32>
    %119 = arith.mulf %109, %118 : vector<32x32xf32>
    %c2 = arith.constant 2 : index
    %c0_63 = arith.constant 0 : index
    %120 = vector.load %arg5[%c2, %c0_63] : memref<16x32xf32, #tpu.memory_space<vmem>>, vector<1x32xf32>
    %121 = vector.broadcast %120 : vector<1x32xf32> to vector<32x32xf32>
    %122 = arith.mulf %119, %121 : vector<32x32xf32>
    %c6 = arith.constant 6 : index
    %c0_64 = arith.constant 0 : index
    %123 = vector.load %arg5[%c6, %c0_64] : memref<16x32xf32, #tpu.memory_space<vmem>>, vector<1x32xf32>
    %124 = vector.broadcast %123 : vector<1x32xf32> to vector<32x32xf32>
    %125 = arith.addf %122, %124 : vector<32x32xf32>
    %126 = arith.addf %50, %2 : vector<32x32xf32>
    %c224 = arith.constant 224 : index
    %c0_65 = arith.constant 0 : index
    %127 = vector.load %arg3[%c224, %c0_65] : memref<448x32xf32, #tpu.memory_space<vmem>>, vector<32x32xf32>
    %cst_66 = arith.constant dense<0.000000e+00> : vector<32x32xf32>
    %128 = tpu.matmul %125, %127, %cst_66 {dimension_numbers = #tpu.dot_dimension_numbers<[1], [0], [0], [1], [0, 0, 1, 1], [], []>} : vector<32x32xf32>, vector<32x32xf32>, vector<32x32xf32> -> vector<32x32xf32>
    %c9 = arith.constant 9 : index
    %c0_67 = arith.constant 0 : index
    %129 = vector.load %arg5[%c9, %c0_67] : memref<16x32xf32, #tpu.memory_space<vmem>>, vector<1x32xf32>
    %130 = vector.broadcast %129 : vector<1x32xf32> to vector<32x32xf32>
    %131 = arith.addf %128, %130 : vector<32x32xf32>
    %cst_68 = arith.constant dense<0.000000e+00> : vector<8x32xf32>
    %132 = tpu.matmul %6, %50, %cst_68 {dimension_numbers = #tpu.dot_dimension_numbers<[1], [0], [0], [1], [0, 0, 1, 1], [], []>} : vector<8x32xf32>, vector<32x32xf32>, vector<8x32xf32> -> vector<8x32xf32>
    %c256 = arith.constant 256 : index
    %c0_69 = arith.constant 0 : index
    %133 = vector.load %arg3[%c256, %c0_69] : memref<448x32xf32, #tpu.memory_space<vmem>>, vector<32x32xf32>
    %cst_70 = arith.constant dense<0.000000e+00> : vector<8x32xf32>
    %134 = tpu.matmul %132, %133, %cst_70 {dimension_numbers = #tpu.dot_dimension_numbers<[1], [0], [0], [1], [0, 0, 1, 1], [], []>} : vector<8x32xf32>, vector<32x32xf32>, vector<8x32xf32> -> vector<8x32xf32>
    %c10 = arith.constant 10 : index
    %c0_71 = arith.constant 0 : index
    %135 = vector.load %arg5[%c10, %c0_71] : memref<16x32xf32, #tpu.memory_space<vmem>>, vector<1x32xf32>
    %136 = vector.broadcast %135 : vector<1x32xf32> to vector<8x32xf32>
    %137 = arith.addf %134, %136 : vector<8x32xf32>
    %cst_72 = arith.constant dense<0.000000e+00> : vector<32x8xf32>
    %138 = tpu.matmul %131, %137, %cst_72 {dimension_numbers = #tpu.dot_dimension_numbers<[1], [1], [0], [0], [0, 0, 1, 0], [], []>} : vector<32x32xf32>, vector<8x32xf32>, vector<32x8xf32> -> vector<32x8xf32>
    %cst_73 = arith.constant 0.176776692 : f32
    %139 = vector.broadcast %cst_73 : f32 to vector<32x8xf32>
    %140 = arith.mulf %138, %139 : vector<32x8xf32>
    %141 = arith.addf %140, %4 : vector<32x8xf32>
    %142 = tpu.iota {dimensions = array<i32: 1>} : vector<32x8xi32>
    %cst_74 = arith.constant dense<0xFF800000> : vector<32xf32>
    %143 = vector.multi_reduction <maximumf>, %141, %cst_74 [1] : vector<32x8xf32> to vector<32xf32>
    %144 = vector.shape_cast %143 : vector<32xf32> to vector<32x1xf32>
    %145 = vector.broadcast %144 : vector<32x1xf32> to vector<32x8xf32>
    %146 = arith.cmpf oeq, %141, %145 : vector<32x8xf32>
    %c8_i32 = arith.constant 8 : i32
    %147 = vector.broadcast %c8_i32 : i32 to vector<32x8xi32>
    %148 = arith.select %146, %142, %147 : vector<32x8xi1>, vector<32x8xi32>
    %cst_75 = arith.constant dense<2147483647> : vector<32xi32>
    %149 = vector.multi_reduction <minsi>, %148, %cst_75 [1] : vector<32x8xi32> to vector<32xi32>
    %150 = vector.shape_cast %149 : vector<32xi32> to vector<32x1xi32>
    %151 = vector.broadcast %150 : vector<32x1xi32> to vector<32x8xi32>
    %152 = arith.cmpi eq, %142, %151 : vector<32x8xi32>
    %153 = arith.extui %152 : vector<32x8xi1> to vector<32x8xi32>
    %154 = arith.sitofp %153 : vector<32x8xi32> to vector<32x8xf32>
    %cst_76 = arith.constant -3.40282347E+38 : f32
    %155 = vector.broadcast %cst_76 : f32 to vector<32x8xf32>
    %156 = arith.select %152, %155, %141 : vector<32x8xi1>, vector<32x8xf32>
    %cst_77 = arith.constant dense<0xFF800000> : vector<32xf32>
    %157 = vector.multi_reduction <maximumf>, %156, %cst_77 [1] : vector<32x8xf32> to vector<32xf32>
    %158 = vector.shape_cast %157 : vector<32xf32> to vector<32x1xf32>
    %159 = vector.broadcast %158 : vector<32x1xf32> to vector<32x8xf32>
    %160 = arith.cmpf oeq, %156, %159 : vector<32x8xf32>
    %c8_i32_78 = arith.constant 8 : i32
    %161 = vector.broadcast %c8_i32_78 : i32 to vector<32x8xi32>
    %162 = arith.select %160, %142, %161 : vector<32x8xi1>, vector<32x8xi32>
    %cst_79 = arith.constant dense<2147483647> : vector<32xi32>
    %163 = vector.multi_reduction <minsi>, %162, %cst_79 [1] : vector<32x8xi32> to vector<32xi32>
    %164 = vector.shape_cast %163 : vector<32xi32> to vector<32x1xi32>
    %165 = vector.broadcast %164 : vector<32x1xi32> to vector<32x8xi32>
    %166 = arith.cmpi eq, %142, %165 : vector<32x8xi32>
    %167 = arith.extui %166 : vector<32x8xi1> to vector<32x8xi32>
    %168 = arith.sitofp %167 : vector<32x8xi32> to vector<32x8xf32>
    %169 = arith.subf %144, %144 : vector<32x1xf32>
    %170 = math.exp %169 : vector<32x1xf32>
    %171 = arith.subf %158, %144 : vector<32x1xf32>
    %172 = math.exp %171 : vector<32x1xf32>
    %173 = arith.addf %170, %172 : vector<32x1xf32>
    %174 = tpu.reciprocal %173 {approx = true} : vector<32x1xf32> -> vector<32x1xf32>
    %cst_80 = arith.constant 0.000000e+00 : f32
    %175 = vector.broadcast %cst_80 : f32 to vector<32x8xf32>
    %176 = arith.mulf %170, %174 : vector<32x1xf32>
    %177 = vector.broadcast %176 : vector<32x1xf32> to vector<32x8xf32>
    %178 = arith.mulf %154, %177 : vector<32x8xf32>
    %179 = arith.addf %175, %178 : vector<32x8xf32>
    %180 = arith.mulf %172, %174 : vector<32x1xf32>
    %181 = vector.broadcast %180 : vector<32x1xf32> to vector<32x8xf32>
    %182 = arith.mulf %168, %181 : vector<32x8xf32>
    %183 = arith.addf %179, %182 : vector<32x8xf32>
    %c0_81 = arith.constant 0 : index
    %c0_82 = arith.constant 0 : index
    %184 = vector.load %arg4[%c0_81, %c0_82] : memref<96x128xf32, #tpu.memory_space<vmem>>, vector<32x128xf32>
    %cst_83 = arith.constant dense<0.000000e+00> : vector<32x128xf32>
    %185 = tpu.matmul %125, %184, %cst_83 {dimension_numbers = #tpu.dot_dimension_numbers<[1], [0], [0], [1], [0, 0, 1, 1], [], []>} : vector<32x32xf32>, vector<32x128xf32>, vector<32x128xf32> -> vector<32x128xf32>
    %cst_84 = arith.constant 1.250000e-01 : f32
    %186 = vector.broadcast %cst_84 : f32 to vector<32x128xf32>
    %187 = arith.mulf %185, %186 : vector<32x128xf32>
    %c32_85 = arith.constant 32 : index
    %c0_86 = arith.constant 0 : index
    %188 = vector.load %arg4[%c32_85, %c0_86] : memref<96x128xf32, #tpu.memory_space<vmem>>, vector<32x128xf32>
    %cst_87 = arith.constant dense<0.000000e+00> : vector<32x128xf32>
    %189 = tpu.matmul %126, %188, %cst_87 {dimension_numbers = #tpu.dot_dimension_numbers<[1], [0], [0], [1], [0, 0, 1, 1], [], []>} : vector<32x32xf32>, vector<32x128xf32>, vector<32x128xf32> -> vector<32x128xf32>
    %c64_88 = arith.constant 64 : index
    %c0_89 = arith.constant 0 : index
    %190 = vector.load %arg4[%c64_88, %c0_89] : memref<96x128xf32, #tpu.memory_space<vmem>>, vector<32x128xf32>
    %cst_90 = arith.constant dense<0.000000e+00> : vector<32x128xf32>
    %191 = tpu.matmul %126, %190, %cst_90 {dimension_numbers = #tpu.dot_dimension_numbers<[1], [0], [0], [1], [0, 0, 1, 1], [], []>} : vector<32x32xf32>, vector<32x128xf32>, vector<32x128xf32> -> vector<32x128xf32>
    %cst_91 = arith.constant 0.000000e+00 : f32
    %192 = vector.broadcast %cst_91 : f32 to vector<32x32xf32>
    %193 = vector.extract_strided_slice %187 {offsets = [0, 0], sizes = [32, 64], strides = [1, 1]} : vector<32x128xf32> to vector<32x64xf32>
    %194 = vector.extract_strided_slice %189 {offsets = [0, 0], sizes = [32, 64], strides = [1, 1]} : vector<32x128xf32> to vector<32x64xf32>
    %cst_92 = arith.constant dense<0.000000e+00> : vector<32x32xf32>
    %195 = tpu.matmul %193, %194, %cst_92 {dimension_numbers = #tpu.dot_dimension_numbers<[1], [1], [0], [0], [0, 0, 1, 0], [], []>} : vector<32x64xf32>, vector<32x64xf32>, vector<32x32xf32> -> vector<32x32xf32>
    %196 = arith.addf %195, %3 : vector<32x32xf32>
    %cst_93 = arith.constant dense<0xFF800000> : vector<32xf32>
    %197 = vector.multi_reduction <maximumf>, %196, %cst_93 [1] : vector<32x32xf32> to vector<32xf32>
    %198 = vector.shape_cast %197 : vector<32xf32> to vector<32x1xf32>
    %199 = vector.broadcast %198 : vector<32x1xf32> to vector<32x32xf32>
    %200 = arith.subf %196, %199 : vector<32x32xf32>
    %201 = math.exp %200 : vector<32x32xf32>
    %cst_94 = arith.constant dense<0.000000e+00> : vector<32x8xf32>
    %202 = tpu.matmul %201, %5, %cst_94 {dimension_numbers = #tpu.dot_dimension_numbers<[1], [1], [0], [0], [0, 0, 1, 0], [], []>} : vector<32x32xf32>, vector<8x32xf32>, vector<32x8xf32> -> vector<32x8xf32>
    %cst_95 = arith.constant 1.000000e-30 : f32
    %203 = vector.broadcast %cst_95 : f32 to vector<32x8xf32>
    %204 = arith.maximumf %202, %203 : vector<32x8xf32>
    %205 = tpu.reciprocal %204 {approx = true} : vector<32x8xf32> -> vector<32x8xf32>
    %206 = arith.mulf %183, %205 : vector<32x8xf32>
    %cst_96 = arith.constant dense<0.000000e+00> : vector<32x32xf32>
    %207 = tpu.matmul %206, %5, %cst_96 {dimension_numbers = #tpu.dot_dimension_numbers<[1], [0], [0], [1], [0, 0, 1, 1], [], []>} : vector<32x8xf32>, vector<8x32xf32>, vector<32x32xf32> -> vector<32x32xf32>
    %208 = arith.mulf %201, %207 : vector<32x32xf32>
    %209 = vector.extract_strided_slice %191 {offsets = [0, 0], sizes = [32, 64], strides = [1, 1]} : vector<32x128xf32> to vector<32x64xf32>
    %cst_97 = arith.constant dense<0.000000e+00> : vector<32x64xf32>
    %210 = tpu.matmul %208, %209, %cst_97 {dimension_numbers = #tpu.dot_dimension_numbers<[1], [0], [0], [1], [0, 0, 1, 1], [], []>} : vector<32x32xf32>, vector<32x64xf32>, vector<32x64xf32> -> vector<32x64xf32>
    %c320 = arith.constant 320 : index
    %c0_98 = arith.constant 0 : index
    %211 = vector.load %arg3[%c320, %c0_98] : memref<448x32xf32, #tpu.memory_space<vmem>>, vector<64x32xf32>
    %cst_99 = arith.constant dense<0.000000e+00> : vector<32x32xf32>
    %212 = tpu.matmul %210, %211, %cst_99 {dimension_numbers = #tpu.dot_dimension_numbers<[1], [0], [0], [1], [0, 0, 1, 1], [], []>} : vector<32x64xf32>, vector<64x32xf32>, vector<32x32xf32> -> vector<32x32xf32>
    %213 = arith.addf %192, %212 : vector<32x32xf32>
    %214 = vector.extract_strided_slice %187 {offsets = [0, 64], sizes = [32, 64], strides = [1, 1]} : vector<32x128xf32> to vector<32x64xf32>
    %215 = vector.extract_strided_slice %189 {offsets = [0, 64], sizes = [32, 64], strides = [1, 1]} : vector<32x128xf32> to vector<32x64xf32>
    %cst_100 = arith.constant dense<0.000000e+00> : vector<32x32xf32>
    %216 = tpu.matmul %214, %215, %cst_100 {dimension_numbers = #tpu.dot_dimension_numbers<[1], [1], [0], [0], [0, 0, 1, 0], [], []>} : vector<32x64xf32>, vector<32x64xf32>, vector<32x32xf32> -> vector<32x32xf32>
    %217 = arith.addf %216, %3 : vector<32x32xf32>
    %cst_101 = arith.constant dense<0xFF800000> : vector<32xf32>
    %218 = vector.multi_reduction <maximumf>, %217, %cst_101 [1] : vector<32x32xf32> to vector<32xf32>
    %219 = vector.shape_cast %218 : vector<32xf32> to vector<32x1xf32>
    %220 = vector.broadcast %219 : vector<32x1xf32> to vector<32x32xf32>
    %221 = arith.subf %217, %220 : vector<32x32xf32>
    %222 = math.exp %221 : vector<32x32xf32>
    %cst_102 = arith.constant dense<0.000000e+00> : vector<32x8xf32>
    %223 = tpu.matmul %222, %5, %cst_102 {dimension_numbers = #tpu.dot_dimension_numbers<[1], [1], [0], [0], [0, 0, 1, 0], [], []>} : vector<32x32xf32>, vector<8x32xf32>, vector<32x8xf32> -> vector<32x8xf32>
    %cst_103 = arith.constant 1.000000e-30 : f32
    %224 = vector.broadcast %cst_103 : f32 to vector<32x8xf32>
    %225 = arith.maximumf %223, %224 : vector<32x8xf32>
    %226 = tpu.reciprocal %225 {approx = true} : vector<32x8xf32> -> vector<32x8xf32>
    %227 = arith.mulf %183, %226 : vector<32x8xf32>
    %cst_104 = arith.constant dense<0.000000e+00> : vector<32x32xf32>
    %228 = tpu.matmul %227, %5, %cst_104 {dimension_numbers = #tpu.dot_dimension_numbers<[1], [0], [0], [1], [0, 0, 1, 1], [], []>} : vector<32x8xf32>, vector<8x32xf32>, vector<32x32xf32> -> vector<32x32xf32>
    %229 = arith.mulf %222, %228 : vector<32x32xf32>
    %230 = vector.extract_strided_slice %191 {offsets = [0, 64], sizes = [32, 64], strides = [1, 1]} : vector<32x128xf32> to vector<32x64xf32>
    %cst_105 = arith.constant dense<0.000000e+00> : vector<32x64xf32>
    %231 = tpu.matmul %229, %230, %cst_105 {dimension_numbers = #tpu.dot_dimension_numbers<[1], [0], [0], [1], [0, 0, 1, 1], [], []>} : vector<32x32xf32>, vector<32x64xf32>, vector<32x64xf32> -> vector<32x64xf32>
    %c384 = arith.constant 384 : index
    %c0_106 = arith.constant 0 : index
    %232 = vector.load %arg3[%c384, %c0_106] : memref<448x32xf32, #tpu.memory_space<vmem>>, vector<64x32xf32>
    %cst_107 = arith.constant dense<0.000000e+00> : vector<32x32xf32>
    %233 = tpu.matmul %231, %232, %cst_107 {dimension_numbers = #tpu.dot_dimension_numbers<[1], [0], [0], [1], [0, 0, 1, 1], [], []>} : vector<32x64xf32>, vector<64x32xf32>, vector<32x32xf32> -> vector<32x32xf32>
    %234 = arith.addf %213, %233 : vector<32x32xf32>
    %c11 = arith.constant 11 : index
    %c0_108 = arith.constant 0 : index
    %235 = vector.load %arg5[%c11, %c0_108] : memref<16x32xf32, #tpu.memory_space<vmem>>, vector<1x32xf32>
    %236 = vector.broadcast %235 : vector<1x32xf32> to vector<32x32xf32>
    %237 = arith.addf %234, %236 : vector<32x32xf32>
    %238 = arith.addf %237, %125 : vector<32x32xf32>
    %cst_109 = arith.constant dense<0.000000e+00> : vector<32xf32>
    %239 = vector.multi_reduction <add>, %238, %cst_109 [1] : vector<32x32xf32> to vector<32xf32>
    %240 = vector.shape_cast %239 : vector<32xf32> to vector<32x1xf32>
    %cst_110 = arith.constant 3.200000e+01 : f32
    %241 = vector.broadcast %cst_110 : f32 to vector<32x1xf32>
    %242 = arith.divf %240, %241 : vector<32x1xf32>
    %243 = vector.broadcast %242 : vector<32x1xf32> to vector<32x32xf32>
    %244 = arith.subf %238, %243 : vector<32x32xf32>
    %245 = arith.mulf %244, %244 : vector<32x32xf32>
    %cst_111 = arith.constant dense<0.000000e+00> : vector<32xf32>
    %246 = vector.multi_reduction <add>, %245, %cst_111 [1] : vector<32x32xf32> to vector<32xf32>
    %247 = vector.shape_cast %246 : vector<32xf32> to vector<32x1xf32>
    %cst_112 = arith.constant 3.200000e+01 : f32
    %248 = vector.broadcast %cst_112 : f32 to vector<32x1xf32>
    %249 = arith.divf %247, %248 : vector<32x1xf32>
    %cst_113 = arith.constant 9.99999974E-6 : f32
    %250 = vector.broadcast %cst_113 : f32 to vector<32x1xf32>
    %251 = arith.addf %249, %250 : vector<32x1xf32>
    %252 = math.rsqrt %251 : vector<32x1xf32>
    %253 = vector.broadcast %252 : vector<32x1xf32> to vector<32x32xf32>
    %254 = arith.mulf %244, %253 : vector<32x32xf32>
    %c3 = arith.constant 3 : index
    %c0_114 = arith.constant 0 : index
    %255 = vector.load %arg5[%c3, %c0_114] : memref<16x32xf32, #tpu.memory_space<vmem>>, vector<1x32xf32>
    %256 = vector.broadcast %255 : vector<1x32xf32> to vector<32x32xf32>
    %257 = arith.mulf %254, %256 : vector<32x32xf32>
    %c7 = arith.constant 7 : index
    %c0_115 = arith.constant 0 : index
    %258 = vector.load %arg5[%c7, %c0_115] : memref<16x32xf32, #tpu.memory_space<vmem>>, vector<1x32xf32>
    %259 = vector.broadcast %258 : vector<1x32xf32> to vector<32x32xf32>
    %260 = arith.addf %257, %259 : vector<32x32xf32>
    %c288 = arith.constant 288 : index
    %c0_116 = arith.constant 0 : index
    %261 = vector.load %arg3[%c288, %c0_116] : memref<448x32xf32, #tpu.memory_space<vmem>>, vector<32x32xf32>
    %cst_117 = arith.constant dense<0.000000e+00> : vector<32x32xf32>
    %262 = tpu.matmul %260, %261, %cst_117 {dimension_numbers = #tpu.dot_dimension_numbers<[1], [0], [0], [1], [0, 0, 1, 1], [], []>} : vector<32x32xf32>, vector<32x32xf32>, vector<32x32xf32> -> vector<32x32xf32>
    %c12 = arith.constant 12 : index
    %c0_118 = arith.constant 0 : index
    %263 = vector.load %arg5[%c12, %c0_118] : memref<16x32xf32, #tpu.memory_space<vmem>>, vector<1x32xf32>
    %264 = vector.broadcast %263 : vector<1x32xf32> to vector<32x32xf32>
    %265 = arith.addf %262, %264 : vector<32x32xf32>
    %cst_119 = arith.constant 0.000000e+00 : f32
    %266 = vector.broadcast %cst_119 : f32 to vector<32x32xf32>
    %267 = arith.maximumf %265, %266 : vector<32x32xf32>
    %268 = arith.addf %267, %238 : vector<32x32xf32>
    %c0_120 = arith.constant 0 : index
    %c0_121 = arith.constant 0 : index
    %269 = vector.load %arg6[%c0_120, %c0_121] : memref<32x96xf32, #tpu.memory_space<vmem>>, vector<32x32xf32>
    tpu.vector_store %arg6[%c0_120, %c0_121], %268 {strides = array<i32>} : memref<32x96xf32, #tpu.memory_space<vmem>>, vector<32x32xf32>,
    return
  }
}

</mosaic_0001>

<llo_original>
// kernel: mul.45
$region0: #{mul.45}
  %s0 = inlined_call_operand.vmem [shape: f32[2,16], index: 0, kind: input, shape index: {}]
  %s1 = inlined_call_operand.vmem [shape: f32[32], index: 1, kind: output, shape index: {}]
  $region1: #{mul.45} parent=0
    #allocation0 [shape = 'u8[4096]{0}', space=vmem, size = 0x1000, scoped, tag = 'scoped mem for output reshape']
    #allocation1 [shape = 'u8[4096]{0}', space=vmem, size = 0x1000, scoped, tag = 'scoped mem for input reshape']
    %s3 = sshll.u32 1, 2
    %s4 = ssub.s32 %s3, 1
    %v5 = vld [vmem:[%s0] sm:%s4]
    %6 = vst [vmem:[#allocation1] sm:%s4] %v5
    %v7 = vld [vmem:[#allocation1] sm:$0x1]
    %vm8 = vcmask 130048
    %9 = vst.msk [vmem:[#allocation0] sm:$0x1] %vm8, %v7
    %s10 = scalar_lea.vmem [#allocation1], 1
    %v11 = vld [vmem:[%s10] sm:$0x1]
    %12 = vrot.lane.b32.xlu0 %v11, 16
    %v13 = vpop.permute.xlu0 %12
    %vm14 = vcmask 261248
    %15 = vst.msk [vmem:[#allocation0] sm:$0x1] %vm14, %v13
    %s17 = sshll.u32 1, 1
    %s18 = ssub.s32 %s17, 1
    %v20 = vld [vmem:[#allocation0] sm:%s18]
    %s21 = sshll.u32 1, 1
    %s22 = ssub.s32 %s21, 1
    %23 = vst [vmem:[%s1] sm:%s22] %v20

// kernel: htm_transformer_block.1
$region0: #{htm_transformer_block.1}
  #allocation0 [shape = 'u32[]', space=smem, size = 0x4, offset = 0x4, fixed_abs, tag = 'smem constant byte address 0x4 - core index']
  #allocation1 [shape = 'u32[144,128]{1,0:T(1,128)}', space=vmem, size = 0x12000, scoped, tag = 'internal scratch']
  %s0 = inlined_call_operand.vmem [shape: f32[96,32], index: 0, kind: input, shape index: {}]
  %s1 = inlined_call_operand.vmem [shape: f32[32,40], index: 1, kind: input, shape index: {}]
  %s2 = inlined_call_operand.vmem [shape: f32[16,32], index: 2, kind: input, shape index: {}]
  %s3 = inlined_call_operand.vmem [shape: f32[448,32], index: 3, kind: input, shape index: {}]
  %s4 = inlined_call_operand.vmem [shape: f32[96,128], index: 4, kind: input, shape index: {}]
  %s5 = inlined_call_operand.vmem [shape: f32[16,32], index: 5, kind: input, shape index: {}]
  %s6 = inlined_call_operand.vmem [shape: f32[32,96], index: 6, kind: output, shape index: {}]
  %s7 = sld [smem:[#allocation0]]
  $region34: #{htm_transformer_block.1} parent=0
    _
  %s9 = ssub.s32 1, %s7
  %s10 = scalar_select 0, %s9, %s7
  // Predicated region
  $region2: #{htm_transformer_block.1} parent=0 // pred_check
    _
  $region3: #{htm_transformer_block.1} parent=0 // pred_check_branch
    %12 = sbr.rel (0) target = $region5
  $region4: #{htm_transformer_block.1} parent=0 // pred_region
    _
  $region5: #{htm_transformer_block.1} parent=0 // pred_fallthru
    _
  // Predicated region
  $region6: #{htm_transformer_block.1} parent=0 // pred_check
    _
  $region7: #{htm_transformer_block.1} parent=0 // pred_check_branch
    %14 = sbr.rel (0) target = $region9
  $region8: #{htm_transformer_block.1} parent=0 // pred_region
    _
  $region9: #{htm_transformer_block.1} parent=0 // pred_fallthru
    _
  // Predicated region
  $region10: #{htm_transformer_block.1} parent=0 // pred_check
    _
  $region11: #{htm_transformer_block.1} parent=0 // pred_check_branch
    %16 = sbr.rel (0) target = $region13
  $region12: #{htm_transformer_block.1} parent=0 // pred_region
    _
  $region13: #{htm_transformer_block.1} parent=0 // pred_fallthru
    _
  // Predicated region
  $region14: #{htm_transformer_block.1} parent=0 // pred_check
    _
  $region15: #{htm_transformer_block.1} parent=0 // pred_check_branch
    %18 = sbr.rel (0) target = $region17
  $region16: #{htm_transformer_block.1} parent=0 // pred_region
    _
  $region17: #{htm_transformer_block.1} parent=0 // pred_fallthru
    _
  // Predicated region
  $region18: #{htm_transformer_block.1} parent=0 // pred_check
    _
  $region19: #{htm_transformer_block.1} parent=0 // pred_check_branch
    %20 = sbr.rel (0) target = $region21
  $region20: #{htm_transformer_block.1} parent=0 // pred_region
    _
  $region21: #{htm_transformer_block.1} parent=0 // pred_fallthru
    _
  // Predicated region
  $region22: #{htm_transformer_block.1} parent=0 // pred_check
    _
  $region23: #{htm_transformer_block.1} parent=0 // pred_check_branch
    %22 = sbr.rel (0) target = $region25
  $region24: #{htm_transformer_block.1} parent=0 // pred_region
    _
  $region25: #{htm_transformer_block.1} parent=0 // pred_fallthru
    _
  %v23 = vld [vmem:[%s0] sm:$0xff]
  %v24 = vld [vmem:[%s0 + $0x8] sm:$0xff]
  %v25 = vld [vmem:[%s0 + $0x10] sm:$0xff]
  %v26 = vld [vmem:[%s0 + $0x18] sm:$0xff]
  %v27 = vld [vmem:[%s0 + $0x20] sm:$0xff]
  %v28 = vld [vmem:[%s0 + $0x28] sm:$0xff]
  %v29 = vld [vmem:[%s0 + $0x30] sm:$0xff]
  %v30 = vld [vmem:[%s0 + $0x38] sm:$0xff]
  %v31 = vld [vmem:[%s0 + $0x40] sm:$0xff]
  %v32 = vld [vmem:[%s0 + $0x48] sm:$0xff]
  %v33 = vld [vmem:[%s0 + $0x50] sm:$0xff]
  %v34 = vld [vmem:[%s0 + $0x58] sm:$0xff]
  %v35 = vld [vmem:[%s1] sm:$0xff]
  %v36 = vld [vmem:[%s1 + $0x8] sm:$0xff]
  %v37 = vld [vmem:[%s1 + $0x10] sm:$0xff]
  %v38 = vld [vmem:[%s1 + $0x18] sm:$0xff]
  %v39 = vld [vmem:[%s2] sm:$0xff]
  %v40 = vld [vmem:[%s2 + $0x8] sm:$0xff]
  %vm41 = vcmask 261120
  %v42 = vsel %vm41, %v23, 0.0
  %43 = vadd.xlane.f32.xlu0 %v42
  %v44 = vpop.xlane.xlu0 %43
  %v45 = vsel %vm41, %v24, 0.0
  %46 = vadd.xlane.f32.xlu0 %v45
  %v47 = vpop.xlane.xlu0 %46
  %v48 = vsel %vm41, %v25, 0.0
  %49 = vadd.xlane.f32.xlu0 %v48
  %v50 = vpop.xlane.xlu0 %49
  %v51 = vsel %vm41, %v26, 0.0
  %52 = vadd.xlane.f32.xlu0 %v51
  %v53 = vpop.xlane.xlu0 %52
  %v54 = vrcp.pop 32.0
  %v55 = vmul.f32 %v44, %v54
  %v56 = vmul.f32 %v47, %v54
  %v57 = vmul.f32 %v50, %v54
  %v58 = vmul.f32 %v53, %v54
  %v59 = vsub.f32 %v23, %v55
  %v60 = vsub.f32 %v24, %v56
  %v61 = vsub.f32 %v25, %v57
  %v62 = vsub.f32 %v26, %v58
  %v63 = vmul.f32 %v59, %v59
  %v64 = vmul.f32 %v60, %v60
  %v65 = vmul.f32 %v61, %v61
  %v66 = vmul.f32 %v62, %v62
  %v67 = vsel %vm41, %v63, 0.0
  %68 = vadd.xlane.f32.xlu0 %v67
  %v69 = vpop.xlane.xlu0 %68
  %v70 = vsel %vm41, %v64, 0.0
  %71 = vadd.xlane.f32.xlu0 %v70
  %v72 = vpop.xlane.xlu0 %71
  %v73 = vsel %vm41, %v65, 0.0
  %74 = vadd.xlane.f32.xlu0 %v73
  %v75 = vpop.xlane.xlu0 %74
  %v76 = vsel %vm41, %v66, 0.0
  %77 = vadd.xlane.f32.xlu0 %v76
  %v78 = vpop.xlane.xlu0 %77
  %v79 = vmul.f32 %v69, %v54
  %v80 = vmul.f32 %v72, %v54
  %v81 = vmul.f32 %v75, %v54
  %v82 = vmul.f32 %v78, %v54
  %v83 = vadd.f32 %v79, 1e-05
  %v84 = vadd.f32 %v80, 1e-05
  %v85 = vadd.f32 %v81, 1e-05
  %v86 = vadd.f32 %v82, 1e-05
  %v87 = vrsqrt.pop %v83
  %v88 = vrsqrt.pop %v84
  %v89 = vrsqrt.pop %v85
  %v90 = vrsqrt.pop %v86
  %v91 = vmul.f32 %v59, %v87
  %v92 = vmul.f32 %v60, %v88
  %v93 = vmul.f32 %v61, %v89
  %v94 = vmul.f32 %v62, %v90
  %v95 = vld [vmem:[%s5] sm:$0x1]
  %v96 = vlaneseq
  %v97 = vshrl.u32 %v96, 7
  %v98 = vsub.s32 0, %v97
  %v99 = vrot.slane %v95, %v98
  %v100 = vmul.f32 %v91, %v99
  %v101 = vmul.f32 %v92, %v99
  %v102 = vmul.f32 %v93, %v99
  %v103 = vmul.f32 %v94, %v99
  %v104 = vld [vmem:[%s5 + $0x4] sm:$0x1]
  %v105 = vlaneseq
  %v106 = vshrl.u32 %v105, 7
  %v107 = vsub.s32 0, %v106
  %v108 = vrot.slane %v104, %v107
  %v109 = vadd.f32 %v100, %v108
  %v110 = vadd.f32 %v101, %v108
  %v111 = vadd.f32 %v102, %v108
  %v112 = vadd.f32 %v103, %v108
  %v113 = vsel %vm41, %v27, 0.0
  %114 = vadd.xlane.f32.xlu0 %v113
  %v115 = vpop.xlane.xlu0 %114
  %v116 = vsel %vm41, %v28, 0.0
  %117 = vadd.xlane.f32.xlu0 %v116
  %v118 = vpop.xlane.xlu0 %117
  %v119 = vsel %vm41, %v29, 0.0
  %120 = vadd.xlane.f32.xlu0 %v119
  %v121 = vpop.xlane.xlu0 %120
  %v122 = vsel %vm41, %v30, 0.0
  %123 = vadd.xlane.f32.xlu0 %v122
  %v124 = vpop.xlane.xlu0 %123
  %v125 = vmul.f32 %v115, %v54
  %v126 = vmul.f32 %v118, %v54
  %v127 = vmul.f32 %v121, %v54
  %v128 = vmul.f32 %v124, %v54
  %v129 = vsub.f32 %v27, %v125
  %v130 = vsub.f32 %v28, %v126
  %v131 = vsub.f32 %v29, %v127
  %v132 = vsub.f32 %v30, %v128
  %v133 = vmul.f32 %v129, %v129
  %v134 = vmul.f32 %v130, %v130
  %v135 = vmul.f32 %v131, %v131
  %v136 = vmul.f32 %v132, %v132
  %v137 = vsel %vm41, %v133, 0.0
  %138 = vadd.xlane.f32.xlu0 %v137
  %v139 = vpop.xlane.xlu0 %138
  %v140 = vsel %vm41, %v134, 0.0
  %141 = vadd.xlane.f32.xlu0 %v140
  %v142 = vpop.xlane.xlu0 %141
  %v143 = vsel %vm41, %v135, 0.0
  %144 = vadd.xlane.f32.xlu0 %v143
  %v145 = vpop.xlane.xlu0 %144
  %v146 = vsel %vm41, %v136, 0.0
  %147 = vadd.xlane.f32.xlu0 %v146
  %v148 = vpop.xlane.xlu0 %147
  %v149 = vmul.f32 %v139, %v54
  %v150 = vmul.f32 %v142, %v54
  %v151 = vmul.f32 %v145, %v54
  %v152 = vmul.f32 %v148, %v54
  %v153 = vadd.f32 %v149, 1e-05
  %v154 = vadd.f32 %v150, 1e-05
  %v155 = vadd.f32 %v151, 1e-05
  %v156 = vadd.f32 %v152, 1e-05
  %v157 = vrsqrt.pop %v153
  %v158 = vrsqrt.pop %v154
  %v159 = vrsqrt.pop %v155
  %v160 = vrsqrt.pop %v156
  %v161 = vmul.f32 %v129, %v157
  %v162 = vmul.f32 %v130, %v158
  %v163 = vmul.f32 %v131, %v159
  %v164 = vmul.f32 %v132, %v160
  %v165 = vld [vmem:[%s5 + $0x1] sm:$0x1]
  %v166 = vlaneseq
  %v167 = vshrl.u32 %v166, 7
  %v168 = vsub.s32 0, %v167
  %v169 = vrot.slane %v165, %v168
  %v170 = vmul.f32 %v161, %v169
  %v171 = vmul.f32 %v162, %v169
  %v172 = vmul.f32 %v163, %v169
  %v173 = vmul.f32 %v164, %v169
  %v174 = vld [vmem:[%s5 + $0x5] sm:$0x1]
  %v175 = vlaneseq
  %v176 = vshrl.u32 %v175, 7
  %v177 = vsub.s32 0, %v176
  %v178 = vrot.slane %v174, %v177
  %v179 = vadd.f32 %v170, %v178
  %v180 = vadd.f32 %v171, %v178
  %v181 = vadd.f32 %v172, %v178
  %v182 = vadd.f32 %v173, %v178
  %v183 = vld [vmem:[%s3] sm:$0xff]
  %v184 = vld [vmem:[%s3 + $0x8] sm:$0xff]
  %v185 = vld [vmem:[%s3 + $0x10] sm:$0xff]
  %v186 = vld [vmem:[%s3 + $0x18] sm:$0xff]
  %v188 = vsel %vm41, %v109, 0
  %v191 = vsel %vm41, %v110, 0
  %v194 = vsel %vm41, %v111, 0
  %v197 = vsel %vm41, %v112, 0
  %199 = vmatprep.subr.mxu0 0.0
  %200 = vmatpush1.msra.mxu0 0.0
  %201 = vmatprep.subr.mxu0 0.0
  %202 = vmatpush1.msra.mxu0 0.0
  %203 = vmatprep.subr.mxu0 0.0
  %204 = vmatpush1.msra.mxu0 0.0
  %205 = vmatprep.subr.mxu0 0.0
  %206 = vmatpush1.msra.mxu0 0.0
  %207 = vmatprep.subr.mxu0 0.0
  %208 = vmatpush1.msra.mxu0 0.0
  %209 = vmatprep.subr.mxu0 0.0
  %210 = vmatpush1.msra.mxu0 0.0
  %211 = vmatprep.subr.mxu0 0.0
  %212 = vmatpush1.msra.mxu0 0.0
  %213 = vmatprep.subr.mxu0 0.0
  %214 = vmatpush1.msra.mxu0 0.0
  %215 = vmatprep.subr.mxu0 0.0
  %216 = vmatpush1.msra.mxu0 0.0
  %217 = vmatprep.subr.mxu0 0.0
  %218 = vmatpush1.msra.mxu0 0.0
  %219 = vmatprep.subr.mxu0 0.0
  %220 = vmatpush1.msra.mxu0 0.0
  %221 = vmatprep.subr.mxu0 0.0
  %222 = vmatpush1.msra.mxu0 0.0
  %223 = vmatprep.subr.mxu0 0.0
  %224 = vmatpush1.msra.mxu0 %v186
  %225 = vmatprep.subr.mxu0 0.0
  %226 = vmatpush1.msra.mxu0 %v185
  %227 = vmatprep.subr.mxu0 0.0
  %228 = vmatpush1.msra.mxu0 %v184
  %229 = vmatprep.subr.mxu0 0.0
  %230 = vmatpush1.msra.mxu0 %v183
  %231 = vmatprep.subr.mxu0 0.0
  %232 = vmatpush2.msra.mxu0 0.0
  %233 = vmatprep.subr.mxu0 0.0
  %234 = vmatpush2.msra.mxu0 0.0
  %235 = vmatprep.subr.mxu0 0.0
  %236 = vmatpush2.msra.mxu0 0.0
  %237 = vmatprep.subr.mxu0 0.0
  %238 = vmatpush2.msra.mxu0 0.0
  %239 = vmatprep.subr.mxu0 0.0
  %240 = vmatpush2.msra.mxu0 0.0
  %241 = vmatprep.subr.mxu0 0.0
  %242 = vmatpush2.msra.mxu0 0.0
  %243 = vmatprep.subr.mxu0 0.0
  %244 = vmatpush2.msra.mxu0 0.0
  %245 = vmatprep.subr.mxu0 0.0
  %246 = vmatpush2.msra.mxu0 0.0
  %247 = vmatprep.subr.mxu0 0.0
  %248 = vmatpush2.msra.mxu0 0.0
  %249 = vmatprep.subr.mxu0 0.0
  %250 = vmatpush2.msra.mxu0 0.0
  %251 = vmatprep.subr.mxu0 0.0
  %252 = vmatpush2.msra.mxu0 0.0
  %253 = vmatprep.subr.mxu0 0.0
  %254 = vmatpush2.msra.mxu0 0.0
  %255 = vmatprep.subr.mxu0 0.0
  %256 = vmatpush2.msra.mxu0 0.0
  %257 = vmatprep.subr.mxu0 0.0
  %258 = vmatpush2.msra.mxu0 0.0
  %259 = vmatprep.subr.mxu0 0.0
  %260 = vmatpush2.msra.mxu0 0.0
  %261 = vmatprep.subr.mxu0 0.0
  %262 = vmatpush2.msra.mxu0 0.0
  %263 = vmatprep.mubr.f32.mxu0 0.0
  %264 = vmatmul.mubr.f32.gmra.mxu0 %v188
  %v265 = vpop.f32.mrf.mxu0
  %v266 = vadd.f32 0.0, %v265
  %v267 = vpop.f32.mrf.mxu0
  %268 = vmatprep.mubr.f32.mxu0 0.0
  %269 = vmatmul.mubr.f32.gmra.mxu0 %v191
  %v270 = vpop.f32.mrf.mxu0
  %v271 = vadd.f32 0.0, %v270
  %v272 = vpop.f32.mrf.mxu0
  %273 = vmatprep.mubr.f32.mxu0 0.0
  %274 = vmatmul.mubr.f32.gmra.mxu0 %v194
  %v275 = vpop.f32.mrf.mxu0
  %v276 = vadd.f32 0.0, %v275
  %v277 = vpop.f32.mrf.mxu0
  %278 = vmatprep.mubr.f32.mxu0 0.0
  %279 = vmatmul.mubr.f32.gmra.mxu0 %v197
  %v280 = vpop.f32.mrf.mxu0
  %v281 = vadd.f32 0.0, %v280
  %v282 = vpop.f32.mrf.mxu0
  %283 = vdwg.mxu0
  %v284 = vld [vmem:[%s3 + $0x40] sm:$0xff]
  %v285 = vld [vmem:[%s3 + $0x48] sm:$0xff]
  %v286 = vld [vmem:[%s3 + $0x50] sm:$0xff]
  %v287 = vld [vmem:[%s3 + $0x58] sm:$0xff]
  %288 = vmatprep.subr.mxu0 0.0
  %289 = vmatpush1.msra.mxu0 0.0
  %290 = vmatprep.subr.mxu0 0.0
  %291 = vmatpush1.msra.mxu0 0.0
  %292 = vmatprep.subr.mxu0 0.0
  %293 = vmatpush1.msra.mxu0 0.0
  %294 = vmatprep.subr.mxu0 0.0
  %295 = vmatpush1.msra.mxu0 0.0
  %296 = vmatprep.subr.mxu0 0.0
  %297 = vmatpush1.msra.mxu0 0.0
  %298 = vmatprep.subr.mxu0 0.0
  %299 = vmatpush1.msra.mxu0 0.0
  %300 = vmatprep.subr.mxu0 0.0
  %301 = vmatpush1.msra.mxu0 0.0
  %302 = vmatprep.subr.mxu0 0.0
  %303 = vmatpush1.msra.mxu0 0.0
  %304 = vmatprep.subr.mxu0 0.0
  %305 = vmatpush1.msra.mxu0 0.0
  %306 = vmatprep.subr.mxu0 0.0
  %307 = vmatpush1.msra.mxu0 0.0
  %308 = vmatprep.subr.mxu0 0.0
  %309 = vmatpush1.msra.mxu0 0.0
  %310 = vmatprep.subr.mxu0 0.0
  %311 = vmatpush1.msra.mxu0 0.0
  %312 = vmatprep.subr.mxu0 0.0
  %313 = vmatpush1.msra.mxu0 %v287
  %314 = vmatprep.subr.mxu0 0.0
  %315 = vmatpush1.msra.mxu0 %v286
  %316 = vmatprep.subr.mxu0 0.0
  %317 = vmatpush1.msra.mxu0 %v285
  %318 = vmatprep.subr.mxu0 0.0
  %319 = vmatpush1.msra.mxu0 %v284
  %320 = vmatprep.subr.mxu0 0.0
  %321 = vmatpush2.msra.mxu0 0.0
  %322 = vmatprep.subr.mxu0 0.0
  %323 = vmatpush2.msra.mxu0 0.0
  %324 = vmatprep.subr.mxu0 0.0
  %325 = vmatpush2.msra.mxu0 0.0
  %326 = vmatprep.subr.mxu0 0.0
  %327 = vmatpush2.msra.mxu0 0.0
  %328 = vmatprep.subr.mxu0 0.0
  %329 = vmatpush2.msra.mxu0 0.0
  %330 = vmatprep.subr.mxu0 0.0
  %331 = vmatpush2.msra.mxu0 0.0
  %332 = vmatprep.subr.mxu0 0.0
  %333 = vmatpush2.msra.mxu0 0.0
  %334 = vmatprep.subr.mxu0 0.0
  %335 = vmatpush2.msra.mxu0 0.0
  %336 = vmatprep.subr.mxu0 0.0
  %337 = vmatpush2.msra.mxu0 0.0
  %338 = vmatprep.subr.mxu0 0.0
  %339 = vmatpush2.msra.mxu0 0.0
  %340 = vmatprep.subr.mxu0 0.0
  %341 = vmatpush2.msra.mxu0 0.0
  %342 = vmatprep.subr.mxu0 0.0
  %343 = vmatpush2.msra.mxu0 0.0
  %344 = vmatprep.subr.mxu0 0.0
  %345 = vmatpush2.msra.mxu0 0.0
  %346 = vmatprep.subr.mxu0 0.0
  %347 = vmatpush2.msra.mxu0 0.0
  %348 = vmatprep.subr.mxu0 0.0
  %349 = vmatpush2.msra.mxu0 0.0
  %350 = vmatprep.subr.mxu0 0.0
  %351 = vmatpush2.msra.mxu0 0.0
  %352 = vmatprep.mubr.f32.mxu0 0.0
  %353 = vmatmul.mubr.f32.gmra.mxu0 %v188
  %v354 = vpop.f32.mrf.mxu0
  %v355 = vadd.f32 0.0, %v354
  %v356 = vpop.f32.mrf.mxu0
  %357 = vmatprep.mubr.f32.mxu0 0.0
  %358 = vmatmul.mubr.f32.gmra.mxu0 %v191
  %v359 = vpop.f32.mrf.mxu0
  %v360 = vadd.f32 0.0, %v359
  %v361 = vpop.f32.mrf.mxu0
  %362 = vmatprep.mubr.f32.mxu0 0.0
  %363 = vmatmul.mubr.f32.gmra.mxu0 %v194
  %v364 = vpop.f32.mrf.mxu0
  %v365 = vadd.f32 0.0, %v364
  %v366 = vpop.f32.mrf.mxu0
  %367 = vmatprep.mubr.f32.mxu0 0.0
  %368 = vmatmul.mubr.f32.gmra.mxu0 %v197
  %v369 = vpop.f32.mrf.mxu0
  %v370 = vadd.f32 0.0, %v369
  %v371 = vpop.f32.mrf.mxu0
  %372 = vdwg.mxu0
  %v373 = vld [vmem:[%s3 + $0x80] sm:$0xff]
  %v374 = vld [vmem:[%s3 + $0x88] sm:$0xff]
  %v375 = vld [vmem:[%s3 + $0x90] sm:$0xff]
  %v376 = vld [vmem:[%s3 + $0x98] sm:$0xff]
  %377 = vmatprep.subr.mxu0 0.0
  %378 = vmatpush1.msra.mxu0 0.0
  %379 = vmatprep.subr.mxu0 0.0
  %380 = vmatpush1.msra.mxu0 0.0
  %381 = vmatprep.subr.mxu0 0.0
  %382 = vmatpush1.msra.mxu0 0.0
  %383 = vmatprep.subr.mxu0 0.0
  %384 = vmatpush1.msra.mxu0 0.0
  %385 = vmatprep.subr.mxu0 0.0
  %386 = vmatpush1.msra.mxu0 0.0
  %387 = vmatprep.subr.mxu0 0.0
  %388 = vmatpush1.msra.mxu0 0.0
  %389 = vmatprep.subr.mxu0 0.0
  %390 = vmatpush1.msra.mxu0 0.0
  %391 = vmatprep.subr.mxu0 0.0
  %392 = vmatpush1.msra.mxu0 0.0
  %393 = vmatprep.subr.mxu0 0.0
  %394 = vmatpush1.msra.mxu0 0.0
  %395 = vmatprep.subr.mxu0 0.0
  %396 = vmatpush1.msra.mxu0 0.0
  %397 = vmatprep.subr.mxu0 0.0
  %398 = vmatpush1.msra.mxu0 0.0
  %399 = vmatprep.subr.mxu0 0.0
  %400 = vmatpush1.msra.mxu0 0.0
  %401 = vmatprep.subr.mxu0 0.0
  %402 = vmatpush1.msra.mxu0 %v376
  %403 = vmatprep.subr.mxu0 0.0
  %404 = vmatpush1.msra.mxu0 %v375
  %405 = vmatprep.subr.mxu0 0.0
  %406 = vmatpush1.msra.mxu0 %v374
  %407 = vmatprep.subr.mxu0 0.0
  %408 = vmatpush1.msra.mxu0 %v373
  %409 = vmatprep.subr.mxu0 0.0
  %410 = vmatpush2.msra.mxu0 0.0
  %411 = vmatprep.subr.mxu0 0.0
  %412 = vmatpush2.msra.mxu0 0.0
  %413 = vmatprep.subr.mxu0 0.0
  %414 = vmatpush2.msra.mxu0 0.0
  %415 = vmatprep.subr.mxu0 0.0
  %416 = vmatpush2.msra.mxu0 0.0
  %417 = vmatprep.subr.mxu0 0.0
  %418 = vmatpush2.msra.mxu0 0.0
  %419 = vmatprep.subr.mxu0 0.0
  %420 = vmatpush2.msra.mxu0 0.0
  %421 = vmatprep.subr.mxu0 0.0
  %422 = vmatpush2.msra.mxu0 0.0
  %423 = vmatprep.subr.mxu0 0.0
  %424 = vmatpush2.msra.mxu0 0.0
  %425 = vmatprep.subr.mxu0 0.0
  %426 = vmatpush2.msra.mxu0 0.0
  %427 = vmatprep.subr.mxu0 0.0
  %428 = vmatpush2.msra.mxu0 0.0
  %429 = vmatprep.subr.mxu0 0.0
  %430 = vmatpush2.msra.mxu0 0.0
  %431 = vmatprep.subr.mxu0 0.0
  %432 = vmatpush2.msra.mxu0 0.0
  %433 = vmatprep.subr.mxu0 0.0
  %434 = vmatpush2.msra.mxu0 0.0
  %435 = vmatprep.subr.mxu0 0.0
  %436 = vmatpush2.msra.mxu0 0.0
  %437 = vmatprep.subr.mxu0 0.0
  %438 = vmatpush2.msra.mxu0 0.0
  %439 = vmatprep.subr.mxu0 0.0
  %440 = vmatpush2.msra.mxu0 0.0
  %441 = vmatprep.mubr.f32.mxu0 0.0
  %442 = vmatmul.mubr.f32.gmra.mxu0 %v188
  %v443 = vpop.f32.mrf.mxu0
  %v444 = vadd.f32 0.0, %v443
  %v445 = vpop.f32.mrf.mxu0
  %446 = vmatprep.mubr.f32.mxu0 0.0
  %447 = vmatmul.mubr.f32.gmra.mxu0 %v191
  %v448 = vpop.f32.mrf.mxu0
  %v449 = vadd.f32 0.0, %v448
  %v450 = vpop.f32.mrf.mxu0
  %451 = vmatprep.mubr.f32.mxu0 0.0
  %452 = vmatmul.mubr.f32.gmra.mxu0 %v194
  %v453 = vpop.f32.mrf.mxu0
  %v454 = vadd.f32 0.0, %v453
  %v455 = vpop.f32.mrf.mxu0
  %456 = vmatprep.mubr.f32.mxu0 0.0
  %457 = vmatmul.mubr.f32.gmra.mxu0 %v197
  %v458 = vpop.f32.mrf.mxu0
  %v459 = vadd.f32 0.0, %v458
  %v460 = vpop.f32.mrf.mxu0
  %461 = vdwg.mxu0
  %v463 = vsel %vm41, %v266, 0
  %v466 = vsel %vm41, %v271, 0
  %v469 = vsel %vm41, %v276, 0
  %v472 = vsel %vm41, %v281, 0
  %v475 = vsel %vm41, %v355, 0
  %v478 = vsel %vm41, %v360, 0
  %v481 = vsel %vm41, %v365, 0
  %v484 = vsel %vm41, %v370, 0
  %486 = vmatprep.subr.mxu0 0.0
  %487 = vmatpush1.xpose.msra.mxu0 0.0
  %488 = vmatprep.subr.mxu0 0.0
  %489 = vmatpush1.xpose.msra.mxu0 0.0
  %490 = vmatprep.subr.mxu0 0.0
  %491 = vmatpush1.xpose.msra.mxu0 0.0
  %492 = vmatprep.subr.mxu0 0.0
  %493 = vmatpush1.xpose.msra.mxu0 0.0
  %494 = vmatprep.subr.mxu0 0.0
  %495 = vmatpush1.xpose.msra.mxu0 0.0
  %496 = vmatprep.subr.mxu0 0.0
  %497 = vmatpush1.xpose.msra.mxu0 0.0
  %498 = vmatprep.subr.mxu0 0.0
  %499 = vmatpush1.xpose.msra.mxu0 0.0
  %500 = vmatprep.subr.mxu0 0.0
  %501 = vmatpush1.xpose.msra.mxu0 0.0
  %502 = vmatprep.subr.mxu0 0.0
  %503 = vmatpush1.xpose.msra.mxu0 0.0
  %504 = vmatprep.subr.mxu0 0.0
  %505 = vmatpush1.xpose.msra.mxu0 0.0
  %506 = vmatprep.subr.mxu0 0.0
  %507 = vmatpush1.xpose.msra.mxu0 0.0
  %508 = vmatprep.subr.mxu0 0.0
  %509 = vmatpush1.xpose.msra.mxu0 0.0
  %510 = vmatprep.subr.mxu0 0.0
  %511 = vmatpush1.xpose.msra.mxu0 %v484
  %512 = vmatprep.subr.mxu0 0.0
  %513 = vmatpush1.xpose.msra.mxu0 %v481
  %514 = vmatprep.subr.mxu0 0.0
  %515 = vmatpush1.xpose.msra.mxu0 %v478
  %516 = vmatprep.subr.mxu0 0.0
  %517 = vmatpush1.xpose.msra.mxu0 %v475
  %518 = vmatprep.subr.mxu0 0.0
  %519 = vmatpush2.xpose.msra.mxu0 0.0
  %520 = vmatprep.subr.mxu0 0.0
  %521 = vmatpush2.xpose.msra.mxu0 0.0
  %522 = vmatprep.subr.mxu0 0.0
  %523 = vmatpush2.xpose.msra.mxu0 0.0
  %524 = vmatprep.subr.mxu0 0.0
  %525 = vmatpush2.xpose.msra.mxu0 0.0
  %526 = vmatprep.subr.mxu0 0.0
  %527 = vmatpush2.xpose.msra.mxu0 0.0
  %528 = vmatprep.subr.mxu0 0.0
  %529 = vmatpush2.xpose.msra.mxu0 0.0
  %530 = vmatprep.subr.mxu0 0.0
  %531 = vmatpush2.xpose.msra.mxu0 0.0
  %532 = vmatprep.subr.mxu0 0.0
  %533 = vmatpush2.xpose.msra.mxu0 0.0
  %534 = vmatprep.subr.mxu0 0.0
  %535 = vmatpush2.xpose.msra.mxu0 0.0
  %536 = vmatprep.subr.mxu0 0.0
  %537 = vmatpush2.xpose.msra.mxu0 0.0
  %538 = vmatprep.subr.mxu0 0.0
  %539 = vmatpush2.xpose.msra.mxu0 0.0
  %540 = vmatprep.subr.mxu0 0.0
  %541 = vmatpush2.xpose.msra.mxu0 0.0
  %542 = vmatprep.subr.mxu0 0.0
  %543 = vmatpush2.xpose.msra.mxu0 0.0
  %544 = vmatprep.subr.mxu0 0.0
  %545 = vmatpush2.xpose.msra.mxu0 0.0
  %546 = vmatprep.subr.mxu0 0.0
  %547 = vmatpush2.xpose.msra.mxu0 0.0
  %548 = vmatprep.subr.mxu0 0.0
  %549 = vmatpush2.xpose.msra.mxu0 0.0
  %550 = vmatprep.mubr.f32.mxu0 0.0
  %551 = vmatmul.mubr.f32.gmra.mxu0 %v463
  %v552 = vpop.f32.mrf.mxu0
  %v553 = vadd.f32 %v35, %v552
  %v554 = vpop.f32.mrf.mxu0
  %555 = vmatprep.mubr.f32.mxu0 0.0
  %556 = vmatmul.mubr.f32.gmra.mxu0 %v466
  %v557 = vpop.f32.mrf.mxu0
  %v558 = vadd.f32 %v36, %v557
  %v559 = vpop.f32.mrf.mxu0
  %560 = vmatprep.mubr.f32.mxu0 0.0
  %561 = vmatmul.mubr.f32.gmra.mxu0 %v469
  %v562 = vpop.f32.mrf.mxu0
  %v563 = vadd.f32 %v37, %v562
  %v564 = vpop.f32.mrf.mxu0
  %565 = vmatprep.mubr.f32.mxu0 0.0
  %566 = vmatmul.mubr.f32.gmra.mxu0 %v472
  %v567 = vpop.f32.mrf.mxu0
  %v568 = vadd.f32 %v38, %v567
  %v569 = vpop.f32.mrf.mxu0
  %570 = vdwg.mxu0
  %v571 = vmul.f32 %v553, 0.17677669
  %v572 = vmul.f32 %v558, 0.17677669
  %v573 = vmul.f32 %v563, 0.17677669
  %v574 = vmul.f32 %v568, 0.17677669
  %v575 = vsel %vm41, %v571, -inf
  %576 = vmax.xlane.f32.xlu0 %v575
  %v577 = vpop.xlane.xlu0 %576
  %v578 = vsel %vm41, %v572, -inf
  %579 = vmax.xlane.f32.xlu0 %v578
  %v580 = vpop.xlane.xlu0 %579
  %v581 = vsel %vm41, %v573, -inf
  %582 = vmax.xlane.f32.xlu0 %v581
  %v583 = vpop.xlane.xlu0 %582
  %v584 = vsel %vm41, %v574, -inf
  %585 = vmax.xlane.f32.xlu0 %v584
  %v586 = vpop.xlane.xlu0 %585
  %v587 = vsub.f32 %v571, %v577
  %v588 = vsub.f32 %v572, %v580
  %v589 = vsub.f32 %v573, %v583
  %v590 = vsub.f32 %v574, %v586
  %v591 = vmul.f32 %v587, 1.442695
  %v592 = vpow.pop %v591
  %v593 = vmul.f32 %v588, 1.442695
  %v594 = vpow.pop %v593
  %v595 = vmul.f32 %v589, 1.442695
  %v596 = vpow.pop %v595
  %v597 = vmul.f32 %v590, 1.442695
  %v598 = vpow.pop %v597
  %v599 = vsel %vm41, %v592, 0.0
  %600 = vadd.xlane.f32.xlu0 %v599
  %v601 = vpop.xlane.xlu0 %600
  %v602 = vsel %vm41, %v594, 0.0
  %603 = vadd.xlane.f32.xlu0 %v602
  %v604 = vpop.xlane.xlu0 %603
  %v605 = vsel %vm41, %v596, 0.0
  %606 = vadd.xlane.f32.xlu0 %v605
  %v607 = vpop.xlane.xlu0 %606
  %v608 = vsel %vm41, %v598, 0.0
  %609 = vadd.xlane.f32.xlu0 %v608
  %v610 = vpop.xlane.xlu0 %609
  %v611 = vrcp.pop %v601
  %v612 = vrcp.pop %v604
  %v613 = vrcp.pop %v607
  %v614 = vrcp.pop %v610
  %v615 = vmul.f32 %v592, %v611
  %v616 = vmul.f32 %v594, %v612
  %v617 = vmul.f32 %v596, %v613
  %v618 = vmul.f32 %v598, %v614
  %623 = vrot.lane.b32.xlu0 %v615, 32
  %v624 = vpop.permute.xlu0 %623
  %625 = vrot.lane.b32.xlu0 %v616, 32
  %v626 = vpop.permute.xlu0 %625
  %627 = vrot.lane.b32.xlu0 %v617, 32
  %v628 = vpop.permute.xlu0 %627
  %629 = vrot.lane.b32.xlu0 %v618, 32
  %v630 = vpop.permute.xlu0 %629
  %vm635 = vcmask 523520
  %636 = vst.msk [vmem:[%s6] sm:$0xff] %vm635, %v624
  %637 = vst.msk [vmem:[%s6 + $0x8] sm:$0xff] %vm635, %v626
  %638 = vst.msk [vmem:[%s6 + $0x10] sm:$0xff] %vm635, %v628
  %639 = vst.msk [vmem:[%s6 + $0x18] sm:$0xff] %vm635, %v630
  %v640 = vld [vmem:[%s3 + $0x20] sm:$0xff]
  %v641 = vld [vmem:[%s3 + $0x28] sm:$0xff]
  %v642 = vld [vmem:[%s3 + $0x30] sm:$0xff]
  %v643 = vld [vmem:[%s3 + $0x38] sm:$0xff]
  %644 = vmatprep.subr.mxu0 0.0
  %645 = vmatpush1.msra.mxu0 0.0
  %646 = vmatprep.subr.mxu0 0.0
  %647 = vmatpush1.msra.mxu0 0.0
  %648 = vmatprep.subr.mxu0 0.0
  %649 = vmatpush1.msra.mxu0 0.0
  %650 = vmatprep.subr.mxu0 0.0
  %651 = vmatpush1.msra.mxu0 0.0
  %652 = vmatprep.subr.mxu0 0.0
  %653 = vmatpush1.msra.mxu0 0.0
  %654 = vmatprep.subr.mxu0 0.0
  %655 = vmatpush1.msra.mxu0 0.0
  %656 = vmatprep.subr.mxu0 0.0
  %657 = vmatpush1.msra.mxu0 0.0
  %658 = vmatprep.subr.mxu0 0.0
  %659 = vmatpush1.msra.mxu0 0.0
  %660 = vmatprep.subr.mxu0 0.0
  %661 = vmatpush1.msra.mxu0 0.0
  %662 = vmatprep.subr.mxu0 0.0
  %663 = vmatpush1.msra.mxu0 0.0
  %664 = vmatprep.subr.mxu0 0.0
  %665 = vmatpush1.msra.mxu0 0.0
  %666 = vmatprep.subr.mxu0 0.0
  %667 = vmatpush1.msra.mxu0 0.0
  %668 = vmatprep.subr.mxu0 0.0
  %669 = vmatpush1.msra.mxu0 %v643
  %670 = vmatprep.subr.mxu0 0.0
  %671 = vmatpush1.msra.mxu0 %v642
  %672 = vmatprep.subr.mxu0 0.0
  %673 = vmatpush1.msra.mxu0 %v641
  %674 = vmatprep.subr.mxu0 0.0
  %675 = vmatpush1.msra.mxu0 %v640
  %676 = vmatprep.subr.mxu0 0.0
  %677 = vmatpush2.msra.mxu0 0.0
  %678 = vmatprep.subr.mxu0 0.0
  %679 = vmatpush2.msra.mxu0 0.0
  %680 = vmatprep.subr.mxu0 0.0
  %681 = vmatpush2.msra.mxu0 0.0
  %682 = vmatprep.subr.mxu0 0.0
  %683 = vmatpush2.msra.mxu0 0.0
  %684 = vmatprep.subr.mxu0 0.0
  %685 = vmatpush2.msra.mxu0 0.0
  %686 = vmatprep.subr.mxu0 0.0
  %687 = vmatpush2.msra.mxu0 0.0
  %688 = vmatprep.subr.mxu0 0.0
  %689 = vmatpush2.msra.mxu0 0.0
  %690 = vmatprep.subr.mxu0 0.0
  %691 = vmatpush2.msra.mxu0 0.0
  %692 = vmatprep.subr.mxu0 0.0
  %693 = vmatpush2.msra.mxu0 0.0
  %694 = vmatprep.subr.mxu0 0.0
  %695 = vmatpush2.msra.mxu0 0.0
  %696 = vmatprep.subr.mxu0 0.0
  %697 = vmatpush2.msra.mxu0 0.0
  %698 = vmatprep.subr.mxu0 0.0
  %699 = vmatpush2.msra.mxu0 0.0
  %700 = vmatprep.subr.mxu0 0.0
  %701 = vmatpush2.msra.mxu0 0.0
  %702 = vmatprep.subr.mxu0 0.0
  %703 = vmatpush2.msra.mxu0 0.0
  %704 = vmatprep.subr.mxu0 0.0
  %705 = vmatpush2.msra.mxu0 0.0
  %706 = vmatprep.subr.mxu0 0.0
  %707 = vmatpush2.msra.mxu0 0.0
  %708 = vmatprep.mubr.f32.mxu0 0.0
  %709 = vmatmul.mubr.f32.gmra.mxu0 %v188
  %v710 = vpop.f32.mrf.mxu0
  %v711 = vadd.f32 0.0, %v710
  %v712 = vpop.f32.mrf.mxu0
  %713 = vmatprep.mubr.f32.mxu0 0.0
  %714 = vmatmul.mubr.f32.gmra.mxu0 %v191
  %v715 = vpop.f32.mrf.mxu0
  %v716 = vadd.f32 0.0, %v715
  %v717 = vpop.f32.mrf.mxu0
  %718 = vmatprep.mubr.f32.mxu0 0.0
  %719 = vmatmul.mubr.f32.gmra.mxu0 %v194
  %v720 = vpop.f32.mrf.mxu0
  %v721 = vadd.f32 0.0, %v720
  %v722 = vpop.f32.mrf.mxu0
  %723 = vmatprep.mubr.f32.mxu0 0.0
  %724 = vmatmul.mubr.f32.gmra.mxu0 %v197
  %v725 = vpop.f32.mrf.mxu0
  %v726 = vadd.f32 0.0, %v725
  %v727 = vpop.f32.mrf.mxu0
  %728 = vdwg.mxu0
  %v729 = vld [vmem:[%s3 + $0x60] sm:$0xff]
  %v730 = vld [vmem:[%s3 + $0x68] sm:$0xff]
  %v731 = vld [vmem:[%s3 + $0x70] sm:$0xff]
  %v732 = vld [vmem:[%s3 + $0x78] sm:$0xff]
  %733 = vmatprep.subr.mxu0 0.0
  %734 = vmatpush1.msra.mxu0 0.0
  %735 = vmatprep.subr.mxu0 0.0
  %736 = vmatpush1.msra.mxu0 0.0
  %737 = vmatprep.subr.mxu0 0.0
  %738 = vmatpush1.msra.mxu0 0.0
  %739 = vmatprep.subr.mxu0 0.0
  %740 = vmatpush1.msra.mxu0 0.0
  %741 = vmatprep.subr.mxu0 0.0
  %742 = vmatpush1.msra.mxu0 0.0
  %743 = vmatprep.subr.mxu0 0.0
  %744 = vmatpush1.msra.mxu0 0.0
  %745 = vmatprep.subr.mxu0 0.0
  %746 = vmatpush1.msra.mxu0 0.0
  %747 = vmatprep.subr.mxu0 0.0
  %748 = vmatpush1.msra.mxu0 0.0
  %749 = vmatprep.subr.mxu0 0.0
  %750 = vmatpush1.msra.mxu0 0.0
  %751 = vmatprep.subr.mxu0 0.0
  %752 = vmatpush1.msra.mxu0 0.0
  %753 = vmatprep.subr.mxu0 0.0
  %754 = vmatpush1.msra.mxu0 0.0
  %755 = vmatprep.subr.mxu0 0.0
  %756 = vmatpush1.msra.mxu0 0.0
  %757 = vmatprep.subr.mxu0 0.0
  %758 = vmatpush1.msra.mxu0 %v732
  %759 = vmatprep.subr.mxu0 0.0
  %760 = vmatpush1.msra.mxu0 %v731
  %761 = vmatprep.subr.mxu0 0.0
  %762 = vmatpush1.msra.mxu0 %v730
  %763 = vmatprep.subr.mxu0 0.0
  %764 = vmatpush1.msra.mxu0 %v729
  %765 = vmatprep.subr.mxu0 0.0
  %766 = vmatpush2.msra.mxu0 0.0
  %767 = vmatprep.subr.mxu0 0.0
  %768 = vmatpush2.msra.mxu0 0.0
  %769 = vmatprep.subr.mxu0 0.0
  %770 = vmatpush2.msra.mxu0 0.0
  %771 = vmatprep.subr.mxu0 0.0
  %772 = vmatpush2.msra.mxu0 0.0
  %773 = vmatprep.subr.mxu0 0.0
  %774 = vmatpush2.msra.mxu0 0.0
  %775 = vmatprep.subr.mxu0 0.0
  %776 = vmatpush2.msra.mxu0 0.0
  %777 = vmatprep.subr.mxu0 0.0
  %778 = vmatpush2.msra.mxu0 0.0
  %779 = vmatprep.subr.mxu0 0.0
  %780 = vmatpush2.msra.mxu0 0.0
  %781 = vmatprep.subr.mxu0 0.0
  %782 = vmatpush2.msra.mxu0 0.0
  %783 = vmatprep.subr.mxu0 0.0
  %784 = vmatpush2.msra.mxu0 0.0
  %785 = vmatprep.subr.mxu0 0.0
  %786 = vmatpush2.msra.mxu0 0.0
  %787 = vmatprep.subr.mxu0 0.0
  %788 = vmatpush2.msra.mxu0 0.0
  %789 = vmatprep.subr.mxu0 0.0
  %790 = vmatpush2.msra.mxu0 0.0
  %791 = vmatprep.subr.mxu0 0.0
  %792 = vmatpush2.msra.mxu0 0.0
  %793 = vmatprep.subr.mxu0 0.0
  %794 = vmatpush2.msra.mxu0 0.0
  %795 = vmatprep.subr.mxu0 0.0
  %796 = vmatpush2.msra.mxu0 0.0
  %797 = vmatprep.mubr.f32.mxu0 0.0
  %798 = vmatmul.mubr.f32.gmra.mxu0 %v188
  %v799 = vpop.f32.mrf.mxu0
  %v800 = vadd.f32 0.0, %v799
  %v801 = vpop.f32.mrf.mxu0
  %802 = vmatprep.mubr.f32.mxu0 0.0
  %803 = vmatmul.mubr.f32.gmra.mxu0 %v191
  %v804 = vpop.f32.mrf.mxu0
  %v805 = vadd.f32 0.0, %v804
  %v806 = vpop.f32.mrf.mxu0
  %807 = vmatprep.mubr.f32.mxu0 0.0
  %808 = vmatmul.mubr.f32.gmra.mxu0 %v194
  %v809 = vpop.f32.mrf.mxu0
  %v810 = vadd.f32 0.0, %v809
  %v811 = vpop.f32.mrf.mxu0
  %812 = vmatprep.mubr.f32.mxu0 0.0
  %813 = vmatmul.mubr.f32.gmra.mxu0 %v197
  %v814 = vpop.f32.mrf.mxu0
  %v815 = vadd.f32 0.0, %v814
  %v816 = vpop.f32.mrf.mxu0
  %817 = vdwg.mxu0
  %v818 = vld [vmem:[%s3 + $0xa0] sm:$0xff]
  %v819 = vld [vmem:[%s3 + $0xa8] sm:$0xff]
  %v820 = vld [vmem:[%s3 + $0xb0] sm:$0xff]
  %v821 = vld [vmem:[%s3 + $0xb8] sm:$0xff]
  %822 = vmatprep.subr.mxu0 0.0
  %823 = vmatpush1.msra.mxu0 0.0
  %824 = vmatprep.subr.mxu0 0.0
  %825 = vmatpush1.msra.mxu0 0.0
  %826 = vmatprep.subr.mxu0 0.0
  %827 = vmatpush1.msra.mxu0 0.0
  %828 = vmatprep.subr.mxu0 0.0
  %829 = vmatpush1.msra.mxu0 0.0
  %830 = vmatprep.subr.mxu0 0.0
  %831 = vmatpush1.msra.mxu0 0.0
  %832 = vmatprep.subr.mxu0 0.0
  %833 = vmatpush1.msra.mxu0 0.0
  %834 = vmatprep.subr.mxu0 0.0
  %835 = vmatpush1.msra.mxu0 0.0
  %836 = vmatprep.subr.mxu0 0.0
  %837 = vmatpush1.msra.mxu0 0.0
  %838 = vmatprep.subr.mxu0 0.0
  %839 = vmatpush1.msra.mxu0 0.0
  %840 = vmatprep.subr.mxu0 0.0
  %841 = vmatpush1.msra.mxu0 0.0
  %842 = vmatprep.subr.mxu0 0.0
  %843 = vmatpush1.msra.mxu0 0.0
  %844 = vmatprep.subr.mxu0 0.0
  %845 = vmatpush1.msra.mxu0 0.0
  %846 = vmatprep.subr.mxu0 0.0
  %847 = vmatpush1.msra.mxu0 %v821
  %848 = vmatprep.subr.mxu0 0.0
  %849 = vmatpush1.msra.mxu0 %v820
  %850 = vmatprep.subr.mxu0 0.0
  %851 = vmatpush1.msra.mxu0 %v819
  %852 = vmatprep.subr.mxu0 0.0
  %853 = vmatpush1.msra.mxu0 %v818
  %854 = vmatprep.subr.mxu0 0.0
  %855 = vmatpush2.msra.mxu0 0.0
  %856 = vmatprep.subr.mxu0 0.0
  %857 = vmatpush2.msra.mxu0 0.0
  %858 = vmatprep.subr.mxu0 0.0
  %859 = vmatpush2.msra.mxu0 0.0
  %860 = vmatprep.subr.mxu0 0.0
  %861 = vmatpush2.msra.mxu0 0.0
  %862 = vmatprep.subr.mxu0 0.0
  %863 = vmatpush2.msra.mxu0 0.0
  %864 = vmatprep.subr.mxu0 0.0
  %865 = vmatpush2.msra.mxu0 0.0
  %866 = vmatprep.subr.mxu0 0.0
  %867 = vmatpush2.msra.mxu0 0.0
  %868 = vmatprep.subr.mxu0 0.0
  %869 = vmatpush2.msra.mxu0 0.0
  %870 = vmatprep.subr.mxu0 0.0
  %871 = vmatpush2.msra.mxu0 0.0
  %872 = vmatprep.subr.mxu0 0.0
  %873 = vmatpush2.msra.mxu0 0.0
  %874 = vmatprep.subr.mxu0 0.0
  %875 = vmatpush2.msra.mxu0 0.0
  %876 = vmatprep.subr.mxu0 0.0
  %877 = vmatpush2.msra.mxu0 0.0
  %878 = vmatprep.subr.mxu0 0.0
  %879 = vmatpush2.msra.mxu0 0.0
  %880 = vmatprep.subr.mxu0 0.0
  %881 = vmatpush2.msra.mxu0 0.0
  %882 = vmatprep.subr.mxu0 0.0
  %883 = vmatpush2.msra.mxu0 0.0
  %884 = vmatprep.subr.mxu0 0.0
  %885 = vmatpush2.msra.mxu0 0.0
  %886 = vmatprep.mubr.f32.mxu0 0.0
  %887 = vmatmul.mubr.f32.gmra.mxu0 %v188
  %v888 = vpop.f32.mrf.mxu0
  %v889 = vadd.f32 0.0, %v888
  %v890 = vpop.f32.mrf.mxu0
  %891 = vmatprep.mubr.f32.mxu0 0.0
  %892 = vmatmul.mubr.f32.gmra.mxu0 %v191
  %v893 = vpop.f32.mrf.mxu0
  %v894 = vadd.f32 0.0, %v893
  %v895 = vpop.f32.mrf.mxu0
  %896 = vmatprep.mubr.f32.mxu0 0.0
  %897 = vmatmul.mubr.f32.gmra.mxu0 %v194
  %v898 = vpop.f32.mrf.mxu0
  %v899 = vadd.f32 0.0, %v898
  %v900 = vpop.f32.mrf.mxu0
  %901 = vmatprep.mubr.f32.mxu0 0.0
  %902 = vmatmul.mubr.f32.gmra.mxu0 %v197
  %v903 = vpop.f32.mrf.mxu0
  %v904 = vadd.f32 0.0, %v903
  %v905 = vpop.f32.mrf.mxu0
  %906 = vdwg.mxu0
  %v908 = vsel %vm41, %v711, 0
  %v911 = vsel %vm41, %v716, 0
  %v914 = vsel %vm41, %v721, 0
  %v917 = vsel %vm41, %v726, 0
  %v920 = vsel %vm41, %v800, 0
  %v923 = vsel %vm41, %v805, 0
  %v926 = vsel %vm41, %v810, 0
  %v929 = vsel %vm41, %v815, 0
  %931 = vmatprep.subr.mxu0 0.0
  %932 = vmatpush1.xpose.msra.mxu0 0.0
  %933 = vmatprep.subr.mxu0 0.0
  %934 = vmatpush1.xpose.msra.mxu0 0.0
  %935 = vmatprep.subr.mxu0 0.0
  %936 = vmatpush1.xpose.msra.mxu0 0.0
  %937 = vmatprep.subr.mxu0 0.0
  %938 = vmatpush1.xpose.msra.mxu0 0.0
  %939 = vmatprep.subr.mxu0 0.0
  %940 = vmatpush1.xpose.msra.mxu0 0.0
  %941 = vmatprep.subr.mxu0 0.0
  %942 = vmatpush1.xpose.msra.mxu0 0.0
  %943 = vmatprep.subr.mxu0 0.0
  %944 = vmatpush1.xpose.msra.mxu0 0.0
  %945 = vmatprep.subr.mxu0 0.0
  %946 = vmatpush1.xpose.msra.mxu0 0.0
  %947 = vmatprep.subr.mxu0 0.0
  %948 = vmatpush1.xpose.msra.mxu0 0.0
  %949 = vmatprep.subr.mxu0 0.0
  %950 = vmatpush1.xpose.msra.mxu0 0.0
  %951 = vmatprep.subr.mxu0 0.0
  %952 = vmatpush1.xpose.msra.mxu0 0.0
  %953 = vmatprep.subr.mxu0 0.0
  %954 = vmatpush1.xpose.msra.mxu0 0.0
  %955 = vmatprep.subr.mxu0 0.0
  %956 = vmatpush1.xpose.msra.mxu0 %v929
  %957 = vmatprep.subr.mxu0 0.0
  %958 = vmatpush1.xpose.msra.mxu0 %v926
  %959 = vmatprep.subr.mxu0 0.0
  %960 = vmatpush1.xpose.msra.mxu0 %v923
  %961 = vmatprep.subr.mxu0 0.0
  %962 = vmatpush1.xpose.msra.mxu0 %v920
  %963 = vmatprep.subr.mxu0 0.0
  %964 = vmatpush2.xpose.msra.mxu0 0.0
  %965 = vmatprep.subr.mxu0 0.0
  %966 = vmatpush2.xpose.msra.mxu0 0.0
  %967 = vmatprep.subr.mxu0 0.0
  %968 = vmatpush2.xpose.msra.mxu0 0.0
  %969 = vmatprep.subr.mxu0 0.0
  %970 = vmatpush2.xpose.msra.mxu0 0.0
  %971 = vmatprep.subr.mxu0 0.0
  %972 = vmatpush2.xpose.msra.mxu0 0.0
  %973 = vmatprep.subr.mxu0 0.0
  %974 = vmatpush2.xpose.msra.mxu0 0.0
  %975 = vmatprep.subr.mxu0 0.0
  %976 = vmatpush2.xpose.msra.mxu0 0.0
  %977 = vmatprep.subr.mxu0 0.0
  %978 = vmatpush2.xpose.msra.mxu0 0.0
  %979 = vmatprep.subr.mxu0 0.0
  %980 = vmatpush2.xpose.msra.mxu0 0.0
  %981 = vmatprep.subr.mxu0 0.0
  %982 = vmatpush2.xpose.msra.mxu0 0.0
  %983 = vmatprep.subr.mxu0 0.0
  %984 = vmatpush2.xpose.msra.mxu0 0.0
  %985 = vmatprep.subr.mxu0 0.0
  %986 = vmatpush2.xpose.msra.mxu0 0.0
  %987 = vmatprep.subr.mxu0 0.0
  %988 = vmatpush2.xpose.msra.mxu0 0.0
  %989 = vmatprep.subr.mxu0 0.0
  %990 = vmatpush2.xpose.msra.mxu0 0.0
  %991 = vmatprep.subr.mxu0 0.0
  %992 = vmatpush2.xpose.msra.mxu0 0.0
  %993 = vmatprep.subr.mxu0 0.0
  %994 = vmatpush2.xpose.msra.mxu0 0.0
  %995 = vmatprep.mubr.f32.mxu0 0.0
  %996 = vmatmul.mubr.f32.gmra.mxu0 %v908
  %v997 = vpop.f32.mrf.mxu0
  %v998 = vadd.f32 %v35, %v997
  %v999 = vpop.f32.mrf.mxu0
  %1000 = vmatprep.mubr.f32.mxu0 0.0
  %1001 = vmatmul.mubr.f32.gmra.mxu0 %v911
  %v1002 = vpop.f32.mrf.mxu0
  %v1003 = vadd.f32 %v36, %v1002
  %v1004 = vpop.f32.mrf.mxu0
  %1005 = vmatprep.mubr.f32.mxu0 0.0
  %1006 = vmatmul.mubr.f32.gmra.mxu0 %v914
  %v1007 = vpop.f32.mrf.mxu0
  %v1008 = vadd.f32 %v37, %v1007
  %v1009 = vpop.f32.mrf.mxu0
  %1010 = vmatprep.mubr.f32.mxu0 0.0
  %1011 = vmatmul.mubr.f32.gmra.mxu0 %v917
  %v1012 = vpop.f32.mrf.mxu0
  %v1013 = vadd.f32 %v38, %v1012
  %v1014 = vpop.f32.mrf.mxu0
  %1015 = vdwg.mxu0
  %v1016 = vmul.f32 %v998, 0.17677669
  %v1017 = vmul.f32 %v1003, 0.17677669
  %v1018 = vmul.f32 %v1008, 0.17677669
  %v1019 = vmul.f32 %v1013, 0.17677669
  %v1020 = vsel %vm41, %v1016, -inf
  %1021 = vmax.xlane.f32.xlu0 %v1020
  %v1022 = vpop.xlane.xlu0 %1021
  %v1023 = vsel %vm41, %v1017, -inf
  %1024 = vmax.xlane.f32.xlu0 %v1023
  %v1025 = vpop.xlane.xlu0 %1024
  %v1026 = vsel %vm41, %v1018, -inf
  %1027 = vmax.xlane.f32.xlu0 %v1026
  %v1028 = vpop.xlane.xlu0 %1027
  %v1029 = vsel %vm41, %v1019, -inf
  %1030 = vmax.xlane.f32.xlu0 %v1029
  %v1031 = vpop.xlane.xlu0 %1030
  %v1032 = vsub.f32 %v1016, %v1022
  %v1033 = vsub.f32 %v1017, %v1025
  %v1034 = vsub.f32 %v1018, %v1028
  %v1035 = vsub.f32 %v1019, %v1031
  %v1036 = vmul.f32 %v1032, 1.442695
  %v1037 = vpow.pop %v1036
  %v1038 = vmul.f32 %v1033, 1.442695
  %v1039 = vpow.pop %v1038
  %v1040 = vmul.f32 %v1034, 1.442695
  %v1041 = vpow.pop %v1040
  %v1042 = vmul.f32 %v1035, 1.442695
  %v1043 = vpow.pop %v1042
  %v1044 = vsel %vm41, %v1037, 0.0
  %1045 = vadd.xlane.f32.xlu0 %v1044
  %v1046 = vpop.xlane.xlu0 %1045
  %v1047 = vsel %vm41, %v1039, 0.0
  %1048 = vadd.xlane.f32.xlu0 %v1047
  %v1049 = vpop.xlane.xlu0 %1048
  %v1050 = vsel %vm41, %v1041, 0.0
  %1051 = vadd.xlane.f32.xlu0 %v1050
  %v1052 = vpop.xlane.xlu0 %1051
  %v1053 = vsel %vm41, %v1043, 0.0
  %1054 = vadd.xlane.f32.xlu0 %v1053
  %v1055 = vpop.xlane.xlu0 %1054
  %v1056 = vrcp.pop %v1046
  %v1057 = vrcp.pop %v1049
  %v1058 = vrcp.pop %v1052
  %v1059 = vrcp.pop %v1055
  %v1060 = vmul.f32 %v1037, %v1056
  %v1061 = vmul.f32 %v1039, %v1057
  %v1062 = vmul.f32 %v1041, %v1058
  %v1063 = vmul.f32 %v1043, %v1059
  %1068 = vrot.lane.b32.xlu0 %v1060, 64
  %v1069 = vpop.permute.xlu0 %1068
  %1070 = vrot.lane.b32.xlu0 %v1061, 64
  %v1071 = vpop.permute.xlu0 %1070
  %1072 = vrot.lane.b32.xlu0 %v1062, 64
  %v1073 = vpop.permute.xlu0 %1072
  %1074 = vrot.lane.b32.xlu0 %v1063, 64
  %v1075 = vpop.permute.xlu0 %1074
  %vm1080 = vcmask 785920
  %1081 = vst.msk [vmem:[%s6] sm:$0xff] %vm1080, %v1069
  %1082 = vst.msk [vmem:[%s6 + $0x8] sm:$0xff] %vm1080, %v1071
  %1083 = vst.msk [vmem:[%s6 + $0x10] sm:$0xff] %vm1080, %v1073
  %1084 = vst.msk [vmem:[%s6 + $0x18] sm:$0xff] %vm1080, %v1075
  %v1085 = vsel %vm41, %v1060, 0
  %v1087 = vsel %vm41, %v1061, 0
  %v1089 = vsel %vm41, %v1062, 0
  %v1091 = vsel %vm41, %v1063, 0
  %1093 = vmatprep.subr.mxu0 0.0
  %1094 = vmatpush1.msra.mxu0 0.0
  %1095 = vmatprep.subr.mxu0 0.0
  %1096 = vmatpush1.msra.mxu0 0.0
  %1097 = vmatprep.subr.mxu0 0.0
  %1098 = vmatpush1.msra.mxu0 0.0
  %1099 = vmatprep.subr.mxu0 0.0
  %1100 = vmatpush1.msra.mxu0 0.0
  %1101 = vmatprep.subr.mxu0 0.0
  %1102 = vmatpush1.msra.mxu0 0.0
  %1103 = vmatprep.subr.mxu0 0.0
  %1104 = vmatpush1.msra.mxu0 0.0
  %1105 = vmatprep.subr.mxu0 0.0
  %1106 = vmatpush1.msra.mxu0 0.0
  %1107 = vmatprep.subr.mxu0 0.0
  %1108 = vmatpush1.msra.mxu0 0.0
  %1109 = vmatprep.subr.mxu0 0.0
  %1110 = vmatpush1.msra.mxu0 0.0
  %1111 = vmatprep.subr.mxu0 0.0
  %1112 = vmatpush1.msra.mxu0 0.0
  %1113 = vmatprep.subr.mxu0 0.0
  %1114 = vmatpush1.msra.mxu0 0.0
  %1115 = vmatprep.subr.mxu0 0.0
  %1116 = vmatpush1.msra.mxu0 0.0
  %1117 = vmatprep.subr.mxu0 0.0
  %1118 = vmatpush1.msra.mxu0 %v904
  %1119 = vmatprep.subr.mxu0 0.0
  %1120 = vmatpush1.msra.mxu0 %v899
  %1121 = vmatprep.subr.mxu0 0.0
  %1122 = vmatpush1.msra.mxu0 %v894
  %1123 = vmatprep.subr.mxu0 0.0
  %1124 = vmatpush1.msra.mxu0 %v889
  %1125 = vmatprep.subr.mxu0 0.0
  %1126 = vmatpush2.msra.mxu0 0.0
  %1127 = vmatprep.subr.mxu0 0.0
  %1128 = vmatpush2.msra.mxu0 0.0
  %1129 = vmatprep.subr.mxu0 0.0
  %1130 = vmatpush2.msra.mxu0 0.0
  %1131 = vmatprep.subr.mxu0 0.0
  %1132 = vmatpush2.msra.mxu0 0.0
  %1133 = vmatprep.subr.mxu0 0.0
  %1134 = vmatpush2.msra.mxu0 0.0
  %1135 = vmatprep.subr.mxu0 0.0
  %1136 = vmatpush2.msra.mxu0 0.0
  %1137 = vmatprep.subr.mxu0 0.0
  %1138 = vmatpush2.msra.mxu0 0.0
  %1139 = vmatprep.subr.mxu0 0.0
  %1140 = vmatpush2.msra.mxu0 0.0
  %1141 = vmatprep.subr.mxu0 0.0
  %1142 = vmatpush2.msra.mxu0 0.0
  %1143 = vmatprep.subr.mxu0 0.0
  %1144 = vmatpush2.msra.mxu0 0.0
  %1145 = vmatprep.subr.mxu0 0.0
  %1146 = vmatpush2.msra.mxu0 0.0
  %1147 = vmatprep.subr.mxu0 0.0
  %1148 = vmatpush2.msra.mxu0 0.0
  %1149 = vmatprep.subr.mxu0 0.0
  %1150 = vmatpush2.msra.mxu0 0.0
  %1151 = vmatprep.subr.mxu0 0.0
  %1152 = vmatpush2.msra.mxu0 0.0
  %1153 = vmatprep.subr.mxu0 0.0
  %1154 = vmatpush2.msra.mxu0 0.0
  %1155 = vmatprep.subr.mxu0 0.0
  %1156 = vmatpush2.msra.mxu0 0.0
  %1157 = vmatprep.mubr.f32.mxu0 0.0
  %1158 = vmatmul.mubr.f32.gmra.mxu0 %v1085
  %v1159 = vpop.f32.mrf.mxu0
  %v1160 = vadd.f32 0.0, %v1159
  %v1161 = vpop.f32.mrf.mxu0
  %1162 = vmatprep.mubr.f32.mxu0 0.0
  %1163 = vmatmul.mubr.f32.gmra.mxu0 %v1087
  %v1164 = vpop.f32.mrf.mxu0
  %v1165 = vadd.f32 0.0, %v1164
  %v1166 = vpop.f32.mrf.mxu0
  %1167 = vmatprep.mubr.f32.mxu0 0.0
  %1168 = vmatmul.mubr.f32.gmra.mxu0 %v1089
  %v1169 = vpop.f32.mrf.mxu0
  %v1170 = vadd.f32 0.0, %v1169
  %v1171 = vpop.f32.mrf.mxu0
  %1172 = vmatprep.mubr.f32.mxu0 0.0
  %1173 = vmatmul.mubr.f32.gmra.mxu0 %v1091
  %v1174 = vpop.f32.mrf.mxu0
  %v1175 = vadd.f32 0.0, %v1174
  %v1176 = vpop.f32.mrf.mxu0
  %1177 = vdwg.mxu0
  %v1178 = vsel %vm41, %v615, 0
  %v1180 = vsel %vm41, %v616, 0
  %v1182 = vsel %vm41, %v617, 0
  %v1184 = vsel %vm41, %v618, 0
  %1186 = vmatprep.subr.mxu0 0.0
  %1187 = vmatpush1.msra.mxu0 0.0
  %1188 = vmatprep.subr.mxu0 0.0
  %1189 = vmatpush1.msra.mxu0 0.0
  %1190 = vmatprep.subr.mxu0 0.0
  %1191 = vmatpush1.msra.mxu0 0.0
  %1192 = vmatprep.subr.mxu0 0.0
  %1193 = vmatpush1.msra.mxu0 0.0
  %1194 = vmatprep.subr.mxu0 0.0
  %1195 = vmatpush1.msra.mxu0 0.0
  %1196 = vmatprep.subr.mxu0 0.0
  %1197 = vmatpush1.msra.mxu0 0.0
  %1198 = vmatprep.subr.mxu0 0.0
  %1199 = vmatpush1.msra.mxu0 0.0
  %1200 = vmatprep.subr.mxu0 0.0
  %1201 = vmatpush1.msra.mxu0 0.0
  %1202 = vmatprep.subr.mxu0 0.0
  %1203 = vmatpush1.msra.mxu0 0.0
  %1204 = vmatprep.subr.mxu0 0.0
  %1205 = vmatpush1.msra.mxu0 0.0
  %1206 = vmatprep.subr.mxu0 0.0
  %1207 = vmatpush1.msra.mxu0 0.0
  %1208 = vmatprep.subr.mxu0 0.0
  %1209 = vmatpush1.msra.mxu0 0.0
  %1210 = vmatprep.subr.mxu0 0.0
  %1211 = vmatpush1.msra.mxu0 %v459
  %1212 = vmatprep.subr.mxu0 0.0
  %1213 = vmatpush1.msra.mxu0 %v454
  %1214 = vmatprep.subr.mxu0 0.0
  %1215 = vmatpush1.msra.mxu0 %v449
  %1216 = vmatprep.subr.mxu0 0.0
  %1217 = vmatpush1.msra.mxu0 %v444
  %1218 = vmatprep.subr.mxu0 0.0
  %1219 = vmatpush2.msra.mxu0 0.0
  %1220 = vmatprep.subr.mxu0 0.0
  %1221 = vmatpush2.msra.mxu0 0.0
  %1222 = vmatprep.subr.mxu0 0.0
  %1223 = vmatpush2.msra.mxu0 0.0
  %1224 = vmatprep.subr.mxu0 0.0
  %1225 = vmatpush2.msra.mxu0 0.0
  %1226 = vmatprep.subr.mxu0 0.0
  %1227 = vmatpush2.msra.mxu0 0.0
  %1228 = vmatprep.subr.mxu0 0.0
  %1229 = vmatpush2.msra.mxu0 0.0
  %1230 = vmatprep.subr.mxu0 0.0
  %1231 = vmatpush2.msra.mxu0 0.0
  %1232 = vmatprep.subr.mxu0 0.0
  %1233 = vmatpush2.msra.mxu0 0.0
  %1234 = vmatprep.subr.mxu0 0.0
  %1235 = vmatpush2.msra.mxu0 0.0
  %1236 = vmatprep.subr.mxu0 0.0
  %1237 = vmatpush2.msra.mxu0 0.0
  %1238 = vmatprep.subr.mxu0 0.0
  %1239 = vmatpush2.msra.mxu0 0.0
  %1240 = vmatprep.subr.mxu0 0.0
  %1241 = vmatpush2.msra.mxu0 0.0
  %1242 = vmatprep.subr.mxu0 0.0
  %1243 = vmatpush2.msra.mxu0 0.0
  %1244 = vmatprep.subr.mxu0 0.0
  %1245 = vmatpush2.msra.mxu0 0.0
  %1246 = vmatprep.subr.mxu0 0.0
  %1247 = vmatpush2.msra.mxu0 0.0
  %1248 = vmatprep.subr.mxu0 0.0
  %1249 = vmatpush2.msra.mxu0 0.0
  %1250 = vmatprep.mubr.f32.mxu0 0.0
  %1251 = vmatmul.mubr.f32.gmra.mxu0 %v1178
  %v1252 = vpop.f32.mrf.mxu0
  %v1253 = vadd.f32 %v1160, %v1252
  %v1254 = vpop.f32.mrf.mxu0
  %1255 = vmatprep.mubr.f32.mxu0 0.0
  %1256 = vmatmul.mubr.f32.gmra.mxu0 %v1180
  %v1257 = vpop.f32.mrf.mxu0
  %v1258 = vadd.f32 %v1165, %v1257
  %v1259 = vpop.f32.mrf.mxu0
  %1260 = vmatprep.mubr.f32.mxu0 0.0
  %1261 = vmatmul.mubr.f32.gmra.mxu0 %v1182
  %v1262 = vpop.f32.mrf.mxu0
  %v1263 = vadd.f32 %v1170, %v1262
  %v1264 = vpop.f32.mrf.mxu0
  %1265 = vmatprep.mubr.f32.mxu0 0.0
  %1266 = vmatmul.mubr.f32.gmra.mxu0 %v1184
  %v1267 = vpop.f32.mrf.mxu0
  %v1268 = vadd.f32 %v1175, %v1267
  %v1269 = vpop.f32.mrf.mxu0
  %1270 = vdwg.mxu0
  %v1271 = vld [vmem:[%s3 + $0xc0] sm:$0xff]
  %v1272 = vld [vmem:[%s3 + $0xc8] sm:$0xff]
  %v1273 = vld [vmem:[%s3 + $0xd0] sm:$0xff]
  %v1274 = vld [vmem:[%s3 + $0xd8] sm:$0xff]
  %v1275 = vld [vmem:[%s5 + $0x8] sm:$0x1]
  %v1276 = vlaneseq
  %v1277 = vshrl.u32 %v1276, 7
  %v1278 = vsub.s32 0, %v1277
  %v1279 = vrot.slane %v1275, %v1278
  %v1281 = vsel %vm41, %v1253, 0
  %v1284 = vsel %vm41, %v1258, 0
  %v1287 = vsel %vm41, %v1263, 0
  %v1290 = vsel %vm41, %v1268, 0
  %1292 = vmatprep.subr.mxu0 0.0
  %1293 = vmatpush1.msra.mxu0 0.0
  %1294 = vmatprep.subr.mxu0 0.0
  %1295 = vmatpush1.msra.mxu0 0.0
  %1296 = vmatprep.subr.mxu0 0.0
  %1297 = vmatpush1.msra.mxu0 0.0
  %1298 = vmatprep.subr.mxu0 0.0
  %1299 = vmatpush1.msra.mxu0 0.0
  %1300 = vmatprep.subr.mxu0 0.0
  %1301 = vmatpush1.msra.mxu0 0.0
  %1302 = vmatprep.subr.mxu0 0.0
  %1303 = vmatpush1.msra.mxu0 0.0
  %1304 = vmatprep.subr.mxu0 0.0
  %1305 = vmatpush1.msra.mxu0 0.0
  %1306 = vmatprep.subr.mxu0 0.0
  %1307 = vmatpush1.msra.mxu0 0.0
  %1308 = vmatprep.subr.mxu0 0.0
  %1309 = vmatpush1.msra.mxu0 0.0
  %1310 = vmatprep.subr.mxu0 0.0
  %1311 = vmatpush1.msra.mxu0 0.0
  %1312 = vmatprep.subr.mxu0 0.0
  %1313 = vmatpush1.msra.mxu0 0.0
  %1314 = vmatprep.subr.mxu0 0.0
  %1315 = vmatpush1.msra.mxu0 0.0
  %1316 = vmatprep.subr.mxu0 0.0
  %1317 = vmatpush1.msra.mxu0 %v1274
  %1318 = vmatprep.subr.mxu0 0.0
  %1319 = vmatpush1.msra.mxu0 %v1273
  %1320 = vmatprep.subr.mxu0 0.0
  %1321 = vmatpush1.msra.mxu0 %v1272
  %1322 = vmatprep.subr.mxu0 0.0
  %1323 = vmatpush1.msra.mxu0 %v1271
  %1324 = vmatprep.subr.mxu0 0.0
  %1325 = vmatpush2.msra.mxu0 0.0
  %1326 = vmatprep.subr.mxu0 0.0
  %1327 = vmatpush2.msra.mxu0 0.0
  %1328 = vmatprep.subr.mxu0 0.0
  %1329 = vmatpush2.msra.mxu0 0.0
  %1330 = vmatprep.subr.mxu0 0.0
  %1331 = vmatpush2.msra.mxu0 0.0
  %1332 = vmatprep.subr.mxu0 0.0
  %1333 = vmatpush2.msra.mxu0 0.0
  %1334 = vmatprep.subr.mxu0 0.0
  %1335 = vmatpush2.msra.mxu0 0.0
  %1336 = vmatprep.subr.mxu0 0.0
  %1337 = vmatpush2.msra.mxu0 0.0
  %1338 = vmatprep.subr.mxu0 0.0
  %1339 = vmatpush2.msra.mxu0 0.0
  %1340 = vmatprep.subr.mxu0 0.0
  %1341 = vmatpush2.msra.mxu0 0.0
  %1342 = vmatprep.subr.mxu0 0.0
  %1343 = vmatpush2.msra.mxu0 0.0
  %1344 = vmatprep.subr.mxu0 0.0
  %1345 = vmatpush2.msra.mxu0 0.0
  %1346 = vmatprep.subr.mxu0 0.0
  %1347 = vmatpush2.msra.mxu0 0.0
  %1348 = vmatprep.subr.mxu0 0.0
  %1349 = vmatpush2.msra.mxu0 0.0
  %1350 = vmatprep.subr.mxu0 0.0
  %1351 = vmatpush2.msra.mxu0 0.0
  %1352 = vmatprep.subr.mxu0 0.0
  %1353 = vmatpush2.msra.mxu0 0.0
  %1354 = vmatprep.subr.mxu0 0.0
  %1355 = vmatpush2.msra.mxu0 0.0
  %1356 = vmatprep.mubr.f32.mxu0 0.0
  %1357 = vmatmul.mubr.f32.gmra.mxu0 %v1281
  %v1358 = vpop.f32.mrf.mxu0
  %v1359 = vadd.f32 %v1279, %v1358
  %v1360 = vpop.f32.mrf.mxu0
  %1361 = vmatprep.mubr.f32.mxu0 0.0
  %1362 = vmatmul.mubr.f32.gmra.mxu0 %v1284
  %v1363 = vpop.f32.mrf.mxu0
  %v1364 = vadd.f32 %v1279, %v1363
  %v1365 = vpop.f32.mrf.mxu0
  %1366 = vmatprep.mubr.f32.mxu0 0.0
  %1367 = vmatmul.mubr.f32.gmra.mxu0 %v1287
  %v1368 = vpop.f32.mrf.mxu0
  %v1369 = vadd.f32 %v1279, %v1368
  %v1370 = vpop.f32.mrf.mxu0
  %1371 = vmatprep.mubr.f32.mxu0 0.0
  %1372 = vmatmul.mubr.f32.gmra.mxu0 %v1290
  %v1373 = vpop.f32.mrf.mxu0
  %v1374 = vadd.f32 %v1279, %v1373
  %v1375 = vpop.f32.mrf.mxu0
  %1376 = vdwg.mxu0
  %v1377 = vadd.f32 %v1359, %v23
  %v1378 = vadd.f32 %v1364, %v24
  %v1379 = vadd.f32 %v1369, %v25
  %v1380 = vadd.f32 %v1374, %v26
  %v1381 = vsel %vm41, %v1377, 0.0
  %1382 = vadd.xlane.f32.xlu0 %v1381
  %v1383 = vpop.xlane.xlu0 %1382
  %v1384 = vsel %vm41, %v1378, 0.0
  %1385 = vadd.xlane.f32.xlu0 %v1384
  %v1386 = vpop.xlane.xlu0 %1385
  %v1387 = vsel %vm41, %v1379, 0.0
  %1388 = vadd.xlane.f32.xlu0 %v1387
  %v1389 = vpop.xlane.xlu0 %1388
  %v1390 = vsel %vm41, %v1380, 0.0
  %1391 = vadd.xlane.f32.xlu0 %v1390
  %v1392 = vpop.xlane.xlu0 %1391
  %v1393 = vmul.f32 %v1383, %v54
  %v1394 = vmul.f32 %v1386, %v54
  %v1395 = vmul.f32 %v1389, %v54
  %v1396 = vmul.f32 %v1392, %v54
  %v1397 = vsub.f32 %v1377, %v1393
  %v1398 = vsub.f32 %v1378, %v1394
  %v1399 = vsub.f32 %v1379, %v1395
  %v1400 = vsub.f32 %v1380, %v1396
  %v1401 = vmul.f32 %v1397, %v1397
  %v1402 = vmul.f32 %v1398, %v1398
  %v1403 = vmul.f32 %v1399, %v1399
  %v1404 = vmul.f32 %v1400, %v1400
  %v1405 = vsel %vm41, %v1401, 0.0
  %1406 = vadd.xlane.f32.xlu0 %v1405
  %v1407 = vpop.xlane.xlu0 %1406
  %v1408 = vsel %vm41, %v1402, 0.0
  %1409 = vadd.xlane.f32.xlu0 %v1408
  %v1410 = vpop.xlane.xlu0 %1409
  %v1411 = vsel %vm41, %v1403, 0.0
  %1412 = vadd.xlane.f32.xlu0 %v1411
  %v1413 = vpop.xlane.xlu0 %1412
  %v1414 = vsel %vm41, %v1404, 0.0
  %1415 = vadd.xlane.f32.xlu0 %v1414
  %v1416 = vpop.xlane.xlu0 %1415
  %v1417 = vmul.f32 %v1407, %v54
  %v1418 = vmul.f32 %v1410, %v54
  %v1419 = vmul.f32 %v1413, %v54
  %v1420 = vmul.f32 %v1416, %v54
  %v1421 = vadd.f32 %v1417, 1e-05
  %v1422 = vadd.f32 %v1418, 1e-05
  %v1423 = vadd.f32 %v1419, 1e-05
  %v1424 = vadd.f32 %v1420, 1e-05
  %v1425 = vrsqrt.pop %v1421
  %v1426 = vrsqrt.pop %v1422
  %v1427 = vrsqrt.pop %v1423
  %v1428 = vrsqrt.pop %v1424
  %v1429 = vmul.f32 %v1397, %v1425
  %v1430 = vmul.f32 %v1398, %v1426
  %v1431 = vmul.f32 %v1399, %v1427
  %v1432 = vmul.f32 %v1400, %v1428
  %v1433 = vld [vmem:[%s5 + $0x2] sm:$0x1]
  %v1434 = vlaneseq
  %v1435 = vshrl.u32 %v1434, 7
  %v1436 = vsub.s32 0, %v1435
  %v1437 = vrot.slane %v1433, %v1436
  %v1438 = vmul.f32 %v1429, %v1437
  %v1439 = vmul.f32 %v1430, %v1437
  %v1440 = vmul.f32 %v1431, %v1437
  %v1441 = vmul.f32 %v1432, %v1437
  %v1442 = vld [vmem:[%s5 + $0x6] sm:$0x1]
  %v1443 = vlaneseq
  %v1444 = vshrl.u32 %v1443, 7
  %v1445 = vsub.s32 0, %v1444
  %v1446 = vrot.slane %v1442, %v1445
  %v1447 = vadd.f32 %v1438, %v1446
  %v1448 = vadd.f32 %v1439, %v1446
  %v1449 = vadd.f32 %v1440, %v1446
  %v1450 = vadd.f32 %v1441, %v1446
  %v1451 = vadd.f32 %v179, %v31
  %v1452 = vadd.f32 %v180, %v32
  %v1453 = vadd.f32 %v181, %v33
  %v1454 = vadd.f32 %v182, %v34
  %v1455 = vld [vmem:[%s3 + $0xe0] sm:$0xff]
  %v1456 = vld [vmem:[%s3 + $0xe8] sm:$0xff]
  %v1457 = vld [vmem:[%s3 + $0xf0] sm:$0xff]
  %v1458 = vld [vmem:[%s3 + $0xf8] sm:$0xff]
  %v1459 = vld [vmem:[%s5 + $0x9] sm:$0x1]
  %v1460 = vlaneseq
  %v1461 = vshrl.u32 %v1460, 7
  %v1462 = vsub.s32 0, %v1461
  %v1463 = vrot.slane %v1459, %v1462
  %v1465 = vsel %vm41, %v1447, 0
  %v1468 = vsel %vm41, %v1448, 0
  %v1471 = vsel %vm41, %v1449, 0
  %v1474 = vsel %vm41, %v1450, 0
  %1476 = vmatprep.subr.mxu0 0.0
  %1477 = vmatpush1.msra.mxu0 0.0
  %1478 = vmatprep.subr.mxu0 0.0
  %1479 = vmatpush1.msra.mxu0 0.0
  %1480 = vmatprep.subr.mxu0 0.0
  %1481 = vmatpush1.msra.mxu0 0.0
  %1482 = vmatprep.subr.mxu0 0.0
  %1483 = vmatpush1.msra.mxu0 0.0
  %1484 = vmatprep.subr.mxu0 0.0
  %1485 = vmatpush1.msra.mxu0 0.0
  %1486 = vmatprep.subr.mxu0 0.0
  %1487 = vmatpush1.msra.mxu0 0.0
  %1488 = vmatprep.subr.mxu0 0.0
  %1489 = vmatpush1.msra.mxu0 0.0
  %1490 = vmatprep.subr.mxu0 0.0
  %1491 = vmatpush1.msra.mxu0 0.0
  %1492 = vmatprep.subr.mxu0 0.0
  %1493 = vmatpush1.msra.mxu0 0.0
  %1494 = vmatprep.subr.mxu0 0.0
  %1495 = vmatpush1.msra.mxu0 0.0
  %1496 = vmatprep.subr.mxu0 0.0
  %1497 = vmatpush1.msra.mxu0 0.0
  %1498 = vmatprep.subr.mxu0 0.0
  %1499 = vmatpush1.msra.mxu0 0.0
  %1500 = vmatprep.subr.mxu0 0.0
  %1501 = vmatpush1.msra.mxu0 %v1458
  %1502 = vmatprep.subr.mxu0 0.0
  %1503 = vmatpush1.msra.mxu0 %v1457
  %1504 = vmatprep.subr.mxu0 0.0
  %1505 = vmatpush1.msra.mxu0 %v1456
  %1506 = vmatprep.subr.mxu0 0.0
  %1507 = vmatpush1.msra.mxu0 %v1455
  %1508 = vmatprep.subr.mxu0 0.0
  %1509 = vmatpush2.msra.mxu0 0.0
  %1510 = vmatprep.subr.mxu0 0.0
  %1511 = vmatpush2.msra.mxu0 0.0
  %1512 = vmatprep.subr.mxu0 0.0
  %1513 = vmatpush2.msra.mxu0 0.0
  %1514 = vmatprep.subr.mxu0 0.0
  %1515 = vmatpush2.msra.mxu0 0.0
  %1516 = vmatprep.subr.mxu0 0.0
  %1517 = vmatpush2.msra.mxu0 0.0
  %1518 = vmatprep.subr.mxu0 0.0
  %1519 = vmatpush2.msra.mxu0 0.0
  %1520 = vmatprep.subr.mxu0 0.0
  %1521 = vmatpush2.msra.mxu0 0.0
  %1522 = vmatprep.subr.mxu0 0.0
  %1523 = vmatpush2.msra.mxu0 0.0
  %1524 = vmatprep.subr.mxu0 0.0
  %1525 = vmatpush2.msra.mxu0 0.0
  %1526 = vmatprep.subr.mxu0 0.0
  %1527 = vmatpush2.msra.mxu0 0.0
  %1528 = vmatprep.subr.mxu0 0.0
  %1529 = vmatpush2.msra.mxu0 0.0
  %1530 = vmatprep.subr.mxu0 0.0
  %1531 = vmatpush2.msra.mxu0 0.0
  %1532 = vmatprep.subr.mxu0 0.0
  %1533 = vmatpush2.msra.mxu0 0.0
  %1534 = vmatprep.subr.mxu0 0.0
  %1535 = vmatpush2.msra.mxu0 0.0
  %1536 = vmatprep.subr.mxu0 0.0
  %1537 = vmatpush2.msra.mxu0 0.0
  %1538 = vmatprep.subr.mxu0 0.0
  %1539 = vmatpush2.msra.mxu0 0.0
  %1540 = vmatprep.mubr.f32.mxu0 0.0
  %1541 = vmatmul.mubr.f32.gmra.mxu0 %v1465
  %v1542 = vpop.f32.mrf.mxu0
  %v1543 = vadd.f32 %v1463, %v1542
  %v1544 = vpop.f32.mrf.mxu0
  %1545 = vmatprep.mubr.f32.mxu0 0.0
  %1546 = vmatmul.mubr.f32.gmra.mxu0 %v1468
  %v1547 = vpop.f32.mrf.mxu0
  %v1548 = vadd.f32 %v1463, %v1547
  %v1549 = vpop.f32.mrf.mxu0
  %1550 = vmatprep.mubr.f32.mxu0 0.0
  %1551 = vmatmul.mubr.f32.gmra.mxu0 %v1471
  %v1552 = vpop.f32.mrf.mxu0
  %v1553 = vadd.f32 %v1463, %v1552
  %v1554 = vpop.f32.mrf.mxu0
  %1555 = vmatprep.mubr.f32.mxu0 0.0
  %1556 = vmatmul.mubr.f32.gmra.mxu0 %v1474
  %v1557 = vpop.f32.mrf.mxu0
  %v1558 = vadd.f32 %v1463, %v1557
  %v1559 = vpop.f32.mrf.mxu0
  %1560 = vdwg.mxu0
  %v1562 = vsel %vm41, %v40, 0
  %1564 = vmatprep.subr.mxu0 0.0
  %1565 = vmatpush1.msra.mxu0 0.0
  %1566 = vmatprep.subr.mxu0 0.0
  %1567 = vmatpush1.msra.mxu0 0.0
  %1568 = vmatprep.subr.mxu0 0.0
  %1569 = vmatpush1.msra.mxu0 0.0
  %1570 = vmatprep.subr.mxu0 0.0
  %1571 = vmatpush1.msra.mxu0 0.0
  %1572 = vmatprep.subr.mxu0 0.0
  %1573 = vmatpush1.msra.mxu0 0.0
  %1574 = vmatprep.subr.mxu0 0.0
  %1575 = vmatpush1.msra.mxu0 0.0
  %1576 = vmatprep.subr.mxu0 0.0
  %1577 = vmatpush1.msra.mxu0 0.0
  %1578 = vmatprep.subr.mxu0 0.0
  %1579 = vmatpush1.msra.mxu0 0.0
  %1580 = vmatprep.subr.mxu0 0.0
  %1581 = vmatpush1.msra.mxu0 0.0
  %1582 = vmatprep.subr.mxu0 0.0
  %1583 = vmatpush1.msra.mxu0 0.0
  %1584 = vmatprep.subr.mxu0 0.0
  %1585 = vmatpush1.msra.mxu0 0.0
  %1586 = vmatprep.subr.mxu0 0.0
  %1587 = vmatpush1.msra.mxu0 0.0
  %1588 = vmatprep.subr.mxu0 0.0
  %1589 = vmatpush1.msra.mxu0 %v182
  %1590 = vmatprep.subr.mxu0 0.0
  %1591 = vmatpush1.msra.mxu0 %v181
  %1592 = vmatprep.subr.mxu0 0.0
  %1593 = vmatpush1.msra.mxu0 %v180
  %1594 = vmatprep.subr.mxu0 0.0
  %1595 = vmatpush1.msra.mxu0 %v179
  %1596 = vmatprep.subr.mxu0 0.0
  %1597 = vmatpush2.msra.mxu0 0.0
  %1598 = vmatprep.subr.mxu0 0.0
  %1599 = vmatpush2.msra.mxu0 0.0
  %1600 = vmatprep.subr.mxu0 0.0
  %1601 = vmatpush2.msra.mxu0 0.0
  %1602 = vmatprep.subr.mxu0 0.0
  %1603 = vmatpush2.msra.mxu0 0.0
  %1604 = vmatprep.subr.mxu0 0.0
  %1605 = vmatpush2.msra.mxu0 0.0
  %1606 = vmatprep.subr.mxu0 0.0
  %1607 = vmatpush2.msra.mxu0 0.0
  %1608 = vmatprep.subr.mxu0 0.0
  %1609 = vmatpush2.msra.mxu0 0.0
  %1610 = vmatprep.subr.mxu0 0.0
  %1611 = vmatpush2.msra.mxu0 0.0
  %1612 = vmatprep.subr.mxu0 0.0
  %1613 = vmatpush2.msra.mxu0 0.0
  %1614 = vmatprep.subr.mxu0 0.0
  %1615 = vmatpush2.msra.mxu0 0.0
  %1616 = vmatprep.subr.mxu0 0.0
  %1617 = vmatpush2.msra.mxu0 0.0
  %1618 = vmatprep.subr.mxu0 0.0
  %1619 = vmatpush2.msra.mxu0 0.0
  %1620 = vmatprep.subr.mxu0 0.0
  %1621 = vmatpush2.msra.mxu0 0.0
  %1622 = vmatprep.subr.mxu0 0.0
  %1623 = vmatpush2.msra.mxu0 0.0
  %1624 = vmatprep.subr.mxu0 0.0
  %1625 = vmatpush2.msra.mxu0 0.0
  %1626 = vmatprep.subr.mxu0 0.0
  %1627 = vmatpush2.msra.mxu0 0.0
  %1628 = vmatprep.mubr.f32.mxu0 0.0
  %1629 = vmatmul.mubr.f32.gmra.mxu0 %v1562
  %v1630 = vpop.f32.mrf.mxu0
  %v1631 = vadd.f32 0.0, %v1630
  %v1632 = vpop.f32.mrf.mxu0
  %1633 = vdwg.mxu0
  %v1634 = vld [vmem:[%s3 + $0x100] sm:$0xff]
  %v1635 = vld [vmem:[%s3 + $0x108] sm:$0xff]
  %v1636 = vld [vmem:[%s3 + $0x110] sm:$0xff]
  %v1637 = vld [vmem:[%s3 + $0x118] sm:$0xff]
  %v1638 = vld [vmem:[%s5 + $0xa] sm:$0x1]
  %v1639 = vlaneseq
  %v1640 = vshrl.u32 %v1639, 7
  %v1641 = vsub.s32 0, %v1640
  %v1642 = vrot.slane %v1638, %v1641
  %v1644 = vsel %vm41, %v1631, 0
  %1646 = vmatprep.subr.mxu0 0.0
  %1647 = vmatpush1.msra.mxu0 0.0
  %1648 = vmatprep.subr.mxu0 0.0
  %1649 = vmatpush1.msra.mxu0 0.0
  %1650 = vmatprep.subr.mxu0 0.0
  %1651 = vmatpush1.msra.mxu0 0.0
  %1652 = vmatprep.subr.mxu0 0.0
  %1653 = vmatpush1.msra.mxu0 0.0
  %1654 = vmatprep.subr.mxu0 0.0
  %1655 = vmatpush1.msra.mxu0 0.0
  %1656 = vmatprep.subr.mxu0 0.0
  %1657 = vmatpush1.msra.mxu0 0.0
  %1658 = vmatprep.subr.mxu0 0.0
  %1659 = vmatpush1.msra.mxu0 0.0
  %1660 = vmatprep.subr.mxu0 0.0
  %1661 = vmatpush1.msra.mxu0 0.0
  %1662 = vmatprep.subr.mxu0 0.0
  %1663 = vmatpush1.msra.mxu0 0.0
  %1664 = vmatprep.subr.mxu0 0.0
  %1665 = vmatpush1.msra.mxu0 0.0
  %1666 = vmatprep.subr.mxu0 0.0
  %1667 = vmatpush1.msra.mxu0 0.0
  %1668 = vmatprep.subr.mxu0 0.0
  %1669 = vmatpush1.msra.mxu0 0.0
  %1670 = vmatprep.subr.mxu0 0.0
  %1671 = vmatpush1.msra.mxu0 %v1637
  %1672 = vmatprep.subr.mxu0 0.0
  %1673 = vmatpush1.msra.mxu0 %v1636
  %1674 = vmatprep.subr.mxu0 0.0
  %1675 = vmatpush1.msra.mxu0 %v1635
  %1676 = vmatprep.subr.mxu0 0.0
  %1677 = vmatpush1.msra.mxu0 %v1634
  %1678 = vmatprep.subr.mxu0 0.0
  %1679 = vmatpush2.msra.mxu0 0.0
  %1680 = vmatprep.subr.mxu0 0.0
  %1681 = vmatpush2.msra.mxu0 0.0
  %1682 = vmatprep.subr.mxu0 0.0
  %1683 = vmatpush2.msra.mxu0 0.0
  %1684 = vmatprep.subr.mxu0 0.0
  %1685 = vmatpush2.msra.mxu0 0.0
  %1686 = vmatprep.subr.mxu0 0.0
  %1687 = vmatpush2.msra.mxu0 0.0
  %1688 = vmatprep.subr.mxu0 0.0
  %1689 = vmatpush2.msra.mxu0 0.0
  %1690 = vmatprep.subr.mxu0 0.0
  %1691 = vmatpush2.msra.mxu0 0.0
  %1692 = vmatprep.subr.mxu0 0.0
  %1693 = vmatpush2.msra.mxu0 0.0
  %1694 = vmatprep.subr.mxu0 0.0
  %1695 = vmatpush2.msra.mxu0 0.0
  %1696 = vmatprep.subr.mxu0 0.0
  %1697 = vmatpush2.msra.mxu0 0.0
  %1698 = vmatprep.subr.mxu0 0.0
  %1699 = vmatpush2.msra.mxu0 0.0
  %1700 = vmatprep.subr.mxu0 0.0
  %1701 = vmatpush2.msra.mxu0 0.0
  %1702 = vmatprep.subr.mxu0 0.0
  %1703 = vmatpush2.msra.mxu0 0.0
  %1704 = vmatprep.subr.mxu0 0.0
  %1705 = vmatpush2.msra.mxu0 0.0
  %1706 = vmatprep.subr.mxu0 0.0
  %1707 = vmatpush2.msra.mxu0 0.0
  %1708 = vmatprep.subr.mxu0 0.0
  %1709 = vmatpush2.msra.mxu0 0.0
  %1710 = vmatprep.mubr.f32.mxu0 0.0
  %1711 = vmatmul.mubr.f32.gmra.mxu0 %v1644
  %v1712 = vpop.f32.mrf.mxu0
  %v1713 = vadd.f32 %v1642, %v1712
  %v1714 = vpop.f32.mrf.mxu0
  %1715 = vdwg.mxu0
  %v1717 = vsel %vm41, %v1543, 0
  %v1720 = vsel %vm41, %v1548, 0
  %v1723 = vsel %vm41, %v1553, 0
  %v1726 = vsel %vm41, %v1558, 0
  %v1729 = vsel %vm41, %v1713, 0
  %1731 = vmatprep.subr.mxu0 0.0
  %1732 = vmatpush1.xpose.msra.mxu0 0.0
  %1733 = vmatprep.subr.mxu0 0.0
  %1734 = vmatpush1.xpose.msra.mxu0 0.0
  %1735 = vmatprep.subr.mxu0 0.0
  %1736 = vmatpush1.xpose.msra.mxu0 0.0
  %1737 = vmatprep.subr.mxu0 0.0
  %1738 = vmatpush1.xpose.msra.mxu0 0.0
  %1739 = vmatprep.subr.mxu0 0.0
  %1740 = vmatpush1.xpose.msra.mxu0 0.0
  %1741 = vmatprep.subr.mxu0 0.0
  %1742 = vmatpush1.xpose.msra.mxu0 0.0
  %1743 = vmatprep.subr.mxu0 0.0
  %1744 = vmatpush1.xpose.msra.mxu0 0.0
  %1745 = vmatprep.subr.mxu0 0.0
  %1746 = vmatpush1.xpose.msra.mxu0 0.0
  %1747 = vmatprep.subr.mxu0 0.0
  %1748 = vmatpush1.xpose.msra.mxu0 0.0
  %1749 = vmatprep.subr.mxu0 0.0
  %1750 = vmatpush1.xpose.msra.mxu0 0.0
  %1751 = vmatprep.subr.mxu0 0.0
  %1752 = vmatpush1.xpose.msra.mxu0 0.0
  %1753 = vmatprep.subr.mxu0 0.0
  %1754 = vmatpush1.xpose.msra.mxu0 0.0
  %1755 = vmatprep.subr.mxu0 0.0
  %1756 = vmatpush1.xpose.msra.mxu0 0.0
  %1757 = vmatprep.subr.mxu0 0.0
  %1758 = vmatpush1.xpose.msra.mxu0 0.0
  %1759 = vmatprep.subr.mxu0 0.0
  %1760 = vmatpush1.xpose.msra.mxu0 0.0
  %1761 = vmatprep.subr.mxu0 0.0
  %1762 = vmatpush1.xpose.msra.mxu0 %v1729
  %1763 = vmatprep.subr.mxu0 0.0
  %1764 = vmatpush2.xpose.msra.mxu0 0.0
  %1765 = vmatprep.subr.mxu0 0.0
  %1766 = vmatpush2.xpose.msra.mxu0 0.0
  %1767 = vmatprep.subr.mxu0 0.0
  %1768 = vmatpush2.xpose.msra.mxu0 0.0
  %1769 = vmatprep.subr.mxu0 0.0
  %1770 = vmatpush2.xpose.msra.mxu0 0.0
  %1771 = vmatprep.subr.mxu0 0.0
  %1772 = vmatpush2.xpose.msra.mxu0 0.0
  %1773 = vmatprep.subr.mxu0 0.0
  %1774 = vmatpush2.xpose.msra.mxu0 0.0
  %1775 = vmatprep.subr.mxu0 0.0
  %1776 = vmatpush2.xpose.msra.mxu0 0.0
  %1777 = vmatprep.subr.mxu0 0.0
  %1778 = vmatpush2.xpose.msra.mxu0 0.0
  %1779 = vmatprep.subr.mxu0 0.0
  %1780 = vmatpush2.xpose.msra.mxu0 0.0
  %1781 = vmatprep.subr.mxu0 0.0
  %1782 = vmatpush2.xpose.msra.mxu0 0.0
  %1783 = vmatprep.subr.mxu0 0.0
  %1784 = vmatpush2.xpose.msra.mxu0 0.0
  %1785 = vmatprep.subr.mxu0 0.0
  %1786 = vmatpush2.xpose.msra.mxu0 0.0
  %1787 = vmatprep.subr.mxu0 0.0
  %1788 = vmatpush2.xpose.msra.mxu0 0.0
  %1789 = vmatprep.subr.mxu0 0.0
  %1790 = vmatpush2.xpose.msra.mxu0 0.0
  %1791 = vmatprep.subr.mxu0 0.0
  %1792 = vmatpush2.xpose.msra.mxu0 0.0
  %1793 = vmatprep.subr.mxu0 0.0
  %1794 = vmatpush2.xpose.msra.mxu0 0.0
  %1795 = vmatprep.mubr.f32.mxu0 0.0
  %1796 = vmatmul.mubr.f32.gmra.mxu0 %v1717
  %v1797 = vpop.f32.mrf.mxu0
  %v1798 = vadd.f32 0.0, %v1797
  %v1799 = vpop.f32.mrf.mxu0
  %1800 = vmatprep.mubr.f32.mxu0 0.0
  %1801 = vmatmul.mubr.f32.gmra.mxu0 %v1720
  %v1802 = vpop.f32.mrf.mxu0
  %v1803 = vadd.f32 0.0, %v1802
  %v1804 = vpop.f32.mrf.mxu0
  %1805 = vmatprep.mubr.f32.mxu0 0.0
  %1806 = vmatmul.mubr.f32.gmra.mxu0 %v1723
  %v1807 = vpop.f32.mrf.mxu0
  %v1808 = vadd.f32 0.0, %v1807
  %v1809 = vpop.f32.mrf.mxu0
  %1810 = vmatprep.mubr.f32.mxu0 0.0
  %1811 = vmatmul.mubr.f32.gmra.mxu0 %v1726
  %v1812 = vpop.f32.mrf.mxu0
  %v1813 = vadd.f32 0.0, %v1812
  %v1814 = vpop.f32.mrf.mxu0
  %1815 = vdwg.mxu0
  %v1816 = vmul.f32 %v1798, 0.17677669
  %v1817 = vmul.f32 %v1803, 0.17677669
  %v1818 = vmul.f32 %v1808, 0.17677669
  %v1819 = vmul.f32 %v1813, 0.17677669
  %1824 = vrot.lane.b32.xlu0 %v35, 96
  %v1825 = vpop.permute.xlu0 %1824
  %1826 = vrot.lane.b32.xlu0 %v36, 96
  %v1827 = vpop.permute.xlu0 %1826
  %1828 = vrot.lane.b32.xlu0 %v37, 96
  %v1829 = vpop.permute.xlu0 %1828
  %1830 = vrot.lane.b32.xlu0 %v38, 96
  %v1831 = vpop.permute.xlu0 %1830
  %v1836 = vadd.f32 %v1816, %v1825
  %v1837 = vadd.f32 %v1817, %v1827
  %v1838 = vadd.f32 %v1818, %v1829
  %v1839 = vadd.f32 %v1819, %v1831
  %v1840 = vlaneseq
  %v1841 = vand.u32 %v1840, 127
  %vm1842 = vcmask 64512
  %v1843 = vsel %vm1842, %v1836, -inf
  %1844 = vmax.xlane.f32.xlu0 %v1843
  %v1845 = vpop.xlane.xlu0 %1844
  %v1846 = vsel %vm1842, %v1837, -inf
  %1847 = vmax.xlane.f32.xlu0 %v1846
  %v1848 = vpop.xlane.xlu0 %1847
  %v1849 = vsel %vm1842, %v1838, -inf
  %1850 = vmax.xlane.f32.xlu0 %v1849
  %v1851 = vpop.xlane.xlu0 %1850
  %v1852 = vsel %vm1842, %v1839, -inf
  %1853 = vmax.xlane.f32.xlu0 %v1852
  %v1854 = vpop.xlane.xlu0 %1853
  %vm1855 = vcmp.eq.f32.partialorder %v1836, %v1845
  %vm1856 = vcmp.eq.f32.partialorder %v1837, %v1848
  %vm1857 = vcmp.eq.f32.partialorder %v1838, %v1851
  %vm1858 = vcmp.eq.f32.partialorder %v1839, %v1854
  %v1859 = vsel %vm1855, %v1841, 8
  %v1860 = vsel %vm1856, %v1841, 8
  %v1861 = vsel %vm1857, %v1841, 8
  %v1862 = vsel %vm1858, %v1841, 8
  %v1863 = vsel %vm1842, %v1859, 2147483647
  %v1864 = vand.u32 %v1863, 65535
  %v1865 = vshra.s32 %v1863, 16
  %v1866 = vcvt.s32.f32 %v1864
  %v1867 = vcvt.s32.f32 %v1865
  %1868 = vmin.xlane.f32.xlu0 %v1867
  %v1869 = vpop.xlane.xlu0 %1868
  %vm1870 = vcmp.eq.f32.partialorder %v1867, %v1869
  %v1871 = vsel %vm1870, %v1866, inf
  %1872 = vmin.xlane.f32.xlu0 %v1871
  %v1873 = vpop.xlane.xlu0 %1872
  %v1874 = vcvt.f32.s32 %v1873
  %v1875 = vcvt.f32.s32 %v1869
  %v1876 = vshll.u32 %v1875, 16
  %v1877 = vadd.s32 %v1876, %v1874
  %v1878 = vsel %vm1842, %v1860, 2147483647
  %v1879 = vand.u32 %v1878, 65535
  %v1880 = vshra.s32 %v1878, 16
  %v1881 = vcvt.s32.f32 %v1879
  %v1882 = vcvt.s32.f32 %v1880
  %1883 = vmin.xlane.f32.xlu0 %v1882
  %v1884 = vpop.xlane.xlu0 %1883
  %vm1885 = vcmp.eq.f32.partialorder %v1882, %v1884
  %v1886 = vsel %vm1885, %v1881, inf
  %1887 = vmin.xlane.f32.xlu0 %v1886
  %v1888 = vpop.xlane.xlu0 %1887
  %v1889 = vcvt.f32.s32 %v1888
  %v1890 = vcvt.f32.s32 %v1884
  %v1891 = vshll.u32 %v1890, 16
  %v1892 = vadd.s32 %v1891, %v1889
  %v1893 = vsel %vm1842, %v1861, 2147483647
  %v1894 = vand.u32 %v1893, 65535
  %v1895 = vshra.s32 %v1893, 16
  %v1896 = vcvt.s32.f32 %v1894
  %v1897 = vcvt.s32.f32 %v1895
  %1898 = vmin.xlane.f32.xlu0 %v1897
  %v1899 = vpop.xlane.xlu0 %1898
  %vm1900 = vcmp.eq.f32.partialorder %v1897, %v1899
  %v1901 = vsel %vm1900, %v1896, inf
  %1902 = vmin.xlane.f32.xlu0 %v1901
  %v1903 = vpop.xlane.xlu0 %1902
  %v1904 = vcvt.f32.s32 %v1903
  %v1905 = vcvt.f32.s32 %v1899
  %v1906 = vshll.u32 %v1905, 16
  %v1907 = vadd.s32 %v1906, %v1904
  %v1908 = vsel %vm1842, %v1862, 2147483647
  %v1909 = vand.u32 %v1908, 65535
  %v1910 = vshra.s32 %v1908, 16
  %v1911 = vcvt.s32.f32 %v1909
  %v1912 = vcvt.s32.f32 %v1910
  %1913 = vmin.xlane.f32.xlu0 %v1912
  %v1914 = vpop.xlane.xlu0 %1913
  %vm1915 = vcmp.eq.f32.partialorder %v1912, %v1914
  %v1916 = vsel %vm1915, %v1911, inf
  %1917 = vmin.xlane.f32.xlu0 %v1916
  %v1918 = vpop.xlane.xlu0 %1917
  %v1919 = vcvt.f32.s32 %v1918
  %v1920 = vcvt.f32.s32 %v1914
  %v1921 = vshll.u32 %v1920, 16
  %v1922 = vadd.s32 %v1921, %v1919
  %vm1923 = vcmp.eq.s32.totalorder %v1841, %v1877
  %vm1924 = vcmp.eq.s32.totalorder %v1841, %v1892
  %vm1925 = vcmp.eq.s32.totalorder %v1841, %v1907
  %vm1926 = vcmp.eq.s32.totalorder %v1841, %v1922
  %v1927 = vsel %vm1923, 1, 0
  %v1928 = vsel %vm1924, 1, 0
  %v1929 = vsel %vm1925, 1, 0
  %v1930 = vsel %vm1926, 1, 0
  %v1931 = vcvt.s32.f32 %v1927
  %v1932 = vcvt.s32.f32 %v1928
  %v1933 = vcvt.s32.f32 %v1929
  %v1934 = vcvt.s32.f32 %v1930
  %v1935 = vsel %vm1923, -3.4028235e+38, %v1836
  %v1936 = vsel %vm1924, -3.4028235e+38, %v1837
  %v1937 = vsel %vm1925, -3.4028235e+38, %v1838
  %v1938 = vsel %vm1926, -3.4028235e+38, %v1839
  %v1939 = vsel %vm1842, %v1935, -inf
  %1940 = vmax.xlane.f32.xlu0 %v1939
  %v1941 = vpop.xlane.xlu0 %1940
  %v1942 = vsel %vm1842, %v1936, -inf
  %1943 = vmax.xlane.f32.xlu0 %v1942
  %v1944 = vpop.xlane.xlu0 %1943
  %v1945 = vsel %vm1842, %v1937, -inf
  %1946 = vmax.xlane.f32.xlu0 %v1945
  %v1947 = vpop.xlane.xlu0 %1946
  %v1948 = vsel %vm1842, %v1938, -inf
  %1949 = vmax.xlane.f32.xlu0 %v1948
  %v1950 = vpop.xlane.xlu0 %1949
  %vm1951 = vcmp.eq.f32.partialorder %v1935, %v1941
  %vm1952 = vcmp.eq.f32.partialorder %v1936, %v1944
  %vm1953 = vcmp.eq.f32.partialorder %v1937, %v1947
  %vm1954 = vcmp.eq.f32.partialorder %v1938, %v1950
  %v1955 = vsel %vm1951, %v1841, 8
  %v1956 = vsel %vm1952, %v1841, 8
  %v1957 = vsel %vm1953, %v1841, 8
  %v1958 = vsel %vm1954, %v1841, 8
  %v1959 = vsel %vm1842, %v1955, 2147483647
  %v1960 = vand.u32 %v1959, 65535
  %v1961 = vshra.s32 %v1959, 16
  %v1962 = vcvt.s32.f32 %v1960
  %v1963 = vcvt.s32.f32 %v1961
  %1964 = vmin.xlane.f32.xlu0 %v1963
  %v1965 = vpop.xlane.xlu0 %1964
  %vm1966 = vcmp.eq.f32.partialorder %v1963, %v1965
  %v1967 = vsel %vm1966, %v1962, inf
  %1968 = vmin.xlane.f32.xlu0 %v1967
  %v1969 = vpop.xlane.xlu0 %1968
  %v1970 = vcvt.f32.s32 %v1969
  %v1971 = vcvt.f32.s32 %v1965
  %v1972 = vshll.u32 %v1971, 16
  %v1973 = vadd.s32 %v1972, %v1970
  %v1974 = vsel %vm1842, %v1956, 2147483647
  %v1975 = vand.u32 %v1974, 65535
  %v1976 = vshra.s32 %v1974, 16
  %v1977 = vcvt.s32.f32 %v1975
  %v1978 = vcvt.s32.f32 %v1976
  %1979 = vmin.xlane.f32.xlu0 %v1978
  %v1980 = vpop.xlane.xlu0 %1979
  %vm1981 = vcmp.eq.f32.partialorder %v1978, %v1980
  %v1982 = vsel %vm1981, %v1977, inf
  %1983 = vmin.xlane.f32.xlu0 %v1982
  %v1984 = vpop.xlane.xlu0 %1983
  %v1985 = vcvt.f32.s32 %v1984
  %v1986 = vcvt.f32.s32 %v1980
  %v1987 = vshll.u32 %v1986, 16
  %v1988 = vadd.s32 %v1987, %v1985
  %v1989 = vsel %vm1842, %v1957, 2147483647
  %v1990 = vand.u32 %v1989, 65535
  %v1991 = vshra.s32 %v1989, 16
  %v1992 = vcvt.s32.f32 %v1990
  %v1993 = vcvt.s32.f32 %v1991
  %1994 = vmin.xlane.f32.xlu0 %v1993
  %v1995 = vpop.xlane.xlu0 %1994
  %vm1996 = vcmp.eq.f32.partialorder %v1993, %v1995
  %v1997 = vsel %vm1996, %v1992, inf
  %1998 = vmin.xlane.f32.xlu0 %v1997
  %v1999 = vpop.xlane.xlu0 %1998
  %v2000 = vcvt.f32.s32 %v1999
  %v2001 = vcvt.f32.s32 %v1995
  %v2002 = vshll.u32 %v2001, 16
  %v2003 = vadd.s32 %v2002, %v2000
  %v2004 = vsel %vm1842, %v1958, 2147483647
  %v2005 = vand.u32 %v2004, 65535
  %v2006 = vshra.s32 %v2004, 16
  %v2007 = vcvt.s32.f32 %v2005
  %v2008 = vcvt.s32.f32 %v2006
  %2009 = vmin.xlane.f32.xlu0 %v2008
  %v2010 = vpop.xlane.xlu0 %2009
  %vm2011 = vcmp.eq.f32.partialorder %v2008, %v2010
  %v2012 = vsel %vm2011, %v2007, inf
  %2013 = vmin.xlane.f32.xlu0 %v2012
  %v2014 = vpop.xlane.xlu0 %2013
  %v2015 = vcvt.f32.s32 %v2014
  %v2016 = vcvt.f32.s32 %v2010
  %v2017 = vshll.u32 %v2016, 16
  %v2018 = vadd.s32 %v2017, %v2015
  %vm2019 = vcmp.eq.s32.totalorder %v1841, %v1973
  %vm2020 = vcmp.eq.s32.totalorder %v1841, %v1988
  %vm2021 = vcmp.eq.s32.totalorder %v1841, %v2003
  %vm2022 = vcmp.eq.s32.totalorder %v1841, %v2018
  %v2023 = vsel %vm2019, 1, 0
  %v2024 = vsel %vm2020, 1, 0
  %v2025 = vsel %vm2021, 1, 0
  %v2026 = vsel %vm2022, 1, 0
  %v2027 = vcvt.s32.f32 %v2023
  %v2028 = vcvt.s32.f32 %v2024
  %v2029 = vcvt.s32.f32 %v2025
  %v2030 = vcvt.s32.f32 %v2026
  %v2031 = vsub.f32 %v1845, %v1845
  %v2032 = vsub.f32 %v1848, %v1848
  %v2033 = vsub.f32 %v1851, %v1851
  %v2034 = vsub.f32 %v1854, %v1854
  %v2035 = vmul.f32 %v2031, 1.442695
  %v2036 = vpow.pop %v2035
  %v2037 = vmul.f32 %v2032, 1.442695
  %v2038 = vpow.pop %v2037
  %v2039 = vmul.f32 %v2033, 1.442695
  %v2040 = vpow.pop %v2039
  %v2041 = vmul.f32 %v2034, 1.442695
  %v2042 = vpow.pop %v2041
  %v2043 = vsub.f32 %v1941, %v1845
  %v2044 = vsub.f32 %v1944, %v1848
  %v2045 = vsub.f32 %v1947, %v1851
  %v2046 = vsub.f32 %v1950, %v1854
  %v2047 = vmul.f32 %v2043, 1.442695
  %v2048 = vpow.pop %v2047
  %v2049 = vmul.f32 %v2044, 1.442695
  %v2050 = vpow.pop %v2049
  %v2051 = vmul.f32 %v2045, 1.442695
  %v2052 = vpow.pop %v2051
  %v2053 = vmul.f32 %v2046, 1.442695
  %v2054 = vpow.pop %v2053
  %v2055 = vadd.f32 %v2036, %v2048
  %v2056 = vadd.f32 %v2038, %v2050
  %v2057 = vadd.f32 %v2040, %v2052
  %v2058 = vadd.f32 %v2042, %v2054
  %v2059 = vrcp.pop %v2055
  %v2060 = vrcp.pop %v2056
  %v2061 = vrcp.pop %v2057
  %v2062 = vrcp.pop %v2058
  %v2063 = vmul.f32 %v2036, %v2059
  %v2064 = vmul.f32 %v2038, %v2060
  %v2065 = vmul.f32 %v2040, %v2061
  %v2066 = vmul.f32 %v2042, %v2062
  %v2067 = vmul.f32 %v1931, %v2063
  %v2068 = vmul.f32 %v1932, %v2064
  %v2069 = vmul.f32 %v1933, %v2065
  %v2070 = vmul.f32 %v1934, %v2066
  %v2071 = vadd.f32 %v2067, 0.0
  %v2072 = vadd.f32 %v2068, 0.0
  %v2073 = vadd.f32 %v2069, 0.0
  %v2074 = vadd.f32 %v2070, 0.0
  %v2075 = vmul.f32 %v2048, %v2059
  %v2076 = vmul.f32 %v2050, %v2060
  %v2077 = vmul.f32 %v2052, %v2061
  %v2078 = vmul.f32 %v2054, %v2062
  %v2079 = vmul.f32 %v2027, %v2075
  %v2080 = vmul.f32 %v2028, %v2076
  %v2081 = vmul.f32 %v2029, %v2077
  %v2082 = vmul.f32 %v2030, %v2078
  %v2083 = vadd.f32 %v2071, %v2079
  %v2084 = vadd.f32 %v2072, %v2080
  %v2085 = vadd.f32 %v2073, %v2081
  %v2086 = vadd.f32 %v2074, %v2082
  %v2087 = vld [vmem:[%s4] sm:$0xff]
  %v2088 = vld [vmem:[%s4 + $0x8] sm:$0xff]
  %v2089 = vld [vmem:[%s4 + $0x10] sm:$0xff]
  %v2090 = vld [vmem:[%s4 + $0x18] sm:$0xff]
  %2091 = vmatprep.subr.mxu0 0.0
  %2092 = vmatpush1.msra.mxu0 0.0
  %2093 = vmatprep.subr.mxu0 0.0
  %2094 = vmatpush1.msra.mxu0 0.0
  %2095 = vmatprep.subr.mxu0 0.0
  %2096 = vmatpush1.msra.mxu0 0.0
  %2097 = vmatprep.subr.mxu0 0.0
  %2098 = vmatpush1.msra.mxu0 0.0
  %2099 = vmatprep.subr.mxu0 0.0
  %2100 = vmatpush1.msra.mxu0 0.0
  %2101 = vmatprep.subr.mxu0 0.0
  %2102 = vmatpush1.msra.mxu0 0.0
  %2103 = vmatprep.subr.mxu0 0.0
  %2104 = vmatpush1.msra.mxu0 0.0
  %2105 = vmatprep.subr.mxu0 0.0
  %2106 = vmatpush1.msra.mxu0 0.0
  %2107 = vmatprep.subr.mxu0 0.0
  %2108 = vmatpush1.msra.mxu0 0.0
  %2109 = vmatprep.subr.mxu0 0.0
  %2110 = vmatpush1.msra.mxu0 0.0
  %2111 = vmatprep.subr.mxu0 0.0
  %2112 = vmatpush1.msra.mxu0 0.0
  %2113 = vmatprep.subr.mxu0 0.0
  %2114 = vmatpush1.msra.mxu0 0.0
  %2115 = vmatprep.subr.mxu0 0.0
  %2116 = vmatpush1.msra.mxu0 %v2090
  %2117 = vmatprep.subr.mxu0 0.0
  %2118 = vmatpush1.msra.mxu0 %v2089
  %2119 = vmatprep.subr.mxu0 0.0
  %2120 = vmatpush1.msra.mxu0 %v2088
  %2121 = vmatprep.subr.mxu0 0.0
  %2122 = vmatpush1.msra.mxu0 %v2087
  %2123 = vmatprep.subr.mxu0 0.0
  %2124 = vmatpush2.msra.mxu0 0.0
  %2125 = vmatprep.subr.mxu0 0.0
  %2126 = vmatpush2.msra.mxu0 0.0
  %2127 = vmatprep.subr.mxu0 0.0
  %2128 = vmatpush2.msra.mxu0 0.0
  %2129 = vmatprep.subr.mxu0 0.0
  %2130 = vmatpush2.msra.mxu0 0.0
  %2131 = vmatprep.subr.mxu0 0.0
  %2132 = vmatpush2.msra.mxu0 0.0
  %2133 = vmatprep.subr.mxu0 0.0
  %2134 = vmatpush2.msra.mxu0 0.0
  %2135 = vmatprep.subr.mxu0 0.0
  %2136 = vmatpush2.msra.mxu0 0.0
  %2137 = vmatprep.subr.mxu0 0.0
  %2138 = vmatpush2.msra.mxu0 0.0
  %2139 = vmatprep.subr.mxu0 0.0
  %2140 = vmatpush2.msra.mxu0 0.0
  %2141 = vmatprep.subr.mxu0 0.0
  %2142 = vmatpush2.msra.mxu0 0.0
  %2143 = vmatprep.subr.mxu0 0.0
  %2144 = vmatpush2.msra.mxu0 0.0
  %2145 = vmatprep.subr.mxu0 0.0
  %2146 = vmatpush2.msra.mxu0 0.0
  %2147 = vmatprep.subr.mxu0 0.0
  %2148 = vmatpush2.msra.mxu0 0.0
  %2149 = vmatprep.subr.mxu0 0.0
  %2150 = vmatpush2.msra.mxu0 0.0
  %2151 = vmatprep.subr.mxu0 0.0
  %2152 = vmatpush2.msra.mxu0 0.0
  %2153 = vmatprep.subr.mxu0 0.0
  %2154 = vmatpush2.msra.mxu0 0.0
  %2155 = vmatprep.mubr.f32.mxu0 0.0
  %2156 = vmatmul.mubr.f32.gmra.mxu0 %v1465
  %v2157 = vpop.f32.mrf.mxu0
  %v2158 = vadd.f32 0.0, %v2157
  %v2159 = vpop.f32.mrf.mxu0
  %2160 = vmatprep.mubr.f32.mxu0 0.0
  %2161 = vmatmul.mubr.f32.gmra.mxu0 %v1468
  %v2162 = vpop.f32.mrf.mxu0
  %v2163 = vadd.f32 0.0, %v2162
  %v2164 = vpop.f32.mrf.mxu0
  %2165 = vmatprep.mubr.f32.mxu0 0.0
  %2166 = vmatmul.mubr.f32.gmra.mxu0 %v1471
  %v2167 = vpop.f32.mrf.mxu0
  %v2168 = vadd.f32 0.0, %v2167
  %v2169 = vpop.f32.mrf.mxu0
  %2170 = vmatprep.mubr.f32.mxu0 0.0
  %2171 = vmatmul.mubr.f32.gmra.mxu0 %v1474
  %v2172 = vpop.f32.mrf.mxu0
  %v2173 = vadd.f32 0.0, %v2172
  %v2174 = vpop.f32.mrf.mxu0
  %2175 = vdwg.mxu0
  %v2176 = vmul.f32 %v2158, 0.125
  %v2177 = vmul.f32 %v2163, 0.125
  %v2178 = vmul.f32 %v2168, 0.125
  %v2179 = vmul.f32 %v2173, 0.125
  %v2180 = vld [vmem:[%s4 + $0x20] sm:$0xff]
  %v2181 = vld [vmem:[%s4 + $0x28] sm:$0xff]
  %v2182 = vld [vmem:[%s4 + $0x30] sm:$0xff]
  %v2183 = vld [vmem:[%s4 + $0x38] sm:$0xff]
  %v2185 = vsel %vm41, %v1451, 0
  %v2188 = vsel %vm41, %v1452, 0
  %v2191 = vsel %vm41, %v1453, 0
  %v2194 = vsel %vm41, %v1454, 0
  %2196 = vmatprep.subr.mxu0 0.0
  %2197 = vmatpush1.msra.mxu0 0.0
  %2198 = vmatprep.subr.mxu0 0.0
  %2199 = vmatpush1.msra.mxu0 0.0
  %2200 = vmatprep.subr.mxu0 0.0
  %2201 = vmatpush1.msra.mxu0 0.0
  %2202 = vmatprep.subr.mxu0 0.0
  %2203 = vmatpush1.msra.mxu0 0.0
  %2204 = vmatprep.subr.mxu0 0.0
  %2205 = vmatpush1.msra.mxu0 0.0
  %2206 = vmatprep.subr.mxu0 0.0
  %2207 = vmatpush1.msra.mxu0 0.0
  %2208 = vmatprep.subr.mxu0 0.0
  %2209 = vmatpush1.msra.mxu0 0.0
  %2210 = vmatprep.subr.mxu0 0.0
  %2211 = vmatpush1.msra.mxu0 0.0
  %2212 = vmatprep.subr.mxu0 0.0
  %2213 = vmatpush1.msra.mxu0 0.0
  %2214 = vmatprep.subr.mxu0 0.0
  %2215 = vmatpush1.msra.mxu0 0.0
  %2216 = vmatprep.subr.mxu0 0.0
  %2217 = vmatpush1.msra.mxu0 0.0
  %2218 = vmatprep.subr.mxu0 0.0
  %2219 = vmatpush1.msra.mxu0 0.0
  %2220 = vmatprep.subr.mxu0 0.0
  %2221 = vmatpush1.msra.mxu0 %v2183
  %2222 = vmatprep.subr.mxu0 0.0
  %2223 = vmatpush1.msra.mxu0 %v2182
  %2224 = vmatprep.subr.mxu0 0.0
  %2225 = vmatpush1.msra.mxu0 %v2181
  %2226 = vmatprep.subr.mxu0 0.0
  %2227 = vmatpush1.msra.mxu0 %v2180
  %2228 = vmatprep.subr.mxu0 0.0
  %2229 = vmatpush2.msra.mxu0 0.0
  %2230 = vmatprep.subr.mxu0 0.0
  %2231 = vmatpush2.msra.mxu0 0.0
  %2232 = vmatprep.subr.mxu0 0.0
  %2233 = vmatpush2.msra.mxu0 0.0
  %2234 = vmatprep.subr.mxu0 0.0
  %2235 = vmatpush2.msra.mxu0 0.0
  %2236 = vmatprep.subr.mxu0 0.0
  %2237 = vmatpush2.msra.mxu0 0.0
  %2238 = vmatprep.subr.mxu0 0.0
  %2239 = vmatpush2.msra.mxu0 0.0
  %2240 = vmatprep.subr.mxu0 0.0
  %2241 = vmatpush2.msra.mxu0 0.0
  %2242 = vmatprep.subr.mxu0 0.0
  %2243 = vmatpush2.msra.mxu0 0.0
  %2244 = vmatprep.subr.mxu0 0.0
  %2245 = vmatpush2.msra.mxu0 0.0
  %2246 = vmatprep.subr.mxu0 0.0
  %2247 = vmatpush2.msra.mxu0 0.0
  %2248 = vmatprep.subr.mxu0 0.0
  %2249 = vmatpush2.msra.mxu0 0.0
  %2250 = vmatprep.subr.mxu0 0.0
  %2251 = vmatpush2.msra.mxu0 0.0
  %2252 = vmatprep.subr.mxu0 0.0
  %2253 = vmatpush2.msra.mxu0 0.0
  %2254 = vmatprep.subr.mxu0 0.0
  %2255 = vmatpush2.msra.mxu0 0.0
  %2256 = vmatprep.subr.mxu0 0.0
  %2257 = vmatpush2.msra.mxu0 0.0
  %2258 = vmatprep.subr.mxu0 0.0
  %2259 = vmatpush2.msra.mxu0 0.0
  %2260 = vmatprep.mubr.f32.mxu0 0.0
  %2261 = vmatmul.mubr.f32.gmra.mxu0 %v2185
  %v2262 = vpop.f32.mrf.mxu0
  %v2263 = vadd.f32 0.0, %v2262
  %v2264 = vpop.f32.mrf.mxu0
  %2265 = vmatprep.mubr.f32.mxu0 0.0
  %2266 = vmatmul.mubr.f32.gmra.mxu0 %v2188
  %v2267 = vpop.f32.mrf.mxu0
  %v2268 = vadd.f32 0.0, %v2267
  %v2269 = vpop.f32.mrf.mxu0
  %2270 = vmatprep.mubr.f32.mxu0 0.0
  %2271 = vmatmul.mubr.f32.gmra.mxu0 %v2191
  %v2272 = vpop.f32.mrf.mxu0
  %v2273 = vadd.f32 0.0, %v2272
  %v2274 = vpop.f32.mrf.mxu0
  %2275 = vmatprep.mubr.f32.mxu0 0.0
  %2276 = vmatmul.mubr.f32.gmra.mxu0 %v2194
  %v2277 = vpop.f32.mrf.mxu0
  %v2278 = vadd.f32 0.0, %v2277
  %v2279 = vpop.f32.mrf.mxu0
  %2280 = vdwg.mxu0
  %v2281 = vld [vmem:[%s4 + $0x40] sm:$0xff]
  %v2282 = vld [vmem:[%s4 + $0x48] sm:$0xff]
  %v2283 = vld [vmem:[%s4 + $0x50] sm:$0xff]
  %v2284 = vld [vmem:[%s4 + $0x58] sm:$0xff]
  %2285 = vmatprep.subr.mxu0 0.0
  %2286 = vmatpush1.msra.mxu0 0.0
  %2287 = vmatprep.subr.mxu0 0.0
  %2288 = vmatpush1.msra.mxu0 0.0
  %2289 = vmatprep.subr.mxu0 0.0
  %2290 = vmatpush1.msra.mxu0 0.0
  %2291 = vmatprep.subr.mxu0 0.0
  %2292 = vmatpush1.msra.mxu0 0.0
  %2293 = vmatprep.subr.mxu0 0.0
  %2294 = vmatpush1.msra.mxu0 0.0
  %2295 = vmatprep.subr.mxu0 0.0
  %2296 = vmatpush1.msra.mxu0 0.0
  %2297 = vmatprep.subr.mxu0 0.0
  %2298 = vmatpush1.msra.mxu0 0.0
  %2299 = vmatprep.subr.mxu0 0.0
  %2300 = vmatpush1.msra.mxu0 0.0
  %2301 = vmatprep.subr.mxu0 0.0
  %2302 = vmatpush1.msra.mxu0 0.0
  %2303 = vmatprep.subr.mxu0 0.0
  %2304 = vmatpush1.msra.mxu0 0.0
  %2305 = vmatprep.subr.mxu0 0.0
  %2306 = vmatpush1.msra.mxu0 0.0
  %2307 = vmatprep.subr.mxu0 0.0
  %2308 = vmatpush1.msra.mxu0 0.0
  %2309 = vmatprep.subr.mxu0 0.0
  %2310 = vmatpush1.msra.mxu0 %v2284
  %2311 = vmatprep.subr.mxu0 0.0
  %2312 = vmatpush1.msra.mxu0 %v2283
  %2313 = vmatprep.subr.mxu0 0.0
  %2314 = vmatpush1.msra.mxu0 %v2282
  %2315 = vmatprep.subr.mxu0 0.0
  %2316 = vmatpush1.msra.mxu0 %v2281
  %2317 = vmatprep.subr.mxu0 0.0
  %2318 = vmatpush2.msra.mxu0 0.0
  %2319 = vmatprep.subr.mxu0 0.0
  %2320 = vmatpush2.msra.mxu0 0.0
  %2321 = vmatprep.subr.mxu0 0.0
  %2322 = vmatpush2.msra.mxu0 0.0
  %2323 = vmatprep.subr.mxu0 0.0
  %2324 = vmatpush2.msra.mxu0 0.0
  %2325 = vmatprep.subr.mxu0 0.0
  %2326 = vmatpush2.msra.mxu0 0.0
  %2327 = vmatprep.subr.mxu0 0.0
  %2328 = vmatpush2.msra.mxu0 0.0
  %2329 = vmatprep.subr.mxu0 0.0
  %2330 = vmatpush2.msra.mxu0 0.0
  %2331 = vmatprep.subr.mxu0 0.0
  %2332 = vmatpush2.msra.mxu0 0.0
  %2333 = vmatprep.subr.mxu0 0.0
  %2334 = vmatpush2.msra.mxu0 0.0
  %2335 = vmatprep.subr.mxu0 0.0
  %2336 = vmatpush2.msra.mxu0 0.0
  %2337 = vmatprep.subr.mxu0 0.0
  %2338 = vmatpush2.msra.mxu0 0.0
  %2339 = vmatprep.subr.mxu0 0.0
  %2340 = vmatpush2.msra.mxu0 0.0
  %2341 = vmatprep.subr.mxu0 0.0
  %2342 = vmatpush2.msra.mxu0 0.0
  %2343 = vmatprep.subr.mxu0 0.0
  %2344 = vmatpush2.msra.mxu0 0.0
  %2345 = vmatprep.subr.mxu0 0.0
  %2346 = vmatpush2.msra.mxu0 0.0
  %2347 = vmatprep.subr.mxu0 0.0
  %2348 = vmatpush2.msra.mxu0 0.0
  %2349 = vmatprep.mubr.f32.mxu0 0.0
  %2350 = vmatmul.mubr.f32.gmra.mxu0 %v2185
  %v2351 = vpop.f32.mrf.mxu0
  %v2352 = vadd.f32 0.0, %v2351
  %v2353 = vpop.f32.mrf.mxu0
  %2354 = vmatprep.mubr.f32.mxu0 0.0
  %2355 = vmatmul.mubr.f32.gmra.mxu0 %v2188
  %v2356 = vpop.f32.mrf.mxu0
  %v2357 = vadd.f32 0.0, %v2356
  %v2358 = vpop.f32.mrf.mxu0
  %2359 = vmatprep.mubr.f32.mxu0 0.0
  %2360 = vmatmul.mubr.f32.gmra.mxu0 %v2191
  %v2361 = vpop.f32.mrf.mxu0
  %v2362 = vadd.f32 0.0, %v2361
  %v2363 = vpop.f32.mrf.mxu0
  %2364 = vmatprep.mubr.f32.mxu0 0.0
  %2365 = vmatmul.mubr.f32.gmra.mxu0 %v2194
  %v2366 = vpop.f32.mrf.mxu0
  %v2367 = vadd.f32 0.0, %v2366
  %v2368 = vpop.f32.mrf.mxu0
  %2369 = vdwg.mxu0
  %vm2370 = vcmask 523264
  %v2372 = vsel %vm2370, %v2176, 0
  %v2375 = vsel %vm2370, %v2177, 0
  %v2378 = vsel %vm2370, %v2178, 0
  %v2381 = vsel %vm2370, %v2179, 0
  %v2384 = vsel %vm2370, %v2263, 0
  %v2387 = vsel %vm2370, %v2268, 0
  %v2390 = vsel %vm2370, %v2273, 0
  %v2393 = vsel %vm2370, %v2278, 0
  %2395 = vmatprep.subr.mxu0 0.0
  %2396 = vmatpush1.xpose.msra.mxu0 0.0
  %2397 = vmatprep.subr.mxu0 0.0
  %2398 = vmatpush1.xpose.msra.mxu0 0.0
  %2399 = vmatprep.subr.mxu0 0.0
  %2400 = vmatpush1.xpose.msra.mxu0 0.0
  %2401 = vmatprep.subr.mxu0 0.0
  %2402 = vmatpush1.xpose.msra.mxu0 0.0
  %2403 = vmatprep.subr.mxu0 0.0
  %2404 = vmatpush1.xpose.msra.mxu0 0.0
  %2405 = vmatprep.subr.mxu0 0.0
  %2406 = vmatpush1.xpose.msra.mxu0 0.0
  %2407 = vmatprep.subr.mxu0 0.0
  %2408 = vmatpush1.xpose.msra.mxu0 0.0
  %2409 = vmatprep.subr.mxu0 0.0
  %2410 = vmatpush1.xpose.msra.mxu0 0.0
  %2411 = vmatprep.subr.mxu0 0.0
  %2412 = vmatpush1.xpose.msra.mxu0 0.0
  %2413 = vmatprep.subr.mxu0 0.0
  %2414 = vmatpush1.xpose.msra.mxu0 0.0
  %2415 = vmatprep.subr.mxu0 0.0
  %2416 = vmatpush1.xpose.msra.mxu0 0.0
  %2417 = vmatprep.subr.mxu0 0.0
  %2418 = vmatpush1.xpose.msra.mxu0 0.0
  %2419 = vmatprep.subr.mxu0 0.0
  %2420 = vmatpush1.xpose.msra.mxu0 %v2393
  %2421 = vmatprep.subr.mxu0 0.0
  %2422 = vmatpush1.xpose.msra.mxu0 %v2390
  %2423 = vmatprep.subr.mxu0 0.0
  %2424 = vmatpush1.xpose.msra.mxu0 %v2387
  %2425 = vmatprep.subr.mxu0 0.0
  %2426 = vmatpush1.xpose.msra.mxu0 %v2384
  %2427 = vmatprep.subr.mxu0 0.0
  %2428 = vmatpush2.xpose.msra.mxu0 0.0
  %2429 = vmatprep.subr.mxu0 0.0
  %2430 = vmatpush2.xpose.msra.mxu0 0.0
  %2431 = vmatprep.subr.mxu0 0.0
  %2432 = vmatpush2.xpose.msra.mxu0 0.0
  %2433 = vmatprep.subr.mxu0 0.0
  %2434 = vmatpush2.xpose.msra.mxu0 0.0
  %2435 = vmatprep.subr.mxu0 0.0
  %2436 = vmatpush2.xpose.msra.mxu0 0.0
  %2437 = vmatprep.subr.mxu0 0.0
  %2438 = vmatpush2.xpose.msra.mxu0 0.0
  %2439 = vmatprep.subr.mxu0 0.0
  %2440 = vmatpush2.xpose.msra.mxu0 0.0
  %2441 = vmatprep.subr.mxu0 0.0
  %2442 = vmatpush2.xpose.msra.mxu0 0.0
  %2443 = vmatprep.subr.mxu0 0.0
  %2444 = vmatpush2.xpose.msra.mxu0 0.0
  %2445 = vmatprep.subr.mxu0 0.0
  %2446 = vmatpush2.xpose.msra.mxu0 0.0
  %2447 = vmatprep.subr.mxu0 0.0
  %2448 = vmatpush2.xpose.msra.mxu0 0.0
  %2449 = vmatprep.subr.mxu0 0.0
  %2450 = vmatpush2.xpose.msra.mxu0 0.0
  %2451 = vmatprep.subr.mxu0 0.0
  %2452 = vmatpush2.xpose.msra.mxu0 0.0
  %2453 = vmatprep.subr.mxu0 0.0
  %2454 = vmatpush2.xpose.msra.mxu0 0.0
  %2455 = vmatprep.subr.mxu0 0.0
  %2456 = vmatpush2.xpose.msra.mxu0 0.0
  %2457 = vmatprep.subr.mxu0 0.0
  %2458 = vmatpush2.xpose.msra.mxu0 0.0
  %2459 = vmatprep.mubr.f32.mxu0 0.0
  %2460 = vmatmul.mubr.f32.gmra.mxu0 %v2372
  %v2461 = vpop.f32.mrf.mxu0
  %v2462 = vadd.f32 %v35, %v2461
  %v2463 = vpop.f32.mrf.mxu0
  %2464 = vmatprep.mubr.f32.mxu0 0.0
  %2465 = vmatmul.mubr.f32.gmra.mxu0 %v2375
  %v2466 = vpop.f32.mrf.mxu0
  %v2467 = vadd.f32 %v36, %v2466
  %v2468 = vpop.f32.mrf.mxu0
  %2469 = vmatprep.mubr.f32.mxu0 0.0
  %2470 = vmatmul.mubr.f32.gmra.mxu0 %v2378
  %v2471 = vpop.f32.mrf.mxu0
  %v2472 = vadd.f32 %v37, %v2471
  %v2473 = vpop.f32.mrf.mxu0
  %2474 = vmatprep.mubr.f32.mxu0 0.0
  %2475 = vmatmul.mubr.f32.gmra.mxu0 %v2381
  %v2476 = vpop.f32.mrf.mxu0
  %v2477 = vadd.f32 %v38, %v2476
  %v2478 = vpop.f32.mrf.mxu0
  %2479 = vdwg.mxu0
  %v2480 = vsel %vm41, %v2462, -inf
  %2481 = vmax.xlane.f32.xlu0 %v2480
  %v2482 = vpop.xlane.xlu0 %2481
  %v2483 = vsel %vm41, %v2467, -inf
  %2484 = vmax.xlane.f32.xlu0 %v2483
  %v2485 = vpop.xlane.xlu0 %2484
  %v2486 = vsel %vm41, %v2472, -inf
  %2487 = vmax.xlane.f32.xlu0 %v2486
  %v2488 = vpop.xlane.xlu0 %2487
  %v2489 = vsel %vm41, %v2477, -inf
  %2490 = vmax.xlane.f32.xlu0 %v2489
  %v2491 = vpop.xlane.xlu0 %2490
  %v2492 = vsub.f32 %v2462, %v2482
  %v2493 = vsub.f32 %v2467, %v2485
  %v2494 = vsub.f32 %v2472, %v2488
  %v2495 = vsub.f32 %v2477, %v2491
  %v2496 = vmul.f32 %v2492, 1.442695
  %v2497 = vpow.pop %v2496
  %v2498 = vmul.f32 %v2493, 1.442695
  %v2499 = vpow.pop %v2498
  %v2500 = vmul.f32 %v2494, 1.442695
  %v2501 = vpow.pop %v2500
  %v2502 = vmul.f32 %v2495, 1.442695
  %v2503 = vpow.pop %v2502
  %v2505 = vsel %vm41, %v2497, 0
  %v2508 = vsel %vm41, %v2499, 0
  %v2511 = vsel %vm41, %v2501, 0
  %v2514 = vsel %vm41, %v2503, 0
  %v2517 = vsel %vm41, %v39, 0
  %2519 = vmatprep.subr.mxu0 0.0
  %2520 = vmatpush1.xpose.msra.mxu0 0.0
  %2521 = vmatprep.subr.mxu0 0.0
  %2522 = vmatpush1.xpose.msra.mxu0 0.0
  %2523 = vmatprep.subr.mxu0 0.0
  %2524 = vmatpush1.xpose.msra.mxu0 0.0
  %2525 = vmatprep.subr.mxu0 0.0
  %2526 = vmatpush1.xpose.msra.mxu0 0.0
  %2527 = vmatprep.subr.mxu0 0.0
  %2528 = vmatpush1.xpose.msra.mxu0 0.0
  %2529 = vmatprep.subr.mxu0 0.0
  %2530 = vmatpush1.xpose.msra.mxu0 0.0
  %2531 = vmatprep.subr.mxu0 0.0
  %2532 = vmatpush1.xpose.msra.mxu0 0.0
  %2533 = vmatprep.subr.mxu0 0.0
  %2534 = vmatpush1.xpose.msra.mxu0 0.0
  %2535 = vmatprep.subr.mxu0 0.0
  %2536 = vmatpush1.xpose.msra.mxu0 0.0
  %2537 = vmatprep.subr.mxu0 0.0
  %2538 = vmatpush1.xpose.msra.mxu0 0.0
  %2539 = vmatprep.subr.mxu0 0.0
  %2540 = vmatpush1.xpose.msra.mxu0 0.0
  %2541 = vmatprep.subr.mxu0 0.0
  %2542 = vmatpush1.xpose.msra.mxu0 0.0
  %2543 = vmatprep.subr.mxu0 0.0
  %2544 = vmatpush1.xpose.msra.mxu0 0.0
  %2545 = vmatprep.subr.mxu0 0.0
  %2546 = vmatpush1.xpose.msra.mxu0 0.0
  %2547 = vmatprep.subr.mxu0 0.0
  %2548 = vmatpush1.xpose.msra.mxu0 0.0
  %2549 = vmatprep.subr.mxu0 0.0
  %2550 = vmatpush1.xpose.msra.mxu0 %v2517
  %2551 = vmatprep.subr.mxu0 0.0
  %2552 = vmatpush2.xpose.msra.mxu0 0.0
  %2553 = vmatprep.subr.mxu0 0.0
  %2554 = vmatpush2.xpose.msra.mxu0 0.0
  %2555 = vmatprep.subr.mxu0 0.0
  %2556 = vmatpush2.xpose.msra.mxu0 0.0
  %2557 = vmatprep.subr.mxu0 0.0
  %2558 = vmatpush2.xpose.msra.mxu0 0.0
  %2559 = vmatprep.subr.mxu0 0.0
  %2560 = vmatpush2.xpose.msra.mxu0 0.0
  %2561 = vmatprep.subr.mxu0 0.0
  %2562 = vmatpush2.xpose.msra.mxu0 0.0
  %2563 = vmatprep.subr.mxu0 0.0
  %2564 = vmatpush2.xpose.msra.mxu0 0.0
  %2565 = vmatprep.subr.mxu0 0.0
  %2566 = vmatpush2.xpose.msra.mxu0 0.0
  %2567 = vmatprep.subr.mxu0 0.0
  %2568 = vmatpush2.xpose.msra.mxu0 0.0
  %2569 = vmatprep.subr.mxu0 0.0
  %2570 = vmatpush2.xpose.msra.mxu0 0.0
  %2571 = vmatprep.subr.mxu0 0.0
  %2572 = vmatpush2.xpose.msra.mxu0 0.0
  %2573 = vmatprep.subr.mxu0 0.0
  %2574 = vmatpush2.xpose.msra.mxu0 0.0
  %2575 = vmatprep.subr.mxu0 0.0
  %2576 = vmatpush2.xpose.msra.mxu0 0.0
  %2577 = vmatprep.subr.mxu0 0.0
  %2578 = vmatpush2.xpose.msra.mxu0 0.0
  %2579 = vmatprep.subr.mxu0 0.0
  %2580 = vmatpush2.xpose.msra.mxu0 0.0
  %2581 = vmatprep.subr.mxu0 0.0
  %2582 = vmatpush2.xpose.msra.mxu0 0.0
  %2583 = vmatprep.mubr.f32.mxu0 0.0
  %2584 = vmatmul.mubr.f32.gmra.mxu0 %v2505
  %v2585 = vpop.f32.mrf.mxu0
  %v2586 = vadd.f32 0.0, %v2585
  %v2587 = vpop.f32.mrf.mxu0
  %2588 = vmatprep.mubr.f32.mxu0 0.0
  %2589 = vmatmul.mubr.f32.gmra.mxu0 %v2508
  %v2590 = vpop.f32.mrf.mxu0
  %v2591 = vadd.f32 0.0, %v2590
  %v2592 = vpop.f32.mrf.mxu0
  %2593 = vmatprep.mubr.f32.mxu0 0.0
  %2594 = vmatmul.mubr.f32.gmra.mxu0 %v2511
  %v2595 = vpop.f32.mrf.mxu0
  %v2596 = vadd.f32 0.0, %v2595
  %v2597 = vpop.f32.mrf.mxu0
  %2598 = vmatprep.mubr.f32.mxu0 0.0
  %2599 = vmatmul.mubr.f32.gmra.mxu0 %v2514
  %v2600 = vpop.f32.mrf.mxu0
  %v2601 = vadd.f32 0.0, %v2600
  %v2602 = vpop.f32.mrf.mxu0
  %2603 = vdwg.mxu0
  %v2604 = vmax.f32 %v2586, 1e-30
  %v2605 = vmax.f32 %v2591, 1e-30
  %v2606 = vmax.f32 %v2596, 1e-30
  %v2607 = vmax.f32 %v2601, 1e-30
  %v2608 = vrcp.pop %v2604
  %v2609 = vrcp.pop %v2605
  %v2610 = vrcp.pop %v2606
  %v2611 = vrcp.pop %v2607
  %v2612 = vmul.f32 %v2083, %v2608
  %v2613 = vmul.f32 %v2084, %v2609
  %v2614 = vmul.f32 %v2085, %v2610
  %v2615 = vmul.f32 %v2086, %v2611
  %v2617 = vsel %vm1842, %v2612, 0
  %v2620 = vsel %vm1842, %v2613, 0
  %v2623 = vsel %vm1842, %v2614, 0
  %v2626 = vsel %vm1842, %v2615, 0
  %2628 = vmatprep.subr.mxu0 0.0
  %2629 = vmatpush1.msra.mxu0 0.0
  %2630 = vmatprep.subr.mxu0 0.0
  %2631 = vmatpush1.msra.mxu0 0.0
  %2632 = vmatprep.subr.mxu0 0.0
  %2633 = vmatpush1.msra.mxu0 0.0
  %2634 = vmatprep.subr.mxu0 0.0
  %2635 = vmatpush1.msra.mxu0 0.0
  %2636 = vmatprep.subr.mxu0 0.0
  %2637 = vmatpush1.msra.mxu0 0.0
  %2638 = vmatprep.subr.mxu0 0.0
  %2639 = vmatpush1.msra.mxu0 0.0
  %2640 = vmatprep.subr.mxu0 0.0
  %2641 = vmatpush1.msra.mxu0 0.0
  %2642 = vmatprep.subr.mxu0 0.0
  %2643 = vmatpush1.msra.mxu0 0.0
  %2644 = vmatprep.subr.mxu0 0.0
  %2645 = vmatpush1.msra.mxu0 0.0
  %2646 = vmatprep.subr.mxu0 0.0
  %2647 = vmatpush1.msra.mxu0 0.0
  %2648 = vmatprep.subr.mxu0 0.0
  %2649 = vmatpush1.msra.mxu0 0.0
  %2650 = vmatprep.subr.mxu0 0.0
  %2651 = vmatpush1.msra.mxu0 0.0
  %2652 = vmatprep.subr.mxu0 0.0
  %2653 = vmatpush1.msra.mxu0 0.0
  %2654 = vmatprep.subr.mxu0 0.0
  %2655 = vmatpush1.msra.mxu0 0.0
  %2656 = vmatprep.subr.mxu0 0.0
  %2657 = vmatpush1.msra.mxu0 0.0
  %2658 = vmatprep.subr.mxu0 0.0
  %2659 = vmatpush1.msra.mxu0 %v39
  %2660 = vmatprep.subr.mxu0 0.0
  %2661 = vmatpush2.msra.mxu0 0.0
  %2662 = vmatprep.subr.mxu0 0.0
  %2663 = vmatpush2.msra.mxu0 0.0
  %2664 = vmatprep.subr.mxu0 0.0
  %2665 = vmatpush2.msra.mxu0 0.0
  %2666 = vmatprep.subr.mxu0 0.0
  %2667 = vmatpush2.msra.mxu0 0.0
  %2668 = vmatprep.subr.mxu0 0.0
  %2669 = vmatpush2.msra.mxu0 0.0
  %2670 = vmatprep.subr.mxu0 0.0
  %2671 = vmatpush2.msra.mxu0 0.0
  %2672 = vmatprep.subr.mxu0 0.0
  %2673 = vmatpush2.msra.mxu0 0.0
  %2674 = vmatprep.subr.mxu0 0.0
  %2675 = vmatpush2.msra.mxu0 0.0
  %2676 = vmatprep.subr.mxu0 0.0
  %2677 = vmatpush2.msra.mxu0 0.0
  %2678 = vmatprep.subr.mxu0 0.0
  %2679 = vmatpush2.msra.mxu0 0.0
  %2680 = vmatprep.subr.mxu0 0.0
  %2681 = vmatpush2.msra.mxu0 0.0
  %2682 = vmatprep.subr.mxu0 0.0
  %2683 = vmatpush2.msra.mxu0 0.0
  %2684 = vmatprep.subr.mxu0 0.0
  %2685 = vmatpush2.msra.mxu0 0.0
  %2686 = vmatprep.subr.mxu0 0.0
  %2687 = vmatpush2.msra.mxu0 0.0
  %2688 = vmatprep.subr.mxu0 0.0
  %2689 = vmatpush2.msra.mxu0 0.0
  %2690 = vmatprep.subr.mxu0 0.0
  %2691 = vmatpush2.msra.mxu0 0.0
  %2692 = vmatprep.mubr.f32.mxu0 0.0
  %2693 = vmatmul.mubr.f32.gmra.mxu0 %v2617
  %v2694 = vpop.f32.mrf.mxu0
  %v2695 = vadd.f32 0.0, %v2694
  %v2696 = vpop.f32.mrf.mxu0
  %2697 = vmatprep.mubr.f32.mxu0 0.0
  %2698 = vmatmul.mubr.f32.gmra.mxu0 %v2620
  %v2699 = vpop.f32.mrf.mxu0
  %v2700 = vadd.f32 0.0, %v2699
  %v2701 = vpop.f32.mrf.mxu0
  %2702 = vmatprep.mubr.f32.mxu0 0.0
  %2703 = vmatmul.mubr.f32.gmra.mxu0 %v2623
  %v2704 = vpop.f32.mrf.mxu0
  %v2705 = vadd.f32 0.0, %v2704
  %v2706 = vpop.f32.mrf.mxu0
  %2707 = vmatprep.mubr.f32.mxu0 0.0
  %2708 = vmatmul.mubr.f32.gmra.mxu0 %v2626
  %v2709 = vpop.f32.mrf.mxu0
  %v2710 = vadd.f32 0.0, %v2709
  %v2711 = vpop.f32.mrf.mxu0
  %2712 = vdwg.mxu0
  %v2713 = vmul.f32 %v2497, %v2695
  %v2714 = vmul.f32 %v2499, %v2700
  %v2715 = vmul.f32 %v2501, %v2705
  %v2716 = vmul.f32 %v2503, %v2710
  %v2718 = vsel %vm41, %v2713, 0
  %v2721 = vsel %vm41, %v2714, 0
  %v2724 = vsel %vm41, %v2715, 0
  %v2727 = vsel %vm41, %v2716, 0
  %2729 = vmatprep.subr.mxu0 0.0
  %2730 = vmatpush1.msra.mxu0 0.0
  %2731 = vmatprep.subr.mxu0 0.0
  %2732 = vmatpush1.msra.mxu0 0.0
  %2733 = vmatprep.subr.mxu0 0.0
  %2734 = vmatpush1.msra.mxu0 0.0
  %2735 = vmatprep.subr.mxu0 0.0
  %2736 = vmatpush1.msra.mxu0 0.0
  %2737 = vmatprep.subr.mxu0 0.0
  %2738 = vmatpush1.msra.mxu0 0.0
  %2739 = vmatprep.subr.mxu0 0.0
  %2740 = vmatpush1.msra.mxu0 0.0
  %2741 = vmatprep.subr.mxu0 0.0
  %2742 = vmatpush1.msra.mxu0 0.0
  %2743 = vmatprep.subr.mxu0 0.0
  %2744 = vmatpush1.msra.mxu0 0.0
  %2745 = vmatprep.subr.mxu0 0.0
  %2746 = vmatpush1.msra.mxu0 0.0
  %2747 = vmatprep.subr.mxu0 0.0
  %2748 = vmatpush1.msra.mxu0 0.0
  %2749 = vmatprep.subr.mxu0 0.0
  %2750 = vmatpush1.msra.mxu0 0.0
  %2751 = vmatprep.subr.mxu0 0.0
  %2752 = vmatpush1.msra.mxu0 0.0
  %2753 = vmatprep.subr.mxu0 0.0
  %2754 = vmatpush1.msra.mxu0 %v2367
  %2755 = vmatprep.subr.mxu0 0.0
  %2756 = vmatpush1.msra.mxu0 %v2362
  %2757 = vmatprep.subr.mxu0 0.0
  %2758 = vmatpush1.msra.mxu0 %v2357
  %2759 = vmatprep.subr.mxu0 0.0
  %2760 = vmatpush1.msra.mxu0 %v2352
  %2761 = vmatprep.subr.mxu0 0.0
  %2762 = vmatpush2.msra.mxu0 0.0
  %2763 = vmatprep.subr.mxu0 0.0
  %2764 = vmatpush2.msra.mxu0 0.0
  %2765 = vmatprep.subr.mxu0 0.0
  %2766 = vmatpush2.msra.mxu0 0.0
  %2767 = vmatprep.subr.mxu0 0.0
  %2768 = vmatpush2.msra.mxu0 0.0
  %2769 = vmatprep.subr.mxu0 0.0
  %2770 = vmatpush2.msra.mxu0 0.0
  %2771 = vmatprep.subr.mxu0 0.0
  %2772 = vmatpush2.msra.mxu0 0.0
  %2773 = vmatprep.subr.mxu0 0.0
  %2774 = vmatpush2.msra.mxu0 0.0
  %2775 = vmatprep.subr.mxu0 0.0
  %2776 = vmatpush2.msra.mxu0 0.0
  %2777 = vmatprep.subr.mxu0 0.0
  %2778 = vmatpush2.msra.mxu0 0.0
  %2779 = vmatprep.subr.mxu0 0.0
  %2780 = vmatpush2.msra.mxu0 0.0
  %2781 = vmatprep.subr.mxu0 0.0
  %2782 = vmatpush2.msra.mxu0 0.0
  %2783 = vmatprep.subr.mxu0 0.0
  %2784 = vmatpush2.msra.mxu0 0.0
  %2785 = vmatprep.subr.mxu0 0.0
  %2786 = vmatpush2.msra.mxu0 0.0
  %2787 = vmatprep.subr.mxu0 0.0
  %2788 = vmatpush2.msra.mxu0 0.0
  %2789 = vmatprep.subr.mxu0 0.0
  %2790 = vmatpush2.msra.mxu0 0.0
  %2791 = vmatprep.subr.mxu0 0.0
  %2792 = vmatpush2.msra.mxu0 0.0
  %2793 = vmatprep.mubr.f32.mxu0 0.0
  %2794 = vmatmul.mubr.f32.gmra.mxu0 %v2718
  %v2795 = vpop.f32.mrf.mxu0
  %v2796 = vadd.f32 0.0, %v2795
  %v2797 = vpop.f32.mrf.mxu0
  %2798 = vmatprep.mubr.f32.mxu0 0.0
  %2799 = vmatmul.mubr.f32.gmra.mxu0 %v2721
  %v2800 = vpop.f32.mrf.mxu0
  %v2801 = vadd.f32 0.0, %v2800
  %v2802 = vpop.f32.mrf.mxu0
  %2803 = vmatprep.mubr.f32.mxu0 0.0
  %2804 = vmatmul.mubr.f32.gmra.mxu0 %v2724
  %v2805 = vpop.f32.mrf.mxu0
  %v2806 = vadd.f32 0.0, %v2805
  %v2807 = vpop.f32.mrf.mxu0
  %2808 = vmatprep.mubr.f32.mxu0 0.0
  %2809 = vmatmul.mubr.f32.gmra.mxu0 %v2727
  %v2810 = vpop.f32.mrf.mxu0
  %v2811 = vadd.f32 0.0, %v2810
  %v2812 = vpop.f32.mrf.mxu0
  %2813 = vdwg.mxu0
  %v2814 = vld [vmem:[%s3 + $0x140] sm:$0xff]
  %v2815 = vld [vmem:[%s3 + $0x148] sm:$0xff]
  %v2816 = vld [vmem:[%s3 + $0x150] sm:$0xff]
  %v2817 = vld [vmem:[%s3 + $0x158] sm:$0xff]
  %v2818 = vld [vmem:[%s3 + $0x160] sm:$0xff]
  %v2819 = vld [vmem:[%s3 + $0x168] sm:$0xff]
  %v2820 = vld [vmem:[%s3 + $0x170] sm:$0xff]
  %v2821 = vld [vmem:[%s3 + $0x178] sm:$0xff]
  %2822 = vrot.lane.b32.xlu0 %v2176, 64
  %v2823 = vpop.permute.xlu0 %2822
  %2824 = vrot.lane.b32.xlu0 %v2177, 64
  %v2825 = vpop.permute.xlu0 %2824
  %2826 = vrot.lane.b32.xlu0 %v2178, 64
  %v2827 = vpop.permute.xlu0 %2826
  %2828 = vrot.lane.b32.xlu0 %v2179, 64
  %v2829 = vpop.permute.xlu0 %2828
  %2830 = vrot.lane.b32.xlu0 %v2263, 64
  %v2831 = vpop.permute.xlu0 %2830
  %2832 = vrot.lane.b32.xlu0 %v2268, 64
  %v2833 = vpop.permute.xlu0 %2832
  %2834 = vrot.lane.b32.xlu0 %v2273, 64
  %v2835 = vpop.permute.xlu0 %2834
  %2836 = vrot.lane.b32.xlu0 %v2278, 64
  %v2837 = vpop.permute.xlu0 %2836
  %v2838 = vsel %vm2370, %v2823, 0
  %v2840 = vsel %vm2370, %v2825, 0
  %v2842 = vsel %vm2370, %v2827, 0
  %v2844 = vsel %vm2370, %v2829, 0
  %v2846 = vsel %vm2370, %v2831, 0
  %v2848 = vsel %vm2370, %v2833, 0
  %v2850 = vsel %vm2370, %v2835, 0
  %v2852 = vsel %vm2370, %v2837, 0
  %2854 = vmatprep.subr.mxu0 0.0
  %2855 = vmatpush1.xpose.msra.mxu0 0.0
  %2856 = vmatprep.subr.mxu0 0.0
  %2857 = vmatpush1.xpose.msra.mxu0 0.0
  %2858 = vmatprep.subr.mxu0 0.0
  %2859 = vmatpush1.xpose.msra.mxu0 0.0
  %2860 = vmatprep.subr.mxu0 0.0
  %2861 = vmatpush1.xpose.msra.mxu0 0.0
  %2862 = vmatprep.subr.mxu0 0.0
  %2863 = vmatpush1.xpose.msra.mxu0 0.0
  %2864 = vmatprep.subr.mxu0 0.0
  %2865 = vmatpush1.xpose.msra.mxu0 0.0
  %2866 = vmatprep.subr.mxu0 0.0
  %2867 = vmatpush1.xpose.msra.mxu0 0.0
  %2868 = vmatprep.subr.mxu0 0.0
  %2869 = vmatpush1.xpose.msra.mxu0 0.0
  %2870 = vmatprep.subr.mxu0 0.0
  %2871 = vmatpush1.xpose.msra.mxu0 0.0
  %2872 = vmatprep.subr.mxu0 0.0
  %2873 = vmatpush1.xpose.msra.mxu0 0.0
  %2874 = vmatprep.subr.mxu0 0.0
  %2875 = vmatpush1.xpose.msra.mxu0 0.0
  %2876 = vmatprep.subr.mxu0 0.0
  %2877 = vmatpush1.xpose.msra.mxu0 0.0
  %2878 = vmatprep.subr.mxu0 0.0
  %2879 = vmatpush1.xpose.msra.mxu0 %v2852
  %2880 = vmatprep.subr.mxu0 0.0
  %2881 = vmatpush1.xpose.msra.mxu0 %v2850
  %2882 = vmatprep.subr.mxu0 0.0
  %2883 = vmatpush1.xpose.msra.mxu0 %v2848
  %2884 = vmatprep.subr.mxu0 0.0
  %2885 = vmatpush1.xpose.msra.mxu0 %v2846
  %2886 = vmatprep.subr.mxu0 0.0
  %2887 = vmatpush2.xpose.msra.mxu0 0.0
  %2888 = vmatprep.subr.mxu0 0.0
  %2889 = vmatpush2.xpose.msra.mxu0 0.0
  %2890 = vmatprep.subr.mxu0 0.0
  %2891 = vmatpush2.xpose.msra.mxu0 0.0
  %2892 = vmatprep.subr.mxu0 0.0
  %2893 = vmatpush2.xpose.msra.mxu0 0.0
  %2894 = vmatprep.subr.mxu0 0.0
  %2895 = vmatpush2.xpose.msra.mxu0 0.0
  %2896 = vmatprep.subr.mxu0 0.0
  %2897 = vmatpush2.xpose.msra.mxu0 0.0
  %2898 = vmatprep.subr.mxu0 0.0
  %2899 = vmatpush2.xpose.msra.mxu0 0.0
  %2900 = vmatprep.subr.mxu0 0.0
  %2901 = vmatpush2.xpose.msra.mxu0 0.0
  %2902 = vmatprep.subr.mxu0 0.0
  %2903 = vmatpush2.xpose.msra.mxu0 0.0
  %2904 = vmatprep.subr.mxu0 0.0
  %2905 = vmatpush2.xpose.msra.mxu0 0.0
  %2906 = vmatprep.subr.mxu0 0.0
  %2907 = vmatpush2.xpose.msra.mxu0 0.0
  %2908 = vmatprep.subr.mxu0 0.0
  %2909 = vmatpush2.xpose.msra.mxu0 0.0
  %2910 = vmatprep.subr.mxu0 0.0
  %2911 = vmatpush2.xpose.msra.mxu0 0.0
  %2912 = vmatprep.subr.mxu0 0.0
  %2913 = vmatpush2.xpose.msra.mxu0 0.0
  %2914 = vmatprep.subr.mxu0 0.0
  %2915 = vmatpush2.xpose.msra.mxu0 0.0
  %2916 = vmatprep.subr.mxu0 0.0
  %2917 = vmatpush2.xpose.msra.mxu0 0.0
  %2918 = vmatprep.mubr.f32.mxu0 0.0
  %2919 = vmatmul.mubr.f32.gmra.mxu0 %v2838
  %v2920 = vpop.f32.mrf.mxu0
  %v2921 = vadd.f32 %v35, %v2920
  %v2922 = vpop.f32.mrf.mxu0
  %2923 = vmatprep.mubr.f32.mxu0 0.0
  %2924 = vmatmul.mubr.f32.gmra.mxu0 %v2840
  %v2925 = vpop.f32.mrf.mxu0
  %v2926 = vadd.f32 %v36, %v2925
  %v2927 = vpop.f32.mrf.mxu0
  %2928 = vmatprep.mubr.f32.mxu0 0.0
  %2929 = vmatmul.mubr.f32.gmra.mxu0 %v2842
  %v2930 = vpop.f32.mrf.mxu0
  %v2931 = vadd.f32 %v37, %v2930
  %v2932 = vpop.f32.mrf.mxu0
  %2933 = vmatprep.mubr.f32.mxu0 0.0
  %2934 = vmatmul.mubr.f32.gmra.mxu0 %v2844
  %v2935 = vpop.f32.mrf.mxu0
  %v2936 = vadd.f32 %v38, %v2935
  %v2937 = vpop.f32.mrf.mxu0
  %2938 = vdwg.mxu0
  %v2939 = vsel %vm41, %v2921, -inf
  %2940 = vmax.xlane.f32.xlu0 %v2939
  %v2941 = vpop.xlane.xlu0 %2940
  %v2942 = vsel %vm41, %v2926, -inf
  %2943 = vmax.xlane.f32.xlu0 %v2942
  %v2944 = vpop.xlane.xlu0 %2943
  %v2945 = vsel %vm41, %v2931, -inf
  %2946 = vmax.xlane.f32.xlu0 %v2945
  %v2947 = vpop.xlane.xlu0 %2946
  %v2948 = vsel %vm41, %v2936, -inf
  %2949 = vmax.xlane.f32.xlu0 %v2948
  %v2950 = vpop.xlane.xlu0 %2949
  %v2951 = vsub.f32 %v2921, %v2941
  %v2952 = vsub.f32 %v2926, %v2944
  %v2953 = vsub.f32 %v2931, %v2947
  %v2954 = vsub.f32 %v2936, %v2950
  %v2955 = vmul.f32 %v2951, 1.442695
  %v2956 = vpow.pop %v2955
  %v2957 = vmul.f32 %v2952, 1.442695
  %v2958 = vpow.pop %v2957
  %v2959 = vmul.f32 %v2953, 1.442695
  %v2960 = vpow.pop %v2959
  %v2961 = vmul.f32 %v2954, 1.442695
  %v2962 = vpow.pop %v2961
  %v2964 = vsel %vm41, %v2956, 0
  %v2967 = vsel %vm41, %v2958, 0
  %v2970 = vsel %vm41, %v2960, 0
  %v2973 = vsel %vm41, %v2962, 0
  %2975 = vmatprep.subr.mxu0 0.0
  %2976 = vmatpush1.xpose.msra.mxu0 0.0
  %2977 = vmatprep.subr.mxu0 0.0
  %2978 = vmatpush1.xpose.msra.mxu0 0.0
  %2979 = vmatprep.subr.mxu0 0.0
  %2980 = vmatpush1.xpose.msra.mxu0 0.0
  %2981 = vmatprep.subr.mxu0 0.0
  %2982 = vmatpush1.xpose.msra.mxu0 0.0
  %2983 = vmatprep.subr.mxu0 0.0
  %2984 = vmatpush1.xpose.msra.mxu0 0.0
  %2985 = vmatprep.subr.mxu0 0.0
  %2986 = vmatpush1.xpose.msra.mxu0 0.0
  %2987 = vmatprep.subr.mxu0 0.0
  %2988 = vmatpush1.xpose.msra.mxu0 0.0
  %2989 = vmatprep.subr.mxu0 0.0
  %2990 = vmatpush1.xpose.msra.mxu0 0.0
  %2991 = vmatprep.subr.mxu0 0.0
  %2992 = vmatpush1.xpose.msra.mxu0 0.0
  %2993 = vmatprep.subr.mxu0 0.0
  %2994 = vmatpush1.xpose.msra.mxu0 0.0
  %2995 = vmatprep.subr.mxu0 0.0
  %2996 = vmatpush1.xpose.msra.mxu0 0.0
  %2997 = vmatprep.subr.mxu0 0.0
  %2998 = vmatpush1.xpose.msra.mxu0 0.0
  %2999 = vmatprep.subr.mxu0 0.0
  %3000 = vmatpush1.xpose.msra.mxu0 0.0
  %3001 = vmatprep.subr.mxu0 0.0
  %3002 = vmatpush1.xpose.msra.mxu0 0.0
  %3003 = vmatprep.subr.mxu0 0.0
  %3004 = vmatpush1.xpose.msra.mxu0 0.0
  %3005 = vmatprep.subr.mxu0 0.0
  %3006 = vmatpush1.xpose.msra.mxu0 %v2517
  %3007 = vmatprep.subr.mxu0 0.0
  %3008 = vmatpush2.xpose.msra.mxu0 0.0
  %3009 = vmatprep.subr.mxu0 0.0
  %3010 = vmatpush2.xpose.msra.mxu0 0.0
  %3011 = vmatprep.subr.mxu0 0.0
  %3012 = vmatpush2.xpose.msra.mxu0 0.0
  %3013 = vmatprep.subr.mxu0 0.0
  %3014 = vmatpush2.xpose.msra.mxu0 0.0
  %3015 = vmatprep.subr.mxu0 0.0
  %3016 = vmatpush2.xpose.msra.mxu0 0.0
  %3017 = vmatprep.subr.mxu0 0.0
  %3018 = vmatpush2.xpose.msra.mxu0 0.0
  %3019 = vmatprep.subr.mxu0 0.0
  %3020 = vmatpush2.xpose.msra.mxu0 0.0
  %3021 = vmatprep.subr.mxu0 0.0
  %3022 = vmatpush2.xpose.msra.mxu0 0.0
  %3023 = vmatprep.subr.mxu0 0.0
  %3024 = vmatpush2.xpose.msra.mxu0 0.0
  %3025 = vmatprep.subr.mxu0 0.0
  %3026 = vmatpush2.xpose.msra.mxu0 0.0
  %3027 = vmatprep.subr.mxu0 0.0
  %3028 = vmatpush2.xpose.msra.mxu0 0.0
  %3029 = vmatprep.subr.mxu0 0.0
  %3030 = vmatpush2.xpose.msra.mxu0 0.0
  %3031 = vmatprep.subr.mxu0 0.0
  %3032 = vmatpush2.xpose.msra.mxu0 0.0
  %3033 = vmatprep.subr.mxu0 0.0
  %3034 = vmatpush2.xpose.msra.mxu0 0.0
  %3035 = vmatprep.subr.mxu0 0.0
  %3036 = vmatpush2.xpose.msra.mxu0 0.0
  %3037 = vmatprep.subr.mxu0 0.0
  %3038 = vmatpush2.xpose.msra.mxu0 0.0
  %3039 = vmatprep.mubr.f32.mxu0 0.0
  %3040 = vmatmul.mubr.f32.gmra.mxu0 %v2964
  %v3041 = vpop.f32.mrf.mxu0
  %v3042 = vadd.f32 0.0, %v3041
  %v3043 = vpop.f32.mrf.mxu0
  %3044 = vmatprep.mubr.f32.mxu0 0.0
  %3045 = vmatmul.mubr.f32.gmra.mxu0 %v2967
  %v3046 = vpop.f32.mrf.mxu0
  %v3047 = vadd.f32 0.0, %v3046
  %v3048 = vpop.f32.mrf.mxu0
  %3049 = vmatprep.mubr.f32.mxu0 0.0
  %3050 = vmatmul.mubr.f32.gmra.mxu0 %v2970
  %v3051 = vpop.f32.mrf.mxu0
  %v3052 = vadd.f32 0.0, %v3051
  %v3053 = vpop.f32.mrf.mxu0
  %3054 = vmatprep.mubr.f32.mxu0 0.0
  %3055 = vmatmul.mubr.f32.gmra.mxu0 %v2973
  %v3056 = vpop.f32.mrf.mxu0
  %v3057 = vadd.f32 0.0, %v3056
  %v3058 = vpop.f32.mrf.mxu0
  %3059 = vdwg.mxu0
  %v3060 = vmax.f32 %v3042, 1e-30
  %v3061 = vmax.f32 %v3047, 1e-30
  %v3062 = vmax.f32 %v3052, 1e-30
  %v3063 = vmax.f32 %v3057, 1e-30
  %v3064 = vrcp.pop %v3060
  %v3065 = vrcp.pop %v3061
  %v3066 = vrcp.pop %v3062
  %v3067 = vrcp.pop %v3063
  %v3068 = vmul.f32 %v2083, %v3064
  %v3069 = vmul.f32 %v2084, %v3065
  %v3070 = vmul.f32 %v2085, %v3066
  %v3071 = vmul.f32 %v2086, %v3067
  %v3073 = vsel %vm1842, %v3068, 0
  %v3076 = vsel %vm1842, %v3069, 0
  %v3079 = vsel %vm1842, %v3070, 0
  %v3082 = vsel %vm1842, %v3071, 0
  %3084 = vmatprep.subr.mxu0 0.0
  %3085 = vmatpush1.msra.mxu0 0.0
  %3086 = vmatprep.subr.mxu0 0.0
  %3087 = vmatpush1.msra.mxu0 0.0
  %3088 = vmatprep.subr.mxu0 0.0
  %3089 = vmatpush1.msra.mxu0 0.0
  %3090 = vmatprep.subr.mxu0 0.0
  %3091 = vmatpush1.msra.mxu0 0.0
  %3092 = vmatprep.subr.mxu0 0.0
  %3093 = vmatpush1.msra.mxu0 0.0
  %3094 = vmatprep.subr.mxu0 0.0
  %3095 = vmatpush1.msra.mxu0 0.0
  %3096 = vmatprep.subr.mxu0 0.0
  %3097 = vmatpush1.msra.mxu0 0.0
  %3098 = vmatprep.subr.mxu0 0.0
  %3099 = vmatpush1.msra.mxu0 0.0
  %3100 = vmatprep.subr.mxu0 0.0
  %3101 = vmatpush1.msra.mxu0 0.0
  %3102 = vmatprep.subr.mxu0 0.0
  %3103 = vmatpush1.msra.mxu0 0.0
  %3104 = vmatprep.subr.mxu0 0.0
  %3105 = vmatpush1.msra.mxu0 0.0
  %3106 = vmatprep.subr.mxu0 0.0
  %3107 = vmatpush1.msra.mxu0 0.0
  %3108 = vmatprep.subr.mxu0 0.0
  %3109 = vmatpush1.msra.mxu0 0.0
  %3110 = vmatprep.subr.mxu0 0.0
  %3111 = vmatpush1.msra.mxu0 0.0
  %3112 = vmatprep.subr.mxu0 0.0
  %3113 = vmatpush1.msra.mxu0 0.0
  %3114 = vmatprep.subr.mxu0 0.0
  %3115 = vmatpush1.msra.mxu0 %v39
  %3116 = vmatprep.subr.mxu0 0.0
  %3117 = vmatpush2.msra.mxu0 0.0
  %3118 = vmatprep.subr.mxu0 0.0
  %3119 = vmatpush2.msra.mxu0 0.0
  %3120 = vmatprep.subr.mxu0 0.0
  %3121 = vmatpush2.msra.mxu0 0.0
  %3122 = vmatprep.subr.mxu0 0.0
  %3123 = vmatpush2.msra.mxu0 0.0
  %3124 = vmatprep.subr.mxu0 0.0
  %3125 = vmatpush2.msra.mxu0 0.0
  %3126 = vmatprep.subr.mxu0 0.0
  %3127 = vmatpush2.msra.mxu0 0.0
  %3128 = vmatprep.subr.mxu0 0.0
  %3129 = vmatpush2.msra.mxu0 0.0
  %3130 = vmatprep.subr.mxu0 0.0
  %3131 = vmatpush2.msra.mxu0 0.0
  %3132 = vmatprep.subr.mxu0 0.0
  %3133 = vmatpush2.msra.mxu0 0.0
  %3134 = vmatprep.subr.mxu0 0.0
  %3135 = vmatpush2.msra.mxu0 0.0
  %3136 = vmatprep.subr.mxu0 0.0
  %3137 = vmatpush2.msra.mxu0 0.0
  %3138 = vmatprep.subr.mxu0 0.0
  %3139 = vmatpush2.msra.mxu0 0.0
  %3140 = vmatprep.subr.mxu0 0.0
  %3141 = vmatpush2.msra.mxu0 0.0
  %3142 = vmatprep.subr.mxu0 0.0
  %3143 = vmatpush2.msra.mxu0 0.0
  %3144 = vmatprep.subr.mxu0 0.0
  %3145 = vmatpush2.msra.mxu0 0.0
  %3146 = vmatprep.subr.mxu0 0.0
  %3147 = vmatpush2.msra.mxu0 0.0
  %3148 = vmatprep.mubr.f32.mxu0 0.0
  %3149 = vmatmul.mubr.f32.gmra.mxu0 %v3073
  %v3150 = vpop.f32.mrf.mxu0
  %v3151 = vadd.f32 0.0, %v3150
  %v3152 = vpop.f32.mrf.mxu0
  %3153 = vmatprep.mubr.f32.mxu0 0.0
  %3154 = vmatmul.mubr.f32.gmra.mxu0 %v3076
  %v3155 = vpop.f32.mrf.mxu0
  %v3156 = vadd.f32 0.0, %v3155
  %v3157 = vpop.f32.mrf.mxu0
  %3158 = vmatprep.mubr.f32.mxu0 0.0
  %3159 = vmatmul.mubr.f32.gmra.mxu0 %v3079
  %v3160 = vpop.f32.mrf.mxu0
  %v3161 = vadd.f32 0.0, %v3160
  %v3162 = vpop.f32.mrf.mxu0
  %3163 = vmatprep.mubr.f32.mxu0 0.0
  %3164 = vmatmul.mubr.f32.gmra.mxu0 %v3082
  %v3165 = vpop.f32.mrf.mxu0
  %v3166 = vadd.f32 0.0, %v3165
  %v3167 = vpop.f32.mrf.mxu0
  %3168 = vdwg.mxu0
  %v3169 = vmul.f32 %v2956, %v3151
  %v3170 = vmul.f32 %v2958, %v3156
  %v3171 = vmul.f32 %v2960, %v3161
  %v3172 = vmul.f32 %v2962, %v3166
  %3177 = vrot.lane.b32.xlu0 %v2352, 64
  %v3178 = vpop.permute.xlu0 %3177
  %3179 = vrot.lane.b32.xlu0 %v2357, 64
  %v3180 = vpop.permute.xlu0 %3179
  %3181 = vrot.lane.b32.xlu0 %v2362, 64
  %v3182 = vpop.permute.xlu0 %3181
  %3183 = vrot.lane.b32.xlu0 %v2367, 64
  %v3184 = vpop.permute.xlu0 %3183
  %v3190 = vsel %vm41, %v3169, 0
  %v3193 = vsel %vm41, %v3170, 0
  %v3196 = vsel %vm41, %v3171, 0
  %v3199 = vsel %vm41, %v3172, 0
  %3201 = vmatprep.subr.mxu0 0.0
  %3202 = vmatpush1.msra.mxu0 0.0
  %3203 = vmatprep.subr.mxu0 0.0
  %3204 = vmatpush1.msra.mxu0 0.0
  %3205 = vmatprep.subr.mxu0 0.0
  %3206 = vmatpush1.msra.mxu0 0.0
  %3207 = vmatprep.subr.mxu0 0.0
  %3208 = vmatpush1.msra.mxu0 0.0
  %3209 = vmatprep.subr.mxu0 0.0
  %3210 = vmatpush1.msra.mxu0 0.0
  %3211 = vmatprep.subr.mxu0 0.0
  %3212 = vmatpush1.msra.mxu0 0.0
  %3213 = vmatprep.subr.mxu0 0.0
  %3214 = vmatpush1.msra.mxu0 0.0
  %3215 = vmatprep.subr.mxu0 0.0
  %3216 = vmatpush1.msra.mxu0 0.0
  %3217 = vmatprep.subr.mxu0 0.0
  %3218 = vmatpush1.msra.mxu0 0.0
  %3219 = vmatprep.subr.mxu0 0.0
  %3220 = vmatpush1.msra.mxu0 0.0
  %3221 = vmatprep.subr.mxu0 0.0
  %3222 = vmatpush1.msra.mxu0 0.0
  %3223 = vmatprep.subr.mxu0 0.0
  %3224 = vmatpush1.msra.mxu0 0.0
  %3225 = vmatprep.subr.mxu0 0.0
  %3226 = vmatpush1.msra.mxu0 %v3184
  %3227 = vmatprep.subr.mxu0 0.0
  %3228 = vmatpush1.msra.mxu0 %v3182
  %3229 = vmatprep.subr.mxu0 0.0
  %3230 = vmatpush1.msra.mxu0 %v3180
  %3231 = vmatprep.subr.mxu0 0.0
  %3232 = vmatpush1.msra.mxu0 %v3178
  %3233 = vmatprep.subr.mxu0 0.0
  %3234 = vmatpush2.msra.mxu0 0.0
  %3235 = vmatprep.subr.mxu0 0.0
  %3236 = vmatpush2.msra.mxu0 0.0
  %3237 = vmatprep.subr.mxu0 0.0
  %3238 = vmatpush2.msra.mxu0 0.0
  %3239 = vmatprep.subr.mxu0 0.0
  %3240 = vmatpush2.msra.mxu0 0.0
  %3241 = vmatprep.subr.mxu0 0.0
  %3242 = vmatpush2.msra.mxu0 0.0
  %3243 = vmatprep.subr.mxu0 0.0
  %3244 = vmatpush2.msra.mxu0 0.0
  %3245 = vmatprep.subr.mxu0 0.0
  %3246 = vmatpush2.msra.mxu0 0.0
  %3247 = vmatprep.subr.mxu0 0.0
  %3248 = vmatpush2.msra.mxu0 0.0
  %3249 = vmatprep.subr.mxu0 0.0
  %3250 = vmatpush2.msra.mxu0 0.0
  %3251 = vmatprep.subr.mxu0 0.0
  %3252 = vmatpush2.msra.mxu0 0.0
  %3253 = vmatprep.subr.mxu0 0.0
  %3254 = vmatpush2.msra.mxu0 0.0
  %3255 = vmatprep.subr.mxu0 0.0
  %3256 = vmatpush2.msra.mxu0 0.0
  %3257 = vmatprep.subr.mxu0 0.0
  %3258 = vmatpush2.msra.mxu0 0.0
  %3259 = vmatprep.subr.mxu0 0.0
  %3260 = vmatpush2.msra.mxu0 0.0
  %3261 = vmatprep.subr.mxu0 0.0
  %3262 = vmatpush2.msra.mxu0 0.0
  %3263 = vmatprep.subr.mxu0 0.0
  %3264 = vmatpush2.msra.mxu0 0.0
  %3265 = vmatprep.mubr.f32.mxu0 0.0
  %3266 = vmatmul.mubr.f32.gmra.mxu0 %v3190
  %v3267 = vpop.f32.mrf.mxu0
  %v3268 = vadd.f32 0.0, %v3267
  %v3269 = vpop.f32.mrf.mxu0
  %3270 = vmatprep.mubr.f32.mxu0 0.0
  %3271 = vmatmul.mubr.f32.gmra.mxu0 %v3193
  %v3272 = vpop.f32.mrf.mxu0
  %v3273 = vadd.f32 0.0, %v3272
  %v3274 = vpop.f32.mrf.mxu0
  %3275 = vmatprep.mubr.f32.mxu0 0.0
  %3276 = vmatmul.mubr.f32.gmra.mxu0 %v3196
  %v3277 = vpop.f32.mrf.mxu0
  %v3278 = vadd.f32 0.0, %v3277
  %v3279 = vpop.f32.mrf.mxu0
  %3280 = vmatprep.mubr.f32.mxu0 0.0
  %3281 = vmatmul.mubr.f32.gmra.mxu0 %v3199
  %v3282 = vpop.f32.mrf.mxu0
  %v3283 = vadd.f32 0.0, %v3282
  %v3284 = vpop.f32.mrf.mxu0
  %3285 = vdwg.mxu0
  %v3286 = vld [vmem:[%s3 + $0x180] sm:$0xff]
  %v3287 = vld [vmem:[%s3 + $0x188] sm:$0xff]
  %v3288 = vld [vmem:[%s3 + $0x190] sm:$0xff]
  %v3289 = vld [vmem:[%s3 + $0x198] sm:$0xff]
  %v3290 = vld [vmem:[%s3 + $0x1a0] sm:$0xff]
  %v3291 = vld [vmem:[%s3 + $0x1a8] sm:$0xff]
  %v3292 = vld [vmem:[%s3 + $0x1b0] sm:$0xff]
  %v3293 = vld [vmem:[%s3 + $0x1b8] sm:$0xff]
  %v3295 = vsel %vm2370, %v3268, 0
  %v3298 = vsel %vm2370, %v3273, 0
  %v3301 = vsel %vm2370, %v3278, 0
  %v3304 = vsel %vm2370, %v3283, 0
  %3306 = vmatprep.subr.mxu0 0.0
  %3307 = vmatpush1.msra.mxu0 0.0
  %3308 = vmatprep.subr.mxu0 0.0
  %3309 = vmatpush1.msra.mxu0 0.0
  %3310 = vmatprep.subr.mxu0 0.0
  %3311 = vmatpush1.msra.mxu0 0.0
  %3312 = vmatprep.subr.mxu0 0.0
  %3313 = vmatpush1.msra.mxu0 0.0
  %3314 = vmatprep.subr.mxu0 0.0
  %3315 = vmatpush1.msra.mxu0 0.0
  %3316 = vmatprep.subr.mxu0 0.0
  %3317 = vmatpush1.msra.mxu0 0.0
  %3318 = vmatprep.subr.mxu0 0.0
  %3319 = vmatpush1.msra.mxu0 0.0
  %3320 = vmatprep.subr.mxu0 0.0
  %3321 = vmatpush1.msra.mxu0 0.0
  %3322 = vmatprep.subr.mxu0 0.0
  %3323 = vmatpush1.msra.mxu0 %v3293
  %3324 = vmatprep.subr.mxu0 0.0
  %3325 = vmatpush1.msra.mxu0 %v3292
  %3326 = vmatprep.subr.mxu0 0.0
  %3327 = vmatpush1.msra.mxu0 %v3291
  %3328 = vmatprep.subr.mxu0 0.0
  %3329 = vmatpush1.msra.mxu0 %v3290
  %3330 = vmatprep.subr.mxu0 0.0
  %3331 = vmatpush1.msra.mxu0 %v3289
  %3332 = vmatprep.subr.mxu0 0.0
  %3333 = vmatpush1.msra.mxu0 %v3288
  %3334 = vmatprep.subr.mxu0 0.0
  %3335 = vmatpush1.msra.mxu0 %v3287
  %3336 = vmatprep.subr.mxu0 0.0
  %3337 = vmatpush1.msra.mxu0 %v3286
  %3338 = vmatprep.subr.mxu0 0.0
  %3339 = vmatpush2.msra.mxu0 0.0
  %3340 = vmatprep.subr.mxu0 0.0
  %3341 = vmatpush2.msra.mxu0 0.0
  %3342 = vmatprep.subr.mxu0 0.0
  %3343 = vmatpush2.msra.mxu0 0.0
  %3344 = vmatprep.subr.mxu0 0.0
  %3345 = vmatpush2.msra.mxu0 0.0
  %3346 = vmatprep.subr.mxu0 0.0
  %3347 = vmatpush2.msra.mxu0 0.0
  %3348 = vmatprep.subr.mxu0 0.0
  %3349 = vmatpush2.msra.mxu0 0.0
  %3350 = vmatprep.subr.mxu0 0.0
  %3351 = vmatpush2.msra.mxu0 0.0
  %3352 = vmatprep.subr.mxu0 0.0
  %3353 = vmatpush2.msra.mxu0 0.0
  %3354 = vmatprep.subr.mxu0 0.0
  %3355 = vmatpush2.msra.mxu0 0.0
  %3356 = vmatprep.subr.mxu0 0.0
  %3357 = vmatpush2.msra.mxu0 0.0
  %3358 = vmatprep.subr.mxu0 0.0
  %3359 = vmatpush2.msra.mxu0 0.0
  %3360 = vmatprep.subr.mxu0 0.0
  %3361 = vmatpush2.msra.mxu0 0.0
  %3362 = vmatprep.subr.mxu0 0.0
  %3363 = vmatpush2.msra.mxu0 0.0
  %3364 = vmatprep.subr.mxu0 0.0
  %3365 = vmatpush2.msra.mxu0 0.0
  %3366 = vmatprep.subr.mxu0 0.0
  %3367 = vmatpush2.msra.mxu0 0.0
  %3368 = vmatprep.subr.mxu0 0.0
  %3369 = vmatpush2.msra.mxu0 0.0
  %3370 = vmatprep.mubr.f32.mxu0 0.0
  %3371 = vmatmul.mubr.f32.gmra.mxu0 %v3295
  %v3372 = vpop.f32.mrf.mxu0
  %v3373 = vadd.f32 0.0, %v3372
  %v3374 = vpop.f32.mrf.mxu0
  %3375 = vmatprep.mubr.f32.mxu0 0.0
  %3376 = vmatmul.mubr.f32.gmra.mxu0 %v3298
  %v3377 = vpop.f32.mrf.mxu0
  %v3378 = vadd.f32 0.0, %v3377
  %v3379 = vpop.f32.mrf.mxu0
  %3380 = vmatprep.mubr.f32.mxu0 0.0
  %3381 = vmatmul.mubr.f32.gmra.mxu0 %v3301
  %v3382 = vpop.f32.mrf.mxu0
  %v3383 = vadd.f32 0.0, %v3382
  %v3384 = vpop.f32.mrf.mxu0
  %3385 = vmatprep.mubr.f32.mxu0 0.0
  %3386 = vmatmul.mubr.f32.gmra.mxu0 %v3304
  %v3387 = vpop.f32.mrf.mxu0
  %v3388 = vadd.f32 0.0, %v3387
  %v3389 = vpop.f32.mrf.mxu0
  %3390 = vdwg.mxu0
  %v3392 = vsel %vm2370, %v2796, 0
  %v3395 = vsel %vm2370, %v2801, 0
  %v3398 = vsel %vm2370, %v2806, 0
  %v3401 = vsel %vm2370, %v2811, 0
  %3403 = vmatprep.subr.mxu0 0.0
  %3404 = vmatpush1.msra.mxu0 0.0
  %3405 = vmatprep.subr.mxu0 0.0
  %3406 = vmatpush1.msra.mxu0 0.0
  %3407 = vmatprep.subr.mxu0 0.0
  %3408 = vmatpush1.msra.mxu0 0.0
  %3409 = vmatprep.subr.mxu0 0.0
  %3410 = vmatpush1.msra.mxu0 0.0
  %3411 = vmatprep.subr.mxu0 0.0
  %3412 = vmatpush1.msra.mxu0 0.0
  %3413 = vmatprep.subr.mxu0 0.0
  %3414 = vmatpush1.msra.mxu0 0.0
  %3415 = vmatprep.subr.mxu0 0.0
  %3416 = vmatpush1.msra.mxu0 0.0
  %3417 = vmatprep.subr.mxu0 0.0
  %3418 = vmatpush1.msra.mxu0 0.0
  %3419 = vmatprep.subr.mxu0 0.0
  %3420 = vmatpush1.msra.mxu0 %v2821
  %3421 = vmatprep.subr.mxu0 0.0
  %3422 = vmatpush1.msra.mxu0 %v2820
  %3423 = vmatprep.subr.mxu0 0.0
  %3424 = vmatpush1.msra.mxu0 %v2819
  %3425 = vmatprep.subr.mxu0 0.0
  %3426 = vmatpush1.msra.mxu0 %v2818
  %3427 = vmatprep.subr.mxu0 0.0
  %3428 = vmatpush1.msra.mxu0 %v2817
  %3429 = vmatprep.subr.mxu0 0.0
  %3430 = vmatpush1.msra.mxu0 %v2816
  %3431 = vmatprep.subr.mxu0 0.0
  %3432 = vmatpush1.msra.mxu0 %v2815
  %3433 = vmatprep.subr.mxu0 0.0
  %3434 = vmatpush1.msra.mxu0 %v2814
  %3435 = vmatprep.subr.mxu0 0.0
  %3436 = vmatpush2.msra.mxu0 0.0
  %3437 = vmatprep.subr.mxu0 0.0
  %3438 = vmatpush2.msra.mxu0 0.0
  %3439 = vmatprep.subr.mxu0 0.0
  %3440 = vmatpush2.msra.mxu0 0.0
  %3441 = vmatprep.subr.mxu0 0.0
  %3442 = vmatpush2.msra.mxu0 0.0
  %3443 = vmatprep.subr.mxu0 0.0
  %3444 = vmatpush2.msra.mxu0 0.0
  %3445 = vmatprep.subr.mxu0 0.0
  %3446 = vmatpush2.msra.mxu0 0.0
  %3447 = vmatprep.subr.mxu0 0.0
  %3448 = vmatpush2.msra.mxu0 0.0
  %3449 = vmatprep.subr.mxu0 0.0
  %3450 = vmatpush2.msra.mxu0 0.0
  %3451 = vmatprep.subr.mxu0 0.0
  %3452 = vmatpush2.msra.mxu0 0.0
  %3453 = vmatprep.subr.mxu0 0.0
  %3454 = vmatpush2.msra.mxu0 0.0
  %3455 = vmatprep.subr.mxu0 0.0
  %3456 = vmatpush2.msra.mxu0 0.0
  %3457 = vmatprep.subr.mxu0 0.0
  %3458 = vmatpush2.msra.mxu0 0.0
  %3459 = vmatprep.subr.mxu0 0.0
  %3460 = vmatpush2.msra.mxu0 0.0
  %3461 = vmatprep.subr.mxu0 0.0
  %3462 = vmatpush2.msra.mxu0 0.0
  %3463 = vmatprep.subr.mxu0 0.0
  %3464 = vmatpush2.msra.mxu0 0.0
  %3465 = vmatprep.subr.mxu0 0.0
  %3466 = vmatpush2.msra.mxu0 0.0
  %3467 = vmatprep.mubr.f32.mxu0 0.0
  %3468 = vmatmul.mubr.f32.gmra.mxu0 %v3392
  %v3469 = vpop.f32.mrf.mxu0
  %v3470 = vadd.f32 %v3373, %v3469
  %v3471 = vpop.f32.mrf.mxu0
  %3472 = vmatprep.mubr.f32.mxu0 0.0
  %3473 = vmatmul.mubr.f32.gmra.mxu0 %v3395
  %v3474 = vpop.f32.mrf.mxu0
  %v3475 = vadd.f32 %v3378, %v3474
  %v3476 = vpop.f32.mrf.mxu0
  %3477 = vmatprep.mubr.f32.mxu0 0.0
  %3478 = vmatmul.mubr.f32.gmra.mxu0 %v3398
  %v3479 = vpop.f32.mrf.mxu0
  %v3480 = vadd.f32 %v3383, %v3479
  %v3481 = vpop.f32.mrf.mxu0
  %3482 = vmatprep.mubr.f32.mxu0 0.0
  %3483 = vmatmul.mubr.f32.gmra.mxu0 %v3401
  %v3484 = vpop.f32.mrf.mxu0
  %v3485 = vadd.f32 %v3388, %v3484
  %v3486 = vpop.f32.mrf.mxu0
  %3487 = vdwg.mxu0
  %v3488 = vld [vmem:[%s5 + $0xb] sm:$0x1]
  %v3489 = vlaneseq
  %v3490 = vshrl.u32 %v3489, 7
  %v3491 = vsub.s32 0, %v3490
  %v3492 = vrot.slane %v3488, %v3491
  %v3493 = vadd.f32 %v3470, %v3492
  %v3494 = vadd.f32 %v3475, %v3492
  %v3495 = vadd.f32 %v3480, %v3492
  %v3496 = vadd.f32 %v3485, %v3492
  %v3497 = vadd.f32 %v3493, %v1447
  %v3498 = vadd.f32 %v3494, %v1448
  %v3499 = vadd.f32 %v3495, %v1449
  %v3500 = vadd.f32 %v3496, %v1450
  %v3501 = vsel %vm41, %v3497, 0.0
  %3502 = vadd.xlane.f32.xlu0 %v3501
  %v3503 = vpop.xlane.xlu0 %3502
  %v3504 = vsel %vm41, %v3498, 0.0
  %3505 = vadd.xlane.f32.xlu0 %v3504
  %v3506 = vpop.xlane.xlu0 %3505
  %v3507 = vsel %vm41, %v3499, 0.0
  %3508 = vadd.xlane.f32.xlu0 %v3507
  %v3509 = vpop.xlane.xlu0 %3508
  %v3510 = vsel %vm41, %v3500, 0.0
  %3511 = vadd.xlane.f32.xlu0 %v3510
  %v3512 = vpop.xlane.xlu0 %3511
  %v3513 = vmul.f32 %v3503, %v54
  %v3514 = vmul.f32 %v3506, %v54
  %v3515 = vmul.f32 %v3509, %v54
  %v3516 = vmul.f32 %v3512, %v54
  %v3517 = vsub.f32 %v3497, %v3513
  %v3518 = vsub.f32 %v3498, %v3514
  %v3519 = vsub.f32 %v3499, %v3515
  %v3520 = vsub.f32 %v3500, %v3516
  %v3521 = vmul.f32 %v3517, %v3517
  %v3522 = vmul.f32 %v3518, %v3518
  %v3523 = vmul.f32 %v3519, %v3519
  %v3524 = vmul.f32 %v3520, %v3520
  %v3525 = vsel %vm41, %v3521, 0.0
  %3526 = vadd.xlane.f32.xlu0 %v3525
  %v3527 = vpop.xlane.xlu0 %3526
  %v3528 = vsel %vm41, %v3522, 0.0
  %3529 = vadd.xlane.f32.xlu0 %v3528
  %v3530 = vpop.xlane.xlu0 %3529
  %v3531 = vsel %vm41, %v3523, 0.0
  %3532 = vadd.xlane.f32.xlu0 %v3531
  %v3533 = vpop.xlane.xlu0 %3532
  %v3534 = vsel %vm41, %v3524, 0.0
  %3535 = vadd.xlane.f32.xlu0 %v3534
  %v3536 = vpop.xlane.xlu0 %3535
  %v3537 = vmul.f32 %v3527, %v54
  %v3538 = vmul.f32 %v3530, %v54
  %v3539 = vmul.f32 %v3533, %v54
  %v3540 = vmul.f32 %v3536, %v54
  %v3541 = vadd.f32 %v3537, 1e-05
  %v3542 = vadd.f32 %v3538, 1e-05
  %v3543 = vadd.f32 %v3539, 1e-05
  %v3544 = vadd.f32 %v3540, 1e-05
  %v3545 = vrsqrt.pop %v3541
  %v3546 = vrsqrt.pop %v3542
  %v3547 = vrsqrt.pop %v3543
  %v3548 = vrsqrt.pop %v3544
  %v3549 = vmul.f32 %v3517, %v3545
  %v3550 = vmul.f32 %v3518, %v3546
  %v3551 = vmul.f32 %v3519, %v3547
  %v3552 = vmul.f32 %v3520, %v3548
  %v3553 = vld [vmem:[%s5 + $0x3] sm:$0x1]
  %v3554 = vlaneseq
  %v3555 = vshrl.u32 %v3554, 7
  %v3556 = vsub.s32 0, %v3555
  %v3557 = vrot.slane %v3553, %v3556
  %v3558 = vmul.f32 %v3549, %v3557
  %v3559 = vmul.f32 %v3550, %v3557
  %v3560 = vmul.f32 %v3551, %v3557
  %v3561 = vmul.f32 %v3552, %v3557
  %v3562 = vld [vmem:[%s5 + $0x7] sm:$0x1]
  %v3563 = vlaneseq
  %v3564 = vshrl.u32 %v3563, 7
  %v3565 = vsub.s32 0, %v3564
  %v3566 = vrot.slane %v3562, %v3565
  %v3567 = vadd.f32 %v3558, %v3566
  %v3568 = vadd.f32 %v3559, %v3566
  %v3569 = vadd.f32 %v3560, %v3566
  %v3570 = vadd.f32 %v3561, %v3566
  %v3571 = vld [vmem:[%s3 + $0x120] sm:$0xff]
  %v3572 = vld [vmem:[%s3 + $0x128] sm:$0xff]
  %v3573 = vld [vmem:[%s3 + $0x130] sm:$0xff]
  %v3574 = vld [vmem:[%s3 + $0x138] sm:$0xff]
  %v3575 = vld [vmem:[%s5 + $0xc] sm:$0x1]
  %v3576 = vlaneseq
  %v3577 = vshrl.u32 %v3576, 7
  %v3578 = vsub.s32 0, %v3577
  %v3579 = vrot.slane %v3575, %v3578
  %v3581 = vsel %vm41, %v3567, 0
  %v3584 = vsel %vm41, %v3568, 0
  %v3587 = vsel %vm41, %v3569, 0
  %v3590 = vsel %vm41, %v3570, 0
  %3592 = vmatprep.subr.mxu0 0.0
  %3593 = vmatpush1.msra.mxu0 0.0
  %3594 = vmatprep.subr.mxu0 0.0
  %3595 = vmatpush1.msra.mxu0 0.0
  %3596 = vmatprep.subr.mxu0 0.0
  %3597 = vmatpush1.msra.mxu0 0.0
  %3598 = vmatprep.subr.mxu0 0.0
  %3599 = vmatpush1.msra.mxu0 0.0
  %3600 = vmatprep.subr.mxu0 0.0
  %3601 = vmatpush1.msra.mxu0 0.0
  %3602 = vmatprep.subr.mxu0 0.0
  %3603 = vmatpush1.msra.mxu0 0.0
  %3604 = vmatprep.subr.mxu0 0.0
  %3605 = vmatpush1.msra.mxu0 0.0
  %3606 = vmatprep.subr.mxu0 0.0
  %3607 = vmatpush1.msra.mxu0 0.0
  %3608 = vmatprep.subr.mxu0 0.0
  %3609 = vmatpush1.msra.mxu0 0.0
  %3610 = vmatprep.subr.mxu0 0.0
  %3611 = vmatpush1.msra.mxu0 0.0
  %3612 = vmatprep.subr.mxu0 0.0
  %3613 = vmatpush1.msra.mxu0 0.0
  %3614 = vmatprep.subr.mxu0 0.0
  %3615 = vmatpush1.msra.mxu0 0.0
  %3616 = vmatprep.subr.mxu0 0.0
  %3617 = vmatpush1.msra.mxu0 %v3574
  %3618 = vmatprep.subr.mxu0 0.0
  %3619 = vmatpush1.msra.mxu0 %v3573
  %3620 = vmatprep.subr.mxu0 0.0
  %3621 = vmatpush1.msra.mxu0 %v3572
  %3622 = vmatprep.subr.mxu0 0.0
  %3623 = vmatpush1.msra.mxu0 %v3571
  %3624 = vmatprep.subr.mxu0 0.0
  %3625 = vmatpush2.msra.mxu0 0.0
  %3626 = vmatprep.subr.mxu0 0.0
  %3627 = vmatpush2.msra.mxu0 0.0
  %3628 = vmatprep.subr.mxu0 0.0
  %3629 = vmatpush2.msra.mxu0 0.0
  %3630 = vmatprep.subr.mxu0 0.0
  %3631 = vmatpush2.msra.mxu0 0.0
  %3632 = vmatprep.subr.mxu0 0.0
  %3633 = vmatpush2.msra.mxu0 0.0
  %3634 = vmatprep.subr.mxu0 0.0
  %3635 = vmatpush2.msra.mxu0 0.0
  %3636 = vmatprep.subr.mxu0 0.0
  %3637 = vmatpush2.msra.mxu0 0.0
  %3638 = vmatprep.subr.mxu0 0.0
  %3639 = vmatpush2.msra.mxu0 0.0
  %3640 = vmatprep.subr.mxu0 0.0
  %3641 = vmatpush2.msra.mxu0 0.0
  %3642 = vmatprep.subr.mxu0 0.0
  %3643 = vmatpush2.msra.mxu0 0.0
  %3644 = vmatprep.subr.mxu0 0.0
  %3645 = vmatpush2.msra.mxu0 0.0
  %3646 = vmatprep.subr.mxu0 0.0
  %3647 = vmatpush2.msra.mxu0 0.0
  %3648 = vmatprep.subr.mxu0 0.0
  %3649 = vmatpush2.msra.mxu0 0.0
  %3650 = vmatprep.subr.mxu0 0.0
  %3651 = vmatpush2.msra.mxu0 0.0
  %3652 = vmatprep.subr.mxu0 0.0
  %3653 = vmatpush2.msra.mxu0 0.0
  %3654 = vmatprep.subr.mxu0 0.0
  %3655 = vmatpush2.msra.mxu0 0.0
  %3656 = vmatprep.mubr.f32.mxu0 0.0
  %3657 = vmatmul.mubr.f32.gmra.mxu0 %v3581
  %v3658 = vpop.f32.mrf.mxu0
  %v3659 = vadd.f32 %v3579, %v3658
  %v3660 = vpop.f32.mrf.mxu0
  %3661 = vmatprep.mubr.f32.mxu0 0.0
  %3662 = vmatmul.mubr.f32.gmra.mxu0 %v3584
  %v3663 = vpop.f32.mrf.mxu0
  %v3664 = vadd.f32 %v3579, %v3663
  %v3665 = vpop.f32.mrf.mxu0
  %3666 = vmatprep.mubr.f32.mxu0 0.0
  %3667 = vmatmul.mubr.f32.gmra.mxu0 %v3587
  %v3668 = vpop.f32.mrf.mxu0
  %v3669 = vadd.f32 %v3579, %v3668
  %v3670 = vpop.f32.mrf.mxu0
  %3671 = vmatprep.mubr.f32.mxu0 0.0
  %3672 = vmatmul.mubr.f32.gmra.mxu0 %v3590
  %v3673 = vpop.f32.mrf.mxu0
  %v3674 = vadd.f32 %v3579, %v3673
  %v3675 = vpop.f32.mrf.mxu0
  %3676 = vdwg.mxu0
  %v3677 = vmax.f32 %v3659, 0.0
  %v3678 = vmax.f32 %v3664, 0.0
  %v3679 = vmax.f32 %v3669, 0.0
  %v3680 = vmax.f32 %v3674, 0.0
  %v3681 = vadd.f32 %v3677, %v3497
  %v3682 = vadd.f32 %v3678, %v3498
  %v3683 = vadd.f32 %v3679, %v3499
  %v3684 = vadd.f32 %v3680, %v3500
  %3685 = vst.msk [vmem:[%s6] sm:$0xff] %vm41, %v3681
  %3686 = vst.msk [vmem:[%s6 + $0x8] sm:$0xff] %vm41, %v3682
  %3687 = vst.msk [vmem:[%s6 + $0x10] sm:$0xff] %vm41, %v3683
  %3688 = vst.msk [vmem:[%s6 + $0x18] sm:$0xff] %vm41, %v3684
  // Predicated region
  $region26: #{htm_transformer_block.1} parent=0 // pred_check
    _
  $region27: #{htm_transformer_block.1} parent=0 // pred_check_branch
    %3690 = sbr.rel (0) target = $region29
  $region28: #{htm_transformer_block.1} parent=0 // pred_region
    _
  $region29: #{htm_transformer_block.1} parent=0 // pred_fallthru
    _
  // Predicated region
  $region30: #{htm_transformer_block.1} parent=0 // pred_check
    _
  $region31: #{htm_transformer_block.1} parent=0 // pred_check_branch
    %3692 = sbr.rel (0) target = $region33
  $region32: #{htm_transformer_block.1} parent=0 // pred_region
    _
  $region33: #{htm_transformer_block.1} parent=0 // pred_fallthru
    _

</llo_original>
